<compile_context>
chip_gen: v6e
topology: v6e:2x2x1
jax: 0.10.0
libtpu: 0.0.40
codegen_flags: <defaults>
</compile_context>

<pallas_src>
import functools

import jax
import jax.numpy as jnp
import numpy as np
from jax.experimental import pallas as pl
from jax.experimental.pallas import tpu as pltpu

BN_EPS = 1e-5
LRELU_SLOPE = 0.1
LANE = 128


def _round_up(v, m):
    return (v + m - 1) // m * m


def _leaky_relu(y):
    return jnp.where(y >= 0, y, LRELU_SLOPE * y)


# ----------------------------- Pallas kernel -------------------------------

def _bottleneck_kernel(x_ref, w1_ref, b1_ref, w2_ref, b2_ref, o_ref, y1_ref,
                       *, use_add):
    """One batch image per grid step; all intermediates stay in VMEM.

    x_ref : (1, H+2, W+2, Cip)  spatially halo'd, channel-padded input
    w1_ref: (Cip, Chp)          1x1 conv weights, BN1 scale folded in
    b1_ref: (1, Chp)            BN1 bias (f32)
    w2_ref: (9, Chp, Cop)       3x3 conv taps (kh*3+kw), BN2 scale folded in
    b2_ref: (1, Cop)            BN2 bias (f32)
    o_ref : (1, H, W, Cop)      output (f32)
    y1_ref: (H+2, W+2, Chp)     VMEM scratch: conv1 output with a zero halo
    """
    _, hp2, wp2, cip = x_ref.shape
    H, W = hp2 - 2, wp2 - 2
    chp = w1_ref.shape[1]
    cop = w2_ref.shape[2]

    # conv1 (1x1) + bias + LeakyReLU on the interior pixels only.  The halo
    # ring of y1 stays zero, which reproduces conv2's padding=1 zero padding.
    y1_ref[...] = jnp.zeros_like(y1_ref)
    xi = x_ref[0, 1:H + 1, 1:W + 1, :]                      # (H, W, Cip)
    y1 = jnp.dot(xi.reshape(H * W, cip), w1_ref[...],
                 preferred_element_type=jnp.float32)
    y1 = _leaky_relu(y1 + b1_ref[...])
    y1_ref[1:H + 1, 1:W + 1, :] = y1.reshape(H, W, chp).astype(y1_ref.dtype)

    # conv2 (3x3, pad=1): 9 shifted (H*W, Chp) @ (Chp, Cop) matmuls accumulated
    # in f32 — no materialized im2col, no HBM round trip of y1.
    acc = jnp.zeros((H * W, cop), jnp.float32)
    for kh in range(3):
        for kw in range(3):
            tap = y1_ref[kh:kh + H, kw:kw + W, :].reshape(H * W, chp)
            acc = acc + jnp.dot(tap, w2_ref[3 * kh + kw],
                                preferred_element_type=jnp.float32)
    y2 = _leaky_relu(acc + b2_ref[...])

    if use_add:
        # residual add in f32 (padded channels of x are zero -> no pollution)
        y2 = y2 + xi.reshape(H * W, cip).astype(jnp.float32)

    o_ref[...] = y2.reshape(1, H, W, cop).astype(o_ref.dtype)


# ----------------------------- Module wrapper ------------------------------

def _bn_fold(bn):
    """Inference-mode BatchNorm -> per-channel (scale, bias), shaped (C,)."""
    gamma, beta, mean, var = bn
    scale = gamma / jnp.sqrt(var + BN_EPS)
    bias = beta - mean * scale
    return scale, bias


def bottleneck_forward(x_nchw, params, shortcut=True, compute_dtype=jnp.float32):
    """Pallas implementation of Bottleneck.forward (BN in inference mode)."""
    N, Cin, H, W = x_nchw.shape
    w1 = params["w1"]                        # (Chid, Cin, 1, 1)
    w2 = params["w2"]                        # (Cout, Chid, 3, 3)
    Chid = w1.shape[0]
    Cout = w2.shape[0]
    use_add = bool(shortcut and Cin == Cout)

    # Pad channel dims up to a lane multiple -> lane-dense (unmasked) stores
    # and full-width MXU passes.  Padding is zero-filled, so it is numerically
    # inert and sliced off at the end.
    Cip = _round_up(Cin, LANE)
    Chp = _round_up(Chid, LANE)
    Cop = _round_up(Cout, LANE)

    # NHWC, 1-pixel spatial halo for the 3x3 conv, zero channel padding.
    x_nhwc = jnp.transpose(x_nchw, (0, 2, 3, 1)).astype(jnp.float32)
    xp = jnp.pad(x_nhwc, ((0, 0), (1, 1), (1, 1), (0, Cip - Cin)))
    xp = xp.astype(compute_dtype)

    # Fold the BN scale into the conv weights; only the bias enters the kernel.
    s1, b1 = _bn_fold(params["bn1"])
    s2, b2 = _bn_fold(params["bn2"])
    w1_mat = w1.reshape(Chid, Cin).T * s1[None, :]                  # (Cin, Chid)
    w1_mat = jnp.pad(w1_mat, ((0, Cip - Cin), (0, Chp - Chid))).astype(compute_dtype)
    b1_row = jnp.pad(b1, (0, Chp - Chid))[None, :].astype(jnp.float32)

    w2_taps = jnp.transpose(w2, (2, 3, 1, 0)).reshape(9, Chid, Cout)  # (kh*3+kw, Ci, Co)
    w2_taps = w2_taps * s2[None, None, :]
    w2_taps = jnp.pad(
        w2_taps, ((0, 0), (0, Chp - Chid), (0, Cop - Cout))).astype(compute_dtype)
    b2_row = jnp.pad(b2, (0, Cop - Cout))[None, :].astype(jnp.float32)

    M = N * H * W
    flops = 2 * M * Cin * Chid + 2 * M * 9 * Chid * Cout
    bytes_accessed = sum(int(a.size) * a.dtype.itemsize
                         for a in (xp, w1_mat, b1_row, w2_taps, b2_row))
    bytes_accessed += M * Cop * 4                                   # output

    kernel = functools.partial(_bottleneck_kernel, use_add=use_add)

    # TODO(synk): for very large H*W (or batch=1 on v7x), tile the spatial dim
    # with manual halo DMA (memory_space=pl.ANY) to bound VMEM and feed both TCs.
    out = pl.pallas_call(
        kernel,
        out_shape=jax.ShapeDtypeStruct((N, H, W, Cop), jnp.float32),
        grid_spec=pltpu.PrefetchScalarGridSpec(
            num_scalar_prefetch=0,
            grid=(N,),
            in_specs=[
                pl.BlockSpec((1, H + 2, W + 2, Cip), lambda n: (n, 0, 0, 0)),
                pl.BlockSpec((Cip, Chp), lambda n: (0, 0)),
                pl.BlockSpec((1, Chp), lambda n: (0, 0)),
                pl.BlockSpec((9, Chp, Cop), lambda n: (0, 0, 0)),
                pl.BlockSpec((1, Cop), lambda n: (0, 0)),
            ],
            out_specs=pl.BlockSpec((1, H, W, Cop), lambda n: (n, 0, 0, 0)),
            scratch_shapes=[pltpu.VMEM((H + 2, W + 2, Chp), compute_dtype)],
        ),
        compiler_params=pltpu.CompilerParams(
            dimension_semantics=("parallel",),
            vmem_limit_bytes=48 * 1024 * 1024,
        ),
        cost_estimate=pl.CostEstimate(
            flops=flops, transcendentals=0, bytes_accessed=bytes_accessed),
    )(xp, w1_mat, b1_row, w2_taps, b2_row)

    out = out[..., :Cout]                                  # drop channel padding
    return jnp.transpose(out, (0, 3, 1, 2))                # back to NCHW


# ------------------------------ Reference ----------------------------------

def bottleneck_reference(x_nchw, params, shortcut=True):
    x = jnp.transpose(x_nchw, (0, 2, 3, 1)).astype(jnp.float32)

    def conv_bn_lrelu(x, w, bn, pad):
        y = jax.lax.conv_general_dilated(
            x, jnp.transpose(w, (2, 3, 1, 0)),
            window_strides=(1, 1), padding=[(pad, pad), (pad, pad)],
            dimension_numbers=("NHWC", "HWIO", "NHWC"))
        gamma, beta, mean, var = bn
        y = (y - mean) / jnp.sqrt(var + BN_EPS) * gamma + beta
        return jnp.where(y >= 0, y, LRELU_SLOPE * y)

    y = conv_bn_lrelu(x, params["w1"], params["bn1"], 0)
    y = conv_bn_lrelu(y, params["w2"], params["bn2"], 1)
    if shortcut and x.shape[-1] == y.shape[-1]:
        y = y + x
    return jnp.transpose(y, (0, 3, 1, 2))


# -------------------------------- Main --------------------------------------

def _make_params(key, in_channels, out_channels, e=0.5):
    hidden = int(out_channels * e)
    ks = jax.random.split(key, 10)

    def bn_params(k, c):
        k1, k2, k3, k4 = jax.random.split(k, 4)
        gamma = jax.random.uniform(k1, (c,), jnp.float32, 0.5, 1.5)
        beta = 0.1 * jax.random.normal(k2, (c,), jnp.float32)
        mean = 0.1 * jax.random.normal(k3, (c,), jnp.float32)
        var = jax.random.uniform(k4, (c,), jnp.float32, 0.5, 1.5)
        return (gamma, beta, mean, var)

    return {
        "w1": 0.1 * jax.random.normal(ks[0], (hidden, in_channels, 1, 1), jnp.float32),
        "bn1": bn_params(ks[1], hidden),
        "w2": 0.1 * jax.random.normal(ks[2], (out_channels, hidden, 3, 3), jnp.float32),
        "bn2": bn_params(ks[3], out_channels),
    }


if __name__ == "__main__":
    key = jax.random.PRNGKey(0)
    kx, kp = jax.random.split(key)

    # Small shapes: batch=2, channels=4, spatial=16 (NCHW, like PyTorch).
    N, C, H, W = 2, 4, 16, 16
    x = jax.random.normal(kx, (N, C, H, W), jnp.float32)
    params = _make_params(kp, in_channels=C, out_channels=C)

    ref = jax.block_until_ready(bottleneck_reference(x, params, shortcut=True))

    # f32 compute path: bit-for-bit-equivalent semantics, tight tolerance.
    out_f32 = jax.block_until_ready(
        bottleneck_forward(x, params, shortcut=True, compute_dtype=jnp.float32))
    assert out_f32.shape == (N, C, H, W)
    np.testing.assert_allclose(np.asarray(out_f32), np.asarray(ref),
                               rtol=1e-4, atol=1e-4)

    # bf16 MXU path: ~2x matmul throughput and half the HBM traffic; f32
    # accumulation + f32 epilogue, so error is bounded by bf16 input rounding.
    out_bf16 = jax.block_until_ready(
        bottleneck_forward(x, params, shortcut=True, compute_dtype=jnp.bfloat16))
    np.testing.assert_allclose(np.asarray(out_bf16), np.asarray(ref),
                               rtol=2e-2, atol=2e-2)

    print("KERNEL_OK")
</pallas_src>

<mosaic_0001>
module attributes {stable_mosaic.version = 11 : i64} {
  func.func @_bottleneck_kernel(%arg0: i32, %arg1: memref<1x18x18x128xf32, #tpu.memory_space<vmem>>, %arg2: memref<128x128xf32, #tpu.memory_space<vmem>>, %arg3: memref<1x128xf32, #tpu.memory_space<vmem>>, %arg4: memref<9x128x128xf32, #tpu.memory_space<vmem>>, %arg5: memref<1x128xf32, #tpu.memory_space<vmem>>, %arg6: memref<1x16x16x128xf32, #tpu.memory_space<vmem>>, %arg7: memref<18x18x128xf32, #tpu.memory_space<vmem>>) attributes {dimension_semantics = [#tpu.dimension_semantics<parallel>], iteration_bounds = array<i64: 2>, scalar_prefetch = 0 : i64, scratch_operands = 1 : i64, tpu.core_type = #tpu.core_type<tc>, window_params = [{transform_indices = @transform_0, window_bounds = array<i64: 1, 18, 18, 128>}, {pipeline_mode = #tpu.pipeline_mode<synchronous>, transform_indices = @transform_1, window_bounds = array<i64: 128, 128>}, {pipeline_mode = #tpu.pipeline_mode<synchronous>, transform_indices = @transform_2, window_bounds = array<i64: 1, 128>}, {pipeline_mode = #tpu.pipeline_mode<synchronous>, transform_indices = @transform_3, window_bounds = array<i64: 9, 128, 128>}, {pipeline_mode = #tpu.pipeline_mode<synchronous>, transform_indices = @transform_4, window_bounds = array<i64: 1, 128>}, {transform_indices = @transform_5, window_bounds = array<i64: 1, 16, 16, 128>}]} {
    %cst = arith.constant 0.000000e+00 : f32
    %0 = vector.broadcast %cst : f32 to vector<18x18x128xf32>
    %c0 = arith.constant 0 : index
    %c0_0 = arith.constant 0 : index
    %c0_1 = arith.constant 0 : index
    %1 = vector.load %arg7[%c0, %c0_0, %c0_1] : memref<18x18x128xf32, #tpu.memory_space<vmem>>, vector<18x18x128xf32>
    tpu.vector_store %arg7[%c0, %c0_0, %c0_1], %0 {strides = array<i32>} : memref<18x18x128xf32, #tpu.memory_space<vmem>>, vector<18x18x128xf32>,
    %c0_2 = arith.constant 0 : index
    %c1 = arith.constant 1 : index
    %c1_3 = arith.constant 1 : index
    %c0_4 = arith.constant 0 : index
    %2 = vector.load %arg1[%c0_2, %c1, %c1_3, %c0_4] : memref<1x18x18x128xf32, #tpu.memory_space<vmem>>, vector<1x16x16x128xf32>
    %3 = vector.shape_cast %2 : vector<1x16x16x128xf32> to vector<16x16x128xf32>
    %4 = vector.shape_cast %3 : vector<16x16x128xf32> to vector<256x128xf32>
    %c0_5 = arith.constant 0 : index
    %c0_6 = arith.constant 0 : index
    %5 = vector.load %arg2[%c0_5, %c0_6] : memref<128x128xf32, #tpu.memory_space<vmem>>, vector<128x128xf32>
    %cst_7 = arith.constant dense<0.000000e+00> : vector<256x128xf32>
    %6 = tpu.matmul %4, %5, %cst_7 {dimension_numbers = #tpu.dot_dimension_numbers<[1], [0], [0], [1], [0, 0, 1, 1], [], []>} : vector<256x128xf32>, vector<128x128xf32>, vector<256x128xf32> -> vector<256x128xf32>
    %c0_8 = arith.constant 0 : index
    %c0_9 = arith.constant 0 : index
    %7 = vector.load %arg3[%c0_8, %c0_9] : memref<1x128xf32, #tpu.memory_space<vmem>>, vector<1x128xf32>
    %8 = vector.broadcast %7 : vector<1x128xf32> to vector<256x128xf32>
    %9 = arith.addf %6, %8 : vector<256x128xf32>
    %cst_10 = arith.constant 0.000000e+00 : f32
    %10 = vector.broadcast %cst_10 : f32 to vector<256x128xf32>
    %11 = arith.cmpf oge, %9, %10 : vector<256x128xf32>
    %cst_11 = arith.constant 1.000000e-01 : f32
    %12 = vector.broadcast %cst_11 : f32 to vector<256x128xf32>
    %13 = arith.mulf %12, %9 : vector<256x128xf32>
    %14 = arith.select %11, %9, %13 : vector<256x128xi1>, vector<256x128xf32>
    %15 = vector.shape_cast %14 : vector<256x128xf32> to vector<16x16x128xf32>
    %c1_12 = arith.constant 1 : index
    %c1_13 = arith.constant 1 : index
    %c0_14 = arith.constant 0 : index
    %16 = vector.load %arg7[%c1_12, %c1_13, %c0_14] : memref<18x18x128xf32, #tpu.memory_space<vmem>>, vector<16x16x128xf32>
    tpu.vector_store %arg7[%c1_12, %c1_13, %c0_14], %15 {strides = array<i32>} : memref<18x18x128xf32, #tpu.memory_space<vmem>>, vector<16x16x128xf32>,
    %cst_15 = arith.constant 0.000000e+00 : f32
    %17 = vector.broadcast %cst_15 : f32 to vector<256x128xf32>
    %c0_16 = arith.constant 0 : index
    %c0_17 = arith.constant 0 : index
    %c0_18 = arith.constant 0 : index
    %18 = vector.load %arg7[%c0_16, %c0_17, %c0_18] : memref<18x18x128xf32, #tpu.memory_space<vmem>>, vector<16x16x128xf32>
    %19 = vector.shape_cast %18 : vector<16x16x128xf32> to vector<256x128xf32>
    %c0_19 = arith.constant 0 : index
    %c0_20 = arith.constant 0 : index
    %c0_21 = arith.constant 0 : index
    %20 = vector.load %arg4[%c0_19, %c0_20, %c0_21] : memref<9x128x128xf32, #tpu.memory_space<vmem>>, vector<1x128x128xf32>
    %21 = vector.shape_cast %20 : vector<1x128x128xf32> to vector<128x128xf32>
    %cst_22 = arith.constant dense<0.000000e+00> : vector<256x128xf32>
    %22 = tpu.matmul %19, %21, %cst_22 {dimension_numbers = #tpu.dot_dimension_numbers<[1], [0], [0], [1], [0, 0, 1, 1], [], []>} : vector<256x128xf32>, vector<128x128xf32>, vector<256x128xf32> -> vector<256x128xf32>
    %23 = arith.addf %17, %22 : vector<256x128xf32>
    %c0_23 = arith.constant 0 : index
    %c1_24 = arith.constant 1 : index
    %c0_25 = arith.constant 0 : index
    %24 = vector.load %arg7[%c0_23, %c1_24, %c0_25] : memref<18x18x128xf32, #tpu.memory_space<vmem>>, vector<16x16x128xf32>
    %25 = vector.shape_cast %24 : vector<16x16x128xf32> to vector<256x128xf32>
    %c1_26 = arith.constant 1 : index
    %c0_27 = arith.constant 0 : index
    %c0_28 = arith.constant 0 : index
    %26 = vector.load %arg4[%c1_26, %c0_27, %c0_28] : memref<9x128x128xf32, #tpu.memory_space<vmem>>, vector<1x128x128xf32>
    %27 = vector.shape_cast %26 : vector<1x128x128xf32> to vector<128x128xf32>
    %cst_29 = arith.constant dense<0.000000e+00> : vector<256x128xf32>
    %28 = tpu.matmul %25, %27, %cst_29 {dimension_numbers = #tpu.dot_dimension_numbers<[1], [0], [0], [1], [0, 0, 1, 1], [], []>} : vector<256x128xf32>, vector<128x128xf32>, vector<256x128xf32> -> vector<256x128xf32>
    %29 = arith.addf %23, %28 : vector<256x128xf32>
    %c0_30 = arith.constant 0 : index
    %c2 = arith.constant 2 : index
    %c0_31 = arith.constant 0 : index
    %30 = vector.load %arg7[%c0_30, %c2, %c0_31] : memref<18x18x128xf32, #tpu.memory_space<vmem>>, vector<16x16x128xf32>
    %31 = vector.shape_cast %30 : vector<16x16x128xf32> to vector<256x128xf32>
    %c2_32 = arith.constant 2 : index
    %c0_33 = arith.constant 0 : index
    %c0_34 = arith.constant 0 : index
    %32 = vector.load %arg4[%c2_32, %c0_33, %c0_34] : memref<9x128x128xf32, #tpu.memory_space<vmem>>, vector<1x128x128xf32>
    %33 = vector.shape_cast %32 : vector<1x128x128xf32> to vector<128x128xf32>
    %cst_35 = arith.constant dense<0.000000e+00> : vector<256x128xf32>
    %34 = tpu.matmul %31, %33, %cst_35 {dimension_numbers = #tpu.dot_dimension_numbers<[1], [0], [0], [1], [0, 0, 1, 1], [], []>} : vector<256x128xf32>, vector<128x128xf32>, vector<256x128xf32> -> vector<256x128xf32>
    %35 = arith.addf %29, %34 : vector<256x128xf32>
    %c1_36 = arith.constant 1 : index
    %c0_37 = arith.constant 0 : index
    %c0_38 = arith.constant 0 : index
    %36 = vector.load %arg7[%c1_36, %c0_37, %c0_38] : memref<18x18x128xf32, #tpu.memory_space<vmem>>, vector<16x16x128xf32>
    %37 = vector.shape_cast %36 : vector<16x16x128xf32> to vector<256x128xf32>
    %c3 = arith.constant 3 : index
    %c0_39 = arith.constant 0 : index
    %c0_40 = arith.constant 0 : index
    %38 = vector.load %arg4[%c3, %c0_39, %c0_40] : memref<9x128x128xf32, #tpu.memory_space<vmem>>, vector<1x128x128xf32>
    %39 = vector.shape_cast %38 : vector<1x128x128xf32> to vector<128x128xf32>
    %cst_41 = arith.constant dense<0.000000e+00> : vector<256x128xf32>
    %40 = tpu.matmul %37, %39, %cst_41 {dimension_numbers = #tpu.dot_dimension_numbers<[1], [0], [0], [1], [0, 0, 1, 1], [], []>} : vector<256x128xf32>, vector<128x128xf32>, vector<256x128xf32> -> vector<256x128xf32>
    %41 = arith.addf %35, %40 : vector<256x128xf32>
    %c1_42 = arith.constant 1 : index
    %c1_43 = arith.constant 1 : index
    %c0_44 = arith.constant 0 : index
    %42 = vector.load %arg7[%c1_42, %c1_43, %c0_44] : memref<18x18x128xf32, #tpu.memory_space<vmem>>, vector<16x16x128xf32>
    %43 = vector.shape_cast %42 : vector<16x16x128xf32> to vector<256x128xf32>
    %c4 = arith.constant 4 : index
    %c0_45 = arith.constant 0 : index
    %c0_46 = arith.constant 0 : index
    %44 = vector.load %arg4[%c4, %c0_45, %c0_46] : memref<9x128x128xf32, #tpu.memory_space<vmem>>, vector<1x128x128xf32>
    %45 = vector.shape_cast %44 : vector<1x128x128xf32> to vector<128x128xf32>
    %cst_47 = arith.constant dense<0.000000e+00> : vector<256x128xf32>
    %46 = tpu.matmul %43, %45, %cst_47 {dimension_numbers = #tpu.dot_dimension_numbers<[1], [0], [0], [1], [0, 0, 1, 1], [], []>} : vector<256x128xf32>, vector<128x128xf32>, vector<256x128xf32> -> vector<256x128xf32>
    %47 = arith.addf %41, %46 : vector<256x128xf32>
    %c1_48 = arith.constant 1 : index
    %c2_49 = arith.constant 2 : index
    %c0_50 = arith.constant 0 : index
    %48 = vector.load %arg7[%c1_48, %c2_49, %c0_50] : memref<18x18x128xf32, #tpu.memory_space<vmem>>, vector<16x16x128xf32>
    %49 = vector.shape_cast %48 : vector<16x16x128xf32> to vector<256x128xf32>
    %c5 = arith.constant 5 : index
    %c0_51 = arith.constant 0 : index
    %c0_52 = arith.constant 0 : index
    %50 = vector.load %arg4[%c5, %c0_51, %c0_52] : memref<9x128x128xf32, #tpu.memory_space<vmem>>, vector<1x128x128xf32>
    %51 = vector.shape_cast %50 : vector<1x128x128xf32> to vector<128x128xf32>
    %cst_53 = arith.constant dense<0.000000e+00> : vector<256x128xf32>
    %52 = tpu.matmul %49, %51, %cst_53 {dimension_numbers = #tpu.dot_dimension_numbers<[1], [0], [0], [1], [0, 0, 1, 1], [], []>} : vector<256x128xf32>, vector<128x128xf32>, vector<256x128xf32> -> vector<256x128xf32>
    %53 = arith.addf %47, %52 : vector<256x128xf32>
    %c2_54 = arith.constant 2 : index
    %c0_55 = arith.constant 0 : index
    %c0_56 = arith.constant 0 : index
    %54 = vector.load %arg7[%c2_54, %c0_55, %c0_56] : memref<18x18x128xf32, #tpu.memory_space<vmem>>, vector<16x16x128xf32>
    %55 = vector.shape_cast %54 : vector<16x16x128xf32> to vector<256x128xf32>
    %c6 = arith.constant 6 : index
    %c0_57 = arith.constant 0 : index
    %c0_58 = arith.constant 0 : index
    %56 = vector.load %arg4[%c6, %c0_57, %c0_58] : memref<9x128x128xf32, #tpu.memory_space<vmem>>, vector<1x128x128xf32>
    %57 = vector.shape_cast %56 : vector<1x128x128xf32> to vector<128x128xf32>
    %cst_59 = arith.constant dense<0.000000e+00> : vector<256x128xf32>
    %58 = tpu.matmul %55, %57, %cst_59 {dimension_numbers = #tpu.dot_dimension_numbers<[1], [0], [0], [1], [0, 0, 1, 1], [], []>} : vector<256x128xf32>, vector<128x128xf32>, vector<256x128xf32> -> vector<256x128xf32>
    %59 = arith.addf %53, %58 : vector<256x128xf32>
    %c2_60 = arith.constant 2 : index
    %c1_61 = arith.constant 1 : index
    %c0_62 = arith.constant 0 : index
    %60 = vector.load %arg7[%c2_60, %c1_61, %c0_62] : memref<18x18x128xf32, #tpu.memory_space<vmem>>, vector<16x16x128xf32>
    %61 = vector.shape_cast %60 : vector<16x16x128xf32> to vector<256x128xf32>
    %c7 = arith.constant 7 : index
    %c0_63 = arith.constant 0 : index
    %c0_64 = arith.constant 0 : index
    %62 = vector.load %arg4[%c7, %c0_63, %c0_64] : memref<9x128x128xf32, #tpu.memory_space<vmem>>, vector<1x128x128xf32>
    %63 = vector.shape_cast %62 : vector<1x128x128xf32> to vector<128x128xf32>
    %cst_65 = arith.constant dense<0.000000e+00> : vector<256x128xf32>
    %64 = tpu.matmul %61, %63, %cst_65 {dimension_numbers = #tpu.dot_dimension_numbers<[1], [0], [0], [1], [0, 0, 1, 1], [], []>} : vector<256x128xf32>, vector<128x128xf32>, vector<256x128xf32> -> vector<256x128xf32>
    %65 = arith.addf %59, %64 : vector<256x128xf32>
    %c2_66 = arith.constant 2 : index
    %c2_67 = arith.constant 2 : index
    %c0_68 = arith.constant 0 : index
    %66 = vector.load %arg7[%c2_66, %c2_67, %c0_68] : memref<18x18x128xf32, #tpu.memory_space<vmem>>, vector<16x16x128xf32>
    %67 = vector.shape_cast %66 : vector<16x16x128xf32> to vector<256x128xf32>
    %c8 = arith.constant 8 : index
    %c0_69 = arith.constant 0 : index
    %c0_70 = arith.constant 0 : index
    %68 = vector.load %arg4[%c8, %c0_69, %c0_70] : memref<9x128x128xf32, #tpu.memory_space<vmem>>, vector<1x128x128xf32>
    %69 = vector.shape_cast %68 : vector<1x128x128xf32> to vector<128x128xf32>
    %cst_71 = arith.constant dense<0.000000e+00> : vector<256x128xf32>
    %70 = tpu.matmul %67, %69, %cst_71 {dimension_numbers = #tpu.dot_dimension_numbers<[1], [0], [0], [1], [0, 0, 1, 1], [], []>} : vector<256x128xf32>, vector<128x128xf32>, vector<256x128xf32> -> vector<256x128xf32>
    %71 = arith.addf %65, %70 : vector<256x128xf32>
    %c0_72 = arith.constant 0 : index
    %c0_73 = arith.constant 0 : index
    %72 = vector.load %arg5[%c0_72, %c0_73] : memref<1x128xf32, #tpu.memory_space<vmem>>, vector<1x128xf32>
    %73 = vector.broadcast %72 : vector<1x128xf32> to vector<256x128xf32>
    %74 = arith.addf %71, %73 : vector<256x128xf32>
    %cst_74 = arith.constant 0.000000e+00 : f32
    %75 = vector.broadcast %cst_74 : f32 to vector<256x128xf32>
    %76 = arith.cmpf oge, %74, %75 : vector<256x128xf32>
    %cst_75 = arith.constant 1.000000e-01 : f32
    %77 = vector.broadcast %cst_75 : f32 to vector<256x128xf32>
    %78 = arith.mulf %77, %74 : vector<256x128xf32>
    %79 = arith.select %76, %74, %78 : vector<256x128xi1>, vector<256x128xf32>
    %80 = vector.shape_cast %3 : vector<16x16x128xf32> to vector<256x128xf32>
    %81 = arith.addf %79, %80 : vector<256x128xf32>
    %82 = vector.shape_cast %81 : vector<256x128xf32> to vector<1x16x16x128xf32>
    %c0_76 = arith.constant 0 : index
    %c0_77 = arith.constant 0 : index
    %c0_78 = arith.constant 0 : index
    %c0_79 = arith.constant 0 : index
    %83 = vector.load %arg6[%c0_76, %c0_77, %c0_78, %c0_79] : memref<1x16x16x128xf32, #tpu.memory_space<vmem>>, vector<1x16x16x128xf32>
    tpu.vector_store %arg6[%c0_76, %c0_77, %c0_78, %c0_79], %82 {strides = array<i32>} : memref<1x16x16x128xf32, #tpu.memory_space<vmem>>, vector<1x16x16x128xf32>,
    return
  }
  func.func @transform_0(%arg0: i32) -> (i32, i32, i32, i32) {
    %c0_i32 = arith.constant 0 : i32
    %c0_i32_0 = arith.constant 0 : i32
    %c0_i32_1 = arith.constant 0 : i32
    %c0_i32_2 = arith.constant 0 : i32
    return %arg0, %c0_i32, %c0_i32_0, %c0_i32_1 : i32, i32, i32, i32
  }
  func.func @transform_1(%arg0: i32) -> (i32, i32) {
    %c0_i32 = arith.constant 0 : i32
    %c0_i32_0 = arith.constant 0 : i32
    %c0_i32_1 = arith.constant 0 : i32
    return %c0_i32, %c0_i32_0 : i32, i32
  }
  func.func @transform_2(%arg0: i32) -> (i32, i32) {
    %c0_i32 = arith.constant 0 : i32
    %c0_i32_0 = arith.constant 0 : i32
    %c0_i32_1 = arith.constant 0 : i32
    return %c0_i32, %c0_i32_0 : i32, i32
  }
  func.func @transform_3(%arg0: i32) -> (i32, i32, i32) {
    %c0_i32 = arith.constant 0 : i32
    %c0_i32_0 = arith.constant 0 : i32
    %c0_i32_1 = arith.constant 0 : i32
    %c0_i32_2 = arith.constant 0 : i32
    return %c0_i32, %c0_i32_0, %c0_i32_1 : i32, i32, i32
  }
  func.func @transform_4(%arg0: i32) -> (i32, i32) {
    %c0_i32 = arith.constant 0 : i32
    %c0_i32_0 = arith.constant 0 : i32
    %c0_i32_1 = arith.constant 0 : i32
    return %c0_i32, %c0_i32_0 : i32, i32
  }
  func.func @transform_5(%arg0: i32) -> (i32, i32, i32, i32) {
    %c0_i32 = arith.constant 0 : i32
    %c0_i32_0 = arith.constant 0 : i32
    %c0_i32_1 = arith.constant 0 : i32
    %c0_i32_2 = arith.constant 0 : i32
    return %arg0, %c0_i32, %c0_i32_0, %c0_i32_1 : i32, i32, i32, i32
  }
}

</mosaic_0001>

<llo_original>
// kernel: tpu_custom_call.1
$region0: #{tpu_custom_call.1}
  #allocation0 [shape = 'u32[]', space=smem, size = 0x4, offset = 0x4, fixed_abs, tag = 'smem constant byte address 0x4 - core index']
  #allocation1 [shape = 'u32[144,128]{1,0:T(1,128)}', space=vmem, size = 0x12000, scoped, tag = 'internal scratch']
  #allocation2 [shape = 'f32[18,18,128]{2,1,0:T(8,128)}', space=vmem, size = 0x36000, scoped, tag = 'scratch operand']
  %s0 = inlined_call_operand.vmem [shape: f32[2,18,18,128], index: 0, kind: input, shape index: {}]
  %s1 = inlined_call_operand.vmem [shape: f32[128,128], index: 1, kind: input, shape index: {}]
  %s2 = inlined_call_operand.vmem [shape: f32[1,128], index: 2, kind: input, shape index: {}]
  %s3 = inlined_call_operand.vmem [shape: f32[9,128,128], index: 3, kind: input, shape index: {}]
  %s4 = inlined_call_operand.vmem [shape: f32[1,128], index: 4, kind: input, shape index: {}]
  %s5 = inlined_call_operand.hbm [shape: f32[2,16,16,128], index: 5, kind: output, shape index: {}]
  %s6 = sld [smem:[#allocation0]]
  $region53: #{tpu_custom_call.1} parent=0
    _
  %s8 = ssub.s32 1, %s6
  %s9 = scalar_select 0, %s8, %s6
  $region1: #{tpu_custom_call.1} parent=0
    #allocation3 [shape = 'u8[262144]{0}', space=vmem, size = 0x40000, scoped, tag = 'output window, operand 0']
    #allocation4 [shape = 's32[2]{0}', space=sflag, size = 0x8, scoped, tag = 'scoped memory for tpu_custom_call.1']
    %10 = vsyncpa [#allocation4], 0
    %s11 = scalar_lea.sflag [#allocation4], 1
    %12 = vsyncpa %s11, 0
    loop: start=0, step=1, limit=4
    $region2: #{tpu_custom_call.1} parent=1 // loop_pre_header
      _
    $region3: #{tpu_custom_call.1} parent=1 // loop_header
      %s14 = sphi 0, %s18
      %p15 = scmp.ge.s32.totalorder %s14, 4
      %s24 = sphi 0, %s26
      %s27 = sphi 0, %s24
      %s28 = sphi 0, %s27
      %s44 = sphi 0, %s28
      %s48 = sphi 0, %s48
      %s50 = sphi 0, %s48
      %s51 = sphi 0, %s50
      %s65 = sphi 0, %s51
      %s69 = sphi 0, %s69
      %s71 = sphi 0, %s69
      %s72 = sphi 0, %s71
      %s86 = sphi 0, %s72
      %s90 = sphi 0, %s90
      %s92 = sphi 0, %s90
      %s93 = sphi 0, %s92
      %s107 = sphi 0, %s93
      %s111 = sphi 0, %s111
      %s113 = sphi 0, %s111
      %s114 = sphi 0, %s113
      %s128 = sphi 0, %s114
      %s134 = sphi 0, %s136
      %s137 = sphi 0, %s134
      %s138 = sphi 0, %s137
      %s154 = sphi 0, %s138
    $region4: #{tpu_custom_call.1} parent=1 // loop_header_branch
      %17 = sbr.rel (%p15) target = $region8
    $region5: #{tpu_custom_call.1} parent=1 // loop_body
      %s19 = ssub.s32 %s14, 1
      %s20 = ssub.s32 %s14, 2
      %s21 = sadd.s32 %s14, 1
      %s22 = ssub.s32 %s14, %s21
      %p23 = scmp.eq.s32.totalorder %s22, 0
      %s25 = sadd.s32 %s24, 1
      %s26 = scalar_select %p23, %s24, %s25
      %p29 = pneg %p23
      %p30 = scmp.eq.s32.totalorder %s14, 1
      %p31 = por %p29, %p30
      %p32 = scmp.ne.s32.totalorder %s24, %s27
      %p33 = scmp.eq.s32.totalorder %s14, 0
      %p34 = por %p32, %p33
      %p35 = scmp.ne.s32.totalorder %s24, %s27
      %p36 = scmp.eq.s32.totalorder %s19, 1
      %p37 = por %p35, %p36
      %p38 = scmp.ne.s32.totalorder %s27, %s28
      %p39 = scmp.eq.s32.totalorder %s19, 0
      %p40 = por %p38, %p39
      %p41 = scmp.ne.s32.totalorder %s27, %s28
      %p42 = scmp.eq.s32.totalorder %s20, 1
      %p43 = por %p41, %p42
      %p45 = scmp.ne.s32.totalorder %s28, %s44
      %p46 = scmp.eq.s32.totalorder %s20, 0
      %p47 = por %p45, %p46
      %s49 = sadd.s32 %s48, 1
      %p52 = scmp.eq.s32.totalorder %s14, 1
      %p53 = scmp.ne.s32.totalorder %s48, %s50
      %p54 = scmp.eq.s32.totalorder %s14, 0
      %p55 = por %p53, %p54
      %p56 = scmp.ne.s32.totalorder %s48, %s50
      %p57 = scmp.eq.s32.totalorder %s19, 1
      %p58 = por %p56, %p57
      %p59 = scmp.ne.s32.totalorder %s50, %s51
      %p60 = scmp.eq.s32.totalorder %s19, 0
      %p61 = por %p59, %p60
      %p62 = scmp.ne.s32.totalorder %s50, %s51
      %p63 = scmp.eq.s32.totalorder %s20, 1
      %p64 = por %p62, %p63
      %p66 = scmp.ne.s32.totalorder %s51, %s65
      %p67 = scmp.eq.s32.totalorder %s20, 0
      %p68 = por %p66, %p67
      %s70 = sadd.s32 %s69, 1
      %p73 = scmp.eq.s32.totalorder %s14, 1
      %p74 = scmp.ne.s32.totalorder %s69, %s71
      %p75 = scmp.eq.s32.totalorder %s14, 0
      %p76 = por %p74, %p75
      %p77 = scmp.ne.s32.totalorder %s69, %s71
      %p78 = scmp.eq.s32.totalorder %s19, 1
      %p79 = por %p77, %p78
      %p80 = scmp.ne.s32.totalorder %s71, %s72
      %p81 = scmp.eq.s32.totalorder %s19, 0
      %p82 = por %p80, %p81
      %p83 = scmp.ne.s32.totalorder %s71, %s72
      %p84 = scmp.eq.s32.totalorder %s20, 1
      %p85 = por %p83, %p84
      %p87 = scmp.ne.s32.totalorder %s72, %s86
      %p88 = scmp.eq.s32.totalorder %s20, 0
      %p89 = por %p87, %p88
      %s91 = sadd.s32 %s90, 1
      %p94 = scmp.eq.s32.totalorder %s14, 1
      %p95 = scmp.ne.s32.totalorder %s90, %s92
      %p96 = scmp.eq.s32.totalorder %s14, 0
      %p97 = por %p95, %p96
      %p98 = scmp.ne.s32.totalorder %s90, %s92
      %p99 = scmp.eq.s32.totalorder %s19, 1
      %p100 = por %p98, %p99
      %p101 = scmp.ne.s32.totalorder %s92, %s93
      %p102 = scmp.eq.s32.totalorder %s19, 0
      %p103 = por %p101, %p102
      %p104 = scmp.ne.s32.totalorder %s92, %s93
      %p105 = scmp.eq.s32.totalorder %s20, 1
      %p106 = por %p104, %p105
      %p108 = scmp.ne.s32.totalorder %s93, %s107
      %p109 = scmp.eq.s32.totalorder %s20, 0
      %p110 = por %p108, %p109
      %s112 = sadd.s32 %s111, 1
      %p115 = scmp.eq.s32.totalorder %s14, 1
      %p116 = scmp.ne.s32.totalorder %s111, %s113
      %p117 = scmp.eq.s32.totalorder %s14, 0
      %p118 = por %p116, %p117
      %p119 = scmp.ne.s32.totalorder %s111, %s113
      %p120 = scmp.eq.s32.totalorder %s19, 1
      %p121 = por %p119, %p120
      %p122 = scmp.ne.s32.totalorder %s113, %s114
      %p123 = scmp.eq.s32.totalorder %s19, 0
      %p124 = por %p122, %p123
      %p125 = scmp.ne.s32.totalorder %s113, %s114
      %p126 = scmp.eq.s32.totalorder %s20, 1
      %p127 = por %p125, %p126
      %p129 = scmp.ne.s32.totalorder %s114, %s128
      %p130 = scmp.eq.s32.totalorder %s20, 0
      %p131 = por %p129, %p130
      %s132 = ssub.s32 %s14, %s21
      %p133 = scmp.eq.s32.totalorder %s132, 0
      %s135 = sadd.s32 %s134, 1
      %s136 = scalar_select %p133, %s134, %s135
      %p139 = pneg %p133
      %p140 = scmp.eq.s32.totalorder %s14, 1
      %p141 = por %p139, %p140
      %p142 = scmp.ne.s32.totalorder %s134, %s137
      %p143 = scmp.eq.s32.totalorder %s14, 0
      %p144 = por %p142, %p143
      %p145 = scmp.ne.s32.totalorder %s134, %s137
      %p146 = scmp.eq.s32.totalorder %s19, 1
      %p147 = por %p145, %p146
      %p148 = scmp.ne.s32.totalorder %s137, %s138
      %p149 = scmp.eq.s32.totalorder %s19, 0
      %p150 = por %p148, %p149
      %p151 = scmp.ne.s32.totalorder %s137, %s138
      %p152 = scmp.eq.s32.totalorder %s20, 1
      %p153 = por %p151, %p152
      %p155 = scmp.ne.s32.totalorder %s138, %s154
      %p156 = scmp.eq.s32.totalorder %s20, 0
      %p157 = por %p155, %p156
      %p158 = scmp.le.s32.totalorder 1, %s14
      %p159 = scmp.lt.s32.totalorder %s14, 3
      %p160 = pnand %p158, %p159
      %p161 = pneg %p160
      // Predicated region
      $region9: #{tpu_custom_call.1} parent=5 // pred_check
        _
      $region10: #{tpu_custom_call.1} parent=5 // pred_check_branch
        %163 = sbr.rel (%p160) target = $region12
      $region11: #{tpu_custom_call.1} parent=5 // pred_region
        %s164 = ssub.s32 %s14, 1
        // Predicated region
        $region13: #{tpu_custom_call.1} parent=11 // pred_check
          %p165 = pneg %p61
        $region14: #{tpu_custom_call.1} parent=11 // pred_check_branch
          %167 = sbr.rel (%p165) target = $region16
        $region15: #{tpu_custom_call.1} parent=11 // pred_region
          _
        $region16: #{tpu_custom_call.1} parent=11 // pred_fallthru
          _
        // Predicated region
        $region17: #{tpu_custom_call.1} parent=11 // pred_check
          %p168 = pneg %p82
        $region18: #{tpu_custom_call.1} parent=11 // pred_check_branch
          %170 = sbr.rel (%p168) target = $region20
        $region19: #{tpu_custom_call.1} parent=11 // pred_region
          _
        $region20: #{tpu_custom_call.1} parent=11 // pred_fallthru
          _
        // Predicated region
        $region21: #{tpu_custom_call.1} parent=11 // pred_check
          %p171 = pneg %p103
        $region22: #{tpu_custom_call.1} parent=11 // pred_check_branch
          %173 = sbr.rel (%p171) target = $region24
        $region23: #{tpu_custom_call.1} parent=11 // pred_region
          _
        $region24: #{tpu_custom_call.1} parent=11 // pred_fallthru
          _
        // Predicated region
        $region25: #{tpu_custom_call.1} parent=11 // pred_check
          %p174 = pneg %p124
        $region26: #{tpu_custom_call.1} parent=11 // pred_check_branch
          %176 = sbr.rel (%p174) target = $region28
        $region27: #{tpu_custom_call.1} parent=11 // pred_region
          _
        $region28: #{tpu_custom_call.1} parent=11 // pred_fallthru
          _
      $region12: #{tpu_custom_call.1} parent=5 // pred_fallthru
        _
      %p177 = scmp.lt.s32.totalorder %s14, 2
      // Predicated region
      $region29: #{tpu_custom_call.1} parent=5 // pred_check
        %p178 = pneg %p177
      $region30: #{tpu_custom_call.1} parent=5 // pred_check_branch
        %180 = sbr.rel (%p178) target = $region32
      $region31: #{tpu_custom_call.1} parent=5 // pred_region
        // Predicated region
        $region33: #{tpu_custom_call.1} parent=31 // pred_check
          %p181 = pneg %p34
        $region34: #{tpu_custom_call.1} parent=31 // pred_check_branch
          %183 = sbr.rel (%p181) target = $region36
        $region35: #{tpu_custom_call.1} parent=31 // pred_region
          %p184 = scmp.lt.s32.totalorder %s14, 1
          %s185 = scalar_select %p184, %s14, 1
          %s186 = smul.addr %s185, 54
          %s187 = smul.addr %s186, 8
          %s188 = scalar_lea.vmem %s0, %s187
        $region36: #{tpu_custom_call.1} parent=31 // pred_fallthru
          _
      $region32: #{tpu_custom_call.1} parent=5 // pred_fallthru
        _
      %p189 = scmp.le.s32.totalorder 1, %s14
      %p190 = scmp.lt.s32.totalorder %s14, 3
      %p191 = pnand %p189, %p190
      %p192 = pneg %p191
      // Predicated region
      $region37: #{tpu_custom_call.1} parent=5 // pred_check
        _
      $region38: #{tpu_custom_call.1} parent=5 // pred_check_branch
        %194 = sbr.rel (%p191) target = $region40
      $region39: #{tpu_custom_call.1} parent=5 // pred_region
        %s195 = ssub.s32 %s14, 1
        %p196 = scmp.lt.s32.totalorder %s19, 1
        %s197 = scalar_select %p196, %s19, 1
        %s198 = smul.addr %s197, 54
        %s199 = smul.addr %s198, 8
        %s200 = scalar_lea.vmem %s0, %s199
        %p201 = pneg %p40
        %p202 = pneg %p37
        %p203 = pneg %p61
        %p204 = pneg %p58
        %p205 = pneg %p82
        %p206 = pneg %p79
        %p207 = pneg %p103
        %p208 = pneg %p100
        %p209 = pneg %p124
        %p210 = pneg %p121
        %p211 = pneg %p150
        %p212 = pneg %p147
        %s213 = sand.u32 %s137, 1
        %s214 = scalar_lea.sflag [#allocation4], %s213
        %s215 = sand.u32 %s137, 1
        %s216 = smul.addr %s215, 256
        %s217 = scalar_lea.vmem [#allocation3], %s216
        %p218 = scmp.lt.s32.totalorder %s19, 1
        %s219 = scalar_select %p218, %s19, 1
        %s220 = smul.addr %s219, 54
        %s221 = smul.addr %s220, 8
        %s222 = scalar_lea.vmem %s0, %s221
        %223 = vst [vmem:[#allocation2] sm:$0xff] 0.0
        %224 = vst [vmem:[#allocation2 + $0x8] sm:$0xff] 0.0
        %225 = vst [vmem:[#allocation2 + $0x10] sm:$0x3] 0.0
        %226 = vst [vmem:[#allocation2 + $0x18] sm:$0xff] 0.0
        %227 = vst [vmem:[#allocation2 + $0x20] sm:$0xff] 0.0
        %228 = vst [vmem:[#allocation2 + $0x28] sm:$0x3] 0.0
        %229 = vst [vmem:[#allocation2 + $0x30] sm:$0xff] 0.0
        %230 = vst [vmem:[#allocation2 + $0x38] sm:$0xff] 0.0
        %231 = vst [vmem:[#allocation2 + $0x40] sm:$0x3] 0.0
        %232 = vst [vmem:[#allocation2 + $0x48] sm:$0xff] 0.0
        %233 = vst [vmem:[#allocation2 + $0x50] sm:$0xff] 0.0
        %234 = vst [vmem:[#allocation2 + $0x58] sm:$0x3] 0.0
        %235 = vst [vmem:[#allocation2 + $0x60] sm:$0xff] 0.0
        %236 = vst [vmem:[#allocation2 + $0x68] sm:$0xff] 0.0
        %237 = vst [vmem:[#allocation2 + $0x70] sm:$0x3] 0.0
        %238 = vst [vmem:[#allocation2 + $0x78] sm:$0xff] 0.0
        %239 = vst [vmem:[#allocation2 + $0x80] sm:$0xff] 0.0
        %240 = vst [vmem:[#allocation2 + $0x88] sm:$0x3] 0.0
        %241 = vst [vmem:[#allocation2 + $0x90] sm:$0xff] 0.0
        %242 = vst [vmem:[#allocation2 + $0x98] sm:$0xff] 0.0
        %243 = vst [vmem:[#allocation2 + $0xa0] sm:$0x3] 0.0
        %244 = vst [vmem:[#allocation2 + $0xa8] sm:$0xff] 0.0
        %245 = vst [vmem:[#allocation2 + $0xb0] sm:$0xff] 0.0
        %246 = vst [vmem:[#allocation2 + $0xb8] sm:$0x3] 0.0
        %247 = vst [vmem:[#allocation2 + $0xc0] sm:$0xff] 0.0
        %248 = vst [vmem:[#allocation2 + $0xc8] sm:$0xff] 0.0
        %249 = vst [vmem:[#allocation2 + $0xd0] sm:$0x3] 0.0
        %250 = vst [vmem:[#allocation2 + $0xd8] sm:$0xff] 0.0
        %251 = vst [vmem:[#allocation2 + $0xe0] sm:$0xff] 0.0
        %252 = vst [vmem:[#allocation2 + $0xe8] sm:$0x3] 0.0
        %253 = vst [vmem:[#allocation2 + $0xf0] sm:$0xff] 0.0
        %254 = vst [vmem:[#allocation2 + $0xf8] sm:$0xff] 0.0
        %255 = vst [vmem:[#allocation2 + $0x100] sm:$0x3] 0.0
        %256 = vst [vmem:[#allocation2 + $0x108] sm:$0xff] 0.0
        %257 = vst [vmem:[#allocation2 + $0x110] sm:$0xff] 0.0
        %258 = vst [vmem:[#allocation2 + $0x118] sm:$0x3] 0.0
        %259 = vst [vmem:[#allocation2 + $0x120] sm:$0xff] 0.0
        %260 = vst [vmem:[#allocation2 + $0x128] sm:$0xff] 0.0
        %261 = vst [vmem:[#allocation2 + $0x130] sm:$0x3] 0.0
        %262 = vst [vmem:[#allocation2 + $0x138] sm:$0xff] 0.0
        %263 = vst [vmem:[#allocation2 + $0x140] sm:$0xff] 0.0
        %264 = vst [vmem:[#allocation2 + $0x148] sm:$0x3] 0.0
        %265 = vst [vmem:[#allocation2 + $0x150] sm:$0xff] 0.0
        %266 = vst [vmem:[#allocation2 + $0x158] sm:$0xff] 0.0
        %267 = vst [vmem:[#allocation2 + $0x160] sm:$0x3] 0.0
        %268 = vst [vmem:[#allocation2 + $0x168] sm:$0xff] 0.0
        %269 = vst [vmem:[#allocation2 + $0x170] sm:$0xff] 0.0
        %270 = vst [vmem:[#allocation2 + $0x178] sm:$0x3] 0.0
        %271 = vst [vmem:[#allocation2 + $0x180] sm:$0xff] 0.0
        %272 = vst [vmem:[#allocation2 + $0x188] sm:$0xff] 0.0
        %273 = vst [vmem:[#allocation2 + $0x190] sm:$0x3] 0.0
        %274 = vst [vmem:[#allocation2 + $0x198] sm:$0xff] 0.0
        %275 = vst [vmem:[#allocation2 + $0x1a0] sm:$0xff] 0.0
        %276 = vst [vmem:[#allocation2 + $0x1a8] sm:$0x3] 0.0
        %s277 = scalar_lea.vmem %s222, 24
        %v278 = vld [vmem:[%s277 + $0x1] sm:$0xff]
        %v279 = vld [vmem:[%s277 + $0x9] sm:$0xff]
        %v280 = vld [vmem:[%s277 + $0x19] sm:$0xff]
        %v281 = vld [vmem:[%s277 + $0x21] sm:$0xff]
        %v282 = vld [vmem:[%s277 + $0x31] sm:$0xff]
        %v283 = vld [vmem:[%s277 + $0x39] sm:$0xff]
        %v284 = vld [vmem:[%s277 + $0x49] sm:$0xff]
        %v285 = vld [vmem:[%s277 + $0x51] sm:$0xff]
        %v286 = vld [vmem:[%s277 + $0x61] sm:$0xff]
        %v287 = vld [vmem:[%s277 + $0x69] sm:$0xff]
        %v288 = vld [vmem:[%s277 + $0x79] sm:$0xff]
        %v289 = vld [vmem:[%s277 + $0x81] sm:$0xff]
        %v290 = vld [vmem:[%s277 + $0x91] sm:$0xff]
        %v291 = vld [vmem:[%s277 + $0x99] sm:$0xff]
        %v292 = vld [vmem:[%s277 + $0xa9] sm:$0xff]
        %v293 = vld [vmem:[%s277 + $0xb1] sm:$0xff]
        %v294 = vld [vmem:[%s277 + $0xc1] sm:$0xff]
        %v295 = vld [vmem:[%s277 + $0xc9] sm:$0xff]
        %v296 = vld [vmem:[%s277 + $0xd9] sm:$0xff]
        %v297 = vld [vmem:[%s277 + $0xe1] sm:$0xff]
        %v298 = vld [vmem:[%s277 + $0xf1] sm:$0xff]
        %v299 = vld [vmem:[%s277 + $0xf9] sm:$0xff]
        %v300 = vld [vmem:[%s277 + $0x109] sm:$0xff]
        %v301 = vld [vmem:[%s277 + $0x111] sm:$0xff]
        %v302 = vld [vmem:[%s277 + $0x121] sm:$0xff]
        %v303 = vld [vmem:[%s277 + $0x129] sm:$0xff]
        %v304 = vld [vmem:[%s277 + $0x139] sm:$0xff]
        %v305 = vld [vmem:[%s277 + $0x141] sm:$0xff]
        %v306 = vld [vmem:[%s277 + $0x151] sm:$0xff]
        %v307 = vld [vmem:[%s277 + $0x159] sm:$0xff]
        %v308 = vld [vmem:[%s277 + $0x169] sm:$0xff]
        %v309 = vld [vmem:[%s277 + $0x171] sm:$0xff]
        %v310 = vld [vmem:[%s1] sm:$0xff]
        %v311 = vld [vmem:[%s1 + $0x8] sm:$0xff]
        %v312 = vld [vmem:[%s1 + $0x10] sm:$0xff]
        %v313 = vld [vmem:[%s1 + $0x18] sm:$0xff]
        %v314 = vld [vmem:[%s1 + $0x20] sm:$0xff]
        %v315 = vld [vmem:[%s1 + $0x28] sm:$0xff]
        %v316 = vld [vmem:[%s1 + $0x30] sm:$0xff]
        %v317 = vld [vmem:[%s1 + $0x38] sm:$0xff]
        %v318 = vld [vmem:[%s1 + $0x40] sm:$0xff]
        %v319 = vld [vmem:[%s1 + $0x48] sm:$0xff]
        %v320 = vld [vmem:[%s1 + $0x50] sm:$0xff]
        %v321 = vld [vmem:[%s1 + $0x58] sm:$0xff]
        %v322 = vld [vmem:[%s1 + $0x60] sm:$0xff]
        %v323 = vld [vmem:[%s1 + $0x68] sm:$0xff]
        %v324 = vld [vmem:[%s1 + $0x70] sm:$0xff]
        %v325 = vld [vmem:[%s1 + $0x78] sm:$0xff]
        %v326 = vld [vmem:[%s2] sm:$0x1]
        %v328 = vlaneseq
        %v329 = vshrl.u32 %v328, 7
        %v330 = vsub.s32 0, %v329
        %v331 = vrot.slane %v326, %v330
        %333 = vmatprep.subr.mxu0 0.0
        %334 = vmatpush1.msra.mxu0 %v325
        %335 = vmatprep.subr.mxu0 0.0
        %336 = vmatpush1.msra.mxu0 %v324
        %337 = vmatprep.subr.mxu0 0.0
        %338 = vmatpush1.msra.mxu0 %v323
        %339 = vmatprep.subr.mxu0 0.0
        %340 = vmatpush1.msra.mxu0 %v322
        %341 = vmatprep.subr.mxu0 0.0
        %342 = vmatpush1.msra.mxu0 %v321
        %343 = vmatprep.subr.mxu0 0.0
        %344 = vmatpush1.msra.mxu0 %v320
        %345 = vmatprep.subr.mxu0 0.0
        %346 = vmatpush1.msra.mxu0 %v319
        %347 = vmatprep.subr.mxu0 0.0
        %348 = vmatpush1.msra.mxu0 %v318
        %349 = vmatprep.subr.mxu0 0.0
        %350 = vmatpush1.msra.mxu0 %v317
        %351 = vmatprep.subr.mxu0 0.0
        %352 = vmatpush1.msra.mxu0 %v316
        %353 = vmatprep.subr.mxu0 0.0
        %354 = vmatpush1.msra.mxu0 %v315
        %355 = vmatprep.subr.mxu0 0.0
        %356 = vmatpush1.msra.mxu0 %v314
        %357 = vmatprep.subr.mxu0 0.0
        %358 = vmatpush1.msra.mxu0 %v313
        %359 = vmatprep.subr.mxu0 0.0
        %360 = vmatpush1.msra.mxu0 %v312
        %361 = vmatprep.subr.mxu0 0.0
        %362 = vmatpush1.msra.mxu0 %v311
        %363 = vmatprep.subr.mxu0 0.0
        %364 = vmatpush1.msra.mxu0 %v310
        %365 = vmatprep.subr.mxu0 0.0
        %366 = vmatpush2.msra.mxu0 0.0
        %367 = vmatprep.subr.mxu0 0.0
        %368 = vmatpush2.msra.mxu0 0.0
        %369 = vmatprep.subr.mxu0 0.0
        %370 = vmatpush2.msra.mxu0 0.0
        %371 = vmatprep.subr.mxu0 0.0
        %372 = vmatpush2.msra.mxu0 0.0
        %373 = vmatprep.subr.mxu0 0.0
        %374 = vmatpush2.msra.mxu0 0.0
        %375 = vmatprep.subr.mxu0 0.0
        %376 = vmatpush2.msra.mxu0 0.0
        %377 = vmatprep.subr.mxu0 0.0
        %378 = vmatpush2.msra.mxu0 0.0
        %379 = vmatprep.subr.mxu0 0.0
        %380 = vmatpush2.msra.mxu0 0.0
        %381 = vmatprep.subr.mxu0 0.0
        %382 = vmatpush2.msra.mxu0 0.0
        %383 = vmatprep.subr.mxu0 0.0
        %384 = vmatpush2.msra.mxu0 0.0
        %385 = vmatprep.subr.mxu0 0.0
        %386 = vmatpush2.msra.mxu0 0.0
        %387 = vmatprep.subr.mxu0 0.0
        %388 = vmatpush2.msra.mxu0 0.0
        %389 = vmatprep.subr.mxu0 0.0
        %390 = vmatpush2.msra.mxu0 0.0
        %391 = vmatprep.subr.mxu0 0.0
        %392 = vmatpush2.msra.mxu0 0.0
        %393 = vmatprep.subr.mxu0 0.0
        %394 = vmatpush2.msra.mxu0 0.0
        %395 = vmatprep.subr.mxu0 0.0
        %396 = vmatpush2.msra.mxu0 0.0
        %397 = vmatprep.mubr.f32.mxu0 0.0
        %398 = vmatmul.mubr.f32.gmra.mxu0 %v278
        %v399 = vpop.f32.mrf.mxu0
        %v400 = vadd.f32 %v331, %v399
        %v401 = vpop.f32.mrf.mxu0
        %402 = vmatprep.mubr.f32.mxu0 0.0
        %403 = vmatmul.mubr.f32.gmra.mxu0 %v279
        %v404 = vpop.f32.mrf.mxu0
        %v405 = vadd.f32 %v331, %v404
        %v406 = vpop.f32.mrf.mxu0
        %407 = vmatprep.mubr.f32.mxu0 0.0
        %408 = vmatmul.mubr.f32.gmra.mxu0 %v280
        %v409 = vpop.f32.mrf.mxu0
        %v410 = vadd.f32 %v331, %v409
        %v411 = vpop.f32.mrf.mxu0
        %412 = vmatprep.mubr.f32.mxu0 0.0
        %413 = vmatmul.mubr.f32.gmra.mxu0 %v281
        %v414 = vpop.f32.mrf.mxu0
        %v415 = vadd.f32 %v331, %v414
        %v416 = vpop.f32.mrf.mxu0
        %417 = vmatprep.mubr.f32.mxu0 0.0
        %418 = vmatmul.mubr.f32.gmra.mxu0 %v282
        %v419 = vpop.f32.mrf.mxu0
        %v420 = vadd.f32 %v331, %v419
        %v421 = vpop.f32.mrf.mxu0
        %422 = vmatprep.mubr.f32.mxu0 0.0
        %423 = vmatmul.mubr.f32.gmra.mxu0 %v283
        %v424 = vpop.f32.mrf.mxu0
        %v425 = vadd.f32 %v331, %v424
        %v426 = vpop.f32.mrf.mxu0
        %427 = vmatprep.mubr.f32.mxu0 0.0
        %428 = vmatmul.mubr.f32.gmra.mxu0 %v284
        %v429 = vpop.f32.mrf.mxu0
        %v430 = vadd.f32 %v331, %v429
        %v431 = vpop.f32.mrf.mxu0
        %432 = vmatprep.mubr.f32.mxu0 0.0
        %433 = vmatmul.mubr.f32.gmra.mxu0 %v285
        %v434 = vpop.f32.mrf.mxu0
        %v435 = vadd.f32 %v331, %v434
        %v436 = vpop.f32.mrf.mxu0
        %437 = vmatprep.mubr.f32.mxu0 0.0
        %438 = vmatmul.mubr.f32.gmra.mxu0 %v286
        %v439 = vpop.f32.mrf.mxu0
        %v440 = vadd.f32 %v331, %v439
        %v441 = vpop.f32.mrf.mxu0
        %442 = vmatprep.mubr.f32.mxu0 0.0
        %443 = vmatmul.mubr.f32.gmra.mxu0 %v287
        %v444 = vpop.f32.mrf.mxu0
        %v445 = vadd.f32 %v331, %v444
        %v446 = vpop.f32.mrf.mxu0
        %447 = vmatprep.mubr.f32.mxu0 0.0
        %448 = vmatmul.mubr.f32.gmra.mxu0 %v288
        %v449 = vpop.f32.mrf.mxu0
        %v450 = vadd.f32 %v331, %v449
        %v451 = vpop.f32.mrf.mxu0
        %452 = vmatprep.mubr.f32.mxu0 0.0
        %453 = vmatmul.mubr.f32.gmra.mxu0 %v289
        %v454 = vpop.f32.mrf.mxu0
        %v455 = vadd.f32 %v331, %v454
        %v456 = vpop.f32.mrf.mxu0
        %457 = vmatprep.mubr.f32.mxu0 0.0
        %458 = vmatmul.mubr.f32.gmra.mxu0 %v290
        %v459 = vpop.f32.mrf.mxu0
        %v460 = vadd.f32 %v331, %v459
        %v461 = vpop.f32.mrf.mxu0
        %462 = vmatprep.mubr.f32.mxu0 0.0
        %463 = vmatmul.mubr.f32.gmra.mxu0 %v291
        %v464 = vpop.f32.mrf.mxu0
        %v465 = vadd.f32 %v331, %v464
        %v466 = vpop.f32.mrf.mxu0
        %467 = vmatprep.mubr.f32.mxu0 0.0
        %468 = vmatmul.mubr.f32.gmra.mxu0 %v292
        %v469 = vpop.f32.mrf.mxu0
        %v470 = vadd.f32 %v331, %v469
        %v471 = vpop.f32.mrf.mxu0
        %472 = vmatprep.mubr.f32.mxu0 0.0
        %473 = vmatmul.mubr.f32.gmra.mxu0 %v293
        %v474 = vpop.f32.mrf.mxu0
        %v475 = vadd.f32 %v331, %v474
        %v476 = vpop.f32.mrf.mxu0
        %477 = vmatprep.mubr.f32.mxu0 0.0
        %478 = vmatmul.mubr.f32.gmra.mxu0 %v294
        %v479 = vpop.f32.mrf.mxu0
        %v480 = vadd.f32 %v331, %v479
        %v481 = vpop.f32.mrf.mxu0
        %482 = vmatprep.mubr.f32.mxu0 0.0
        %483 = vmatmul.mubr.f32.gmra.mxu0 %v295
        %v484 = vpop.f32.mrf.mxu0
        %v485 = vadd.f32 %v331, %v484
        %v486 = vpop.f32.mrf.mxu0
        %487 = vmatprep.mubr.f32.mxu0 0.0
        %488 = vmatmul.mubr.f32.gmra.mxu0 %v296
        %v489 = vpop.f32.mrf.mxu0
        %v490 = vadd.f32 %v331, %v489
        %v491 = vpop.f32.mrf.mxu0
        %492 = vmatprep.mubr.f32.mxu0 0.0
        %493 = vmatmul.mubr.f32.gmra.mxu0 %v297
        %v494 = vpop.f32.mrf.mxu0
        %v495 = vadd.f32 %v331, %v494
        %v496 = vpop.f32.mrf.mxu0
        %497 = vmatprep.mubr.f32.mxu0 0.0
        %498 = vmatmul.mubr.f32.gmra.mxu0 %v298
        %v499 = vpop.f32.mrf.mxu0
        %v500 = vadd.f32 %v331, %v499
        %v501 = vpop.f32.mrf.mxu0
        %502 = vmatprep.mubr.f32.mxu0 0.0
        %503 = vmatmul.mubr.f32.gmra.mxu0 %v299
        %v504 = vpop.f32.mrf.mxu0
        %v505 = vadd.f32 %v331, %v504
        %v506 = vpop.f32.mrf.mxu0
        %507 = vmatprep.mubr.f32.mxu0 0.0
        %508 = vmatmul.mubr.f32.gmra.mxu0 %v300
        %v509 = vpop.f32.mrf.mxu0
        %v510 = vadd.f32 %v331, %v509
        %v511 = vpop.f32.mrf.mxu0
        %512 = vmatprep.mubr.f32.mxu0 0.0
        %513 = vmatmul.mubr.f32.gmra.mxu0 %v301
        %v514 = vpop.f32.mrf.mxu0
        %v515 = vadd.f32 %v331, %v514
        %v516 = vpop.f32.mrf.mxu0
        %517 = vmatprep.mubr.f32.mxu0 0.0
        %518 = vmatmul.mubr.f32.gmra.mxu0 %v302
        %v519 = vpop.f32.mrf.mxu0
        %v520 = vadd.f32 %v331, %v519
        %v521 = vpop.f32.mrf.mxu0
        %522 = vmatprep.mubr.f32.mxu0 0.0
        %523 = vmatmul.mubr.f32.gmra.mxu0 %v303
        %v524 = vpop.f32.mrf.mxu0
        %v525 = vadd.f32 %v331, %v524
        %v526 = vpop.f32.mrf.mxu0
        %527 = vmatprep.mubr.f32.mxu0 0.0
        %528 = vmatmul.mubr.f32.gmra.mxu0 %v304
        %v529 = vpop.f32.mrf.mxu0
        %v530 = vadd.f32 %v331, %v529
        %v531 = vpop.f32.mrf.mxu0
        %532 = vmatprep.mubr.f32.mxu0 0.0
        %533 = vmatmul.mubr.f32.gmra.mxu0 %v305
        %v534 = vpop.f32.mrf.mxu0
        %v535 = vadd.f32 %v331, %v534
        %v536 = vpop.f32.mrf.mxu0
        %537 = vmatprep.mubr.f32.mxu0 0.0
        %538 = vmatmul.mubr.f32.gmra.mxu0 %v306
        %v539 = vpop.f32.mrf.mxu0
        %v540 = vadd.f32 %v331, %v539
        %v541 = vpop.f32.mrf.mxu0
        %542 = vmatprep.mubr.f32.mxu0 0.0
        %543 = vmatmul.mubr.f32.gmra.mxu0 %v307
        %v544 = vpop.f32.mrf.mxu0
        %v545 = vadd.f32 %v331, %v544
        %v546 = vpop.f32.mrf.mxu0
        %547 = vmatprep.mubr.f32.mxu0 0.0
        %548 = vmatmul.mubr.f32.gmra.mxu0 %v308
        %v549 = vpop.f32.mrf.mxu0
        %v550 = vadd.f32 %v331, %v549
        %v551 = vpop.f32.mrf.mxu0
        %552 = vmatprep.mubr.f32.mxu0 0.0
        %553 = vmatmul.mubr.f32.gmra.mxu0 %v309
        %v554 = vpop.f32.mrf.mxu0
        %v555 = vadd.f32 %v331, %v554
        %v556 = vpop.f32.mrf.mxu0
        %557 = vdwg.mxu0
        %vm558 = vcmp.ge.f32.partialorder %v400, 0.0
        %vm559 = vcmp.ge.f32.partialorder %v405, 0.0
        %vm560 = vcmp.ge.f32.partialorder %v410, 0.0
        %vm561 = vcmp.ge.f32.partialorder %v415, 0.0
        %vm562 = vcmp.ge.f32.partialorder %v420, 0.0
        %vm563 = vcmp.ge.f32.partialorder %v425, 0.0
        %vm564 = vcmp.ge.f32.partialorder %v430, 0.0
        %vm565 = vcmp.ge.f32.partialorder %v435, 0.0
        %vm566 = vcmp.ge.f32.partialorder %v440, 0.0
        %vm567 = vcmp.ge.f32.partialorder %v445, 0.0
        %vm568 = vcmp.ge.f32.partialorder %v450, 0.0
        %vm569 = vcmp.ge.f32.partialorder %v455, 0.0
        %vm570 = vcmp.ge.f32.partialorder %v460, 0.0
        %vm571 = vcmp.ge.f32.partialorder %v465, 0.0
        %vm572 = vcmp.ge.f32.partialorder %v470, 0.0
        %vm573 = vcmp.ge.f32.partialorder %v475, 0.0
        %vm574 = vcmp.ge.f32.partialorder %v480, 0.0
        %vm575 = vcmp.ge.f32.partialorder %v485, 0.0
        %vm576 = vcmp.ge.f32.partialorder %v490, 0.0
        %vm577 = vcmp.ge.f32.partialorder %v495, 0.0
        %vm578 = vcmp.ge.f32.partialorder %v500, 0.0
        %vm579 = vcmp.ge.f32.partialorder %v505, 0.0
        %vm580 = vcmp.ge.f32.partialorder %v510, 0.0
        %vm581 = vcmp.ge.f32.partialorder %v515, 0.0
        %vm582 = vcmp.ge.f32.partialorder %v520, 0.0
        %vm583 = vcmp.ge.f32.partialorder %v525, 0.0
        %vm584 = vcmp.ge.f32.partialorder %v530, 0.0
        %vm585 = vcmp.ge.f32.partialorder %v535, 0.0
        %vm586 = vcmp.ge.f32.partialorder %v540, 0.0
        %vm587 = vcmp.ge.f32.partialorder %v545, 0.0
        %vm588 = vcmp.ge.f32.partialorder %v550, 0.0
        %vm589 = vcmp.ge.f32.partialorder %v555, 0.0
        %v590 = vmul.f32 %v400, 0.1
        %v591 = vmul.f32 %v405, 0.1
        %v592 = vmul.f32 %v410, 0.1
        %v593 = vmul.f32 %v415, 0.1
        %v594 = vmul.f32 %v420, 0.1
        %v595 = vmul.f32 %v425, 0.1
        %v596 = vmul.f32 %v430, 0.1
        %v597 = vmul.f32 %v435, 0.1
        %v598 = vmul.f32 %v440, 0.1
        %v599 = vmul.f32 %v445, 0.1
        %v600 = vmul.f32 %v450, 0.1
        %v601 = vmul.f32 %v455, 0.1
        %v602 = vmul.f32 %v460, 0.1
        %v603 = vmul.f32 %v465, 0.1
        %v604 = vmul.f32 %v470, 0.1
        %v605 = vmul.f32 %v475, 0.1
        %v606 = vmul.f32 %v480, 0.1
        %v607 = vmul.f32 %v485, 0.1
        %v608 = vmul.f32 %v490, 0.1
        %v609 = vmul.f32 %v495, 0.1
        %v610 = vmul.f32 %v500, 0.1
        %v611 = vmul.f32 %v505, 0.1
        %v612 = vmul.f32 %v510, 0.1
        %v613 = vmul.f32 %v515, 0.1
        %v614 = vmul.f32 %v520, 0.1
        %v615 = vmul.f32 %v525, 0.1
        %v616 = vmul.f32 %v530, 0.1
        %v617 = vmul.f32 %v535, 0.1
        %v618 = vmul.f32 %v540, 0.1
        %v619 = vmul.f32 %v545, 0.1
        %v620 = vmul.f32 %v550, 0.1
        %v621 = vmul.f32 %v555, 0.1
        %v622 = vsel %vm558, %v400, %v590
        %v623 = vsel %vm559, %v405, %v591
        %v624 = vsel %vm560, %v410, %v592
        %v625 = vsel %vm561, %v415, %v593
        %v626 = vsel %vm562, %v420, %v594
        %v627 = vsel %vm563, %v425, %v595
        %v628 = vsel %vm564, %v430, %v596
        %v629 = vsel %vm565, %v435, %v597
        %v630 = vsel %vm566, %v440, %v598
        %v631 = vsel %vm567, %v445, %v599
        %v632 = vsel %vm568, %v450, %v600
        %v633 = vsel %vm569, %v455, %v601
        %v634 = vsel %vm570, %v460, %v602
        %v635 = vsel %vm571, %v465, %v603
        %v636 = vsel %vm572, %v470, %v604
        %v637 = vsel %vm573, %v475, %v605
        %v638 = vsel %vm574, %v480, %v606
        %v639 = vsel %vm575, %v485, %v607
        %v640 = vsel %vm576, %v490, %v608
        %v641 = vsel %vm577, %v495, %v609
        %v642 = vsel %vm578, %v500, %v610
        %v643 = vsel %vm579, %v505, %v611
        %v644 = vsel %vm580, %v510, %v612
        %v645 = vsel %vm581, %v515, %v613
        %v646 = vsel %vm582, %v520, %v614
        %v647 = vsel %vm583, %v525, %v615
        %v648 = vsel %vm584, %v530, %v616
        %v649 = vsel %vm585, %v535, %v617
        %v650 = vsel %vm586, %v540, %v618
        %v651 = vsel %vm587, %v545, %v619
        %v652 = vsel %vm588, %v550, %v620
        %v653 = vsel %vm589, %v555, %v621
        %s654 = scalar_lea.vmem [#allocation2], 24
        %655 = vst [vmem:[%s654 + $0x1] sm:$0xff] %v622
        %656 = vst [vmem:[%s654 + $0x9] sm:$0xff] %v623
        %657 = vst [vmem:[%s654 + $0x19] sm:$0xff] %v624
        %658 = vst [vmem:[%s654 + $0x21] sm:$0xff] %v625
        %659 = vst [vmem:[%s654 + $0x31] sm:$0xff] %v626
        %660 = vst [vmem:[%s654 + $0x39] sm:$0xff] %v627
        %661 = vst [vmem:[%s654 + $0x49] sm:$0xff] %v628
        %662 = vst [vmem:[%s654 + $0x51] sm:$0xff] %v629
        %663 = vst [vmem:[%s654 + $0x61] sm:$0xff] %v630
        %664 = vst [vmem:[%s654 + $0x69] sm:$0xff] %v631
        %665 = vst [vmem:[%s654 + $0x79] sm:$0xff] %v632
        %666 = vst [vmem:[%s654 + $0x81] sm:$0xff] %v633
        %667 = vst [vmem:[%s654 + $0x91] sm:$0xff] %v634
        %668 = vst [vmem:[%s654 + $0x99] sm:$0xff] %v635
        %669 = vst [vmem:[%s654 + $0xa9] sm:$0xff] %v636
        %670 = vst [vmem:[%s654 + $0xb1] sm:$0xff] %v637
        %671 = vst [vmem:[%s654 + $0xc1] sm:$0xff] %v638
        %672 = vst [vmem:[%s654 + $0xc9] sm:$0xff] %v639
        %673 = vst [vmem:[%s654 + $0xd9] sm:$0xff] %v640
        %674 = vst [vmem:[%s654 + $0xe1] sm:$0xff] %v641
        %675 = vst [vmem:[%s654 + $0xf1] sm:$0xff] %v642
        %676 = vst [vmem:[%s654 + $0xf9] sm:$0xff] %v643
        %677 = vst [vmem:[%s654 + $0x109] sm:$0xff] %v644
        %678 = vst [vmem:[%s654 + $0x111] sm:$0xff] %v645
        %679 = vst [vmem:[%s654 + $0x121] sm:$0xff] %v646
        %680 = vst [vmem:[%s654 + $0x129] sm:$0xff] %v647
        %681 = vst [vmem:[%s654 + $0x139] sm:$0xff] %v648
        %682 = vst [vmem:[%s654 + $0x141] sm:$0xff] %v649
        %683 = vst [vmem:[%s654 + $0x151] sm:$0xff] %v650
        %684 = vst [vmem:[%s654 + $0x159] sm:$0xff] %v651
        %685 = vst [vmem:[%s654 + $0x169] sm:$0xff] %v652
        %686 = vst [vmem:[%s654 + $0x171] sm:$0xff] %v653
        %v687 = vld [vmem:[#allocation2] sm:$0xff]
        %v688 = vld [vmem:[#allocation2 + $0x8] sm:$0xff]
        %v689 = vld [vmem:[#allocation2 + $0x18] sm:$0xff]
        %v690 = vld [vmem:[#allocation2 + $0x20] sm:$0xff]
        %v691 = vld [vmem:[#allocation2 + $0x30] sm:$0xff]
        %v692 = vld [vmem:[#allocation2 + $0x38] sm:$0xff]
        %v693 = vld [vmem:[#allocation2 + $0x48] sm:$0xff]
        %v694 = vld [vmem:[#allocation2 + $0x50] sm:$0xff]
        %v695 = vld [vmem:[#allocation2 + $0x60] sm:$0xff]
        %v696 = vld [vmem:[#allocation2 + $0x68] sm:$0xff]
        %v697 = vld [vmem:[#allocation2 + $0x78] sm:$0xff]
        %v698 = vld [vmem:[#allocation2 + $0x80] sm:$0xff]
        %v699 = vld [vmem:[#allocation2 + $0x90] sm:$0xff]
        %v700 = vld [vmem:[#allocation2 + $0x98] sm:$0xff]
        %v701 = vld [vmem:[#allocation2 + $0xa8] sm:$0xff]
        %v702 = vld [vmem:[#allocation2 + $0xb0] sm:$0xff]
        %v703 = vld [vmem:[#allocation2 + $0xc0] sm:$0xff]
        %v704 = vld [vmem:[#allocation2 + $0xc8] sm:$0xff]
        %v705 = vld [vmem:[#allocation2 + $0xd8] sm:$0xff]
        %v706 = vld [vmem:[#allocation2 + $0xe0] sm:$0xff]
        %v707 = vld [vmem:[#allocation2 + $0xf0] sm:$0xff]
        %v708 = vld [vmem:[#allocation2 + $0xf8] sm:$0xff]
        %v709 = vld [vmem:[#allocation2 + $0x108] sm:$0xff]
        %v710 = vld [vmem:[#allocation2 + $0x110] sm:$0xff]
        %v711 = vld [vmem:[#allocation2 + $0x120] sm:$0xff]
        %v712 = vld [vmem:[#allocation2 + $0x128] sm:$0xff]
        %v713 = vld [vmem:[#allocation2 + $0x138] sm:$0xff]
        %v714 = vld [vmem:[#allocation2 + $0x140] sm:$0xff]
        %v715 = vld [vmem:[#allocation2 + $0x150] sm:$0xff]
        %v716 = vld [vmem:[#allocation2 + $0x158] sm:$0xff]
        %v717 = vld [vmem:[#allocation2 + $0x168] sm:$0xff]
        %v718 = vld [vmem:[#allocation2 + $0x170] sm:$0xff]
        %v719 = vld [vmem:[%s3] sm:$0xff]
        %v720 = vld [vmem:[%s3 + $0x8] sm:$0xff]
        %v721 = vld [vmem:[%s3 + $0x10] sm:$0xff]
        %v722 = vld [vmem:[%s3 + $0x18] sm:$0xff]
        %v723 = vld [vmem:[%s3 + $0x20] sm:$0xff]
        %v724 = vld [vmem:[%s3 + $0x28] sm:$0xff]
        %v725 = vld [vmem:[%s3 + $0x30] sm:$0xff]
        %v726 = vld [vmem:[%s3 + $0x38] sm:$0xff]
        %v727 = vld [vmem:[%s3 + $0x40] sm:$0xff]
        %v728 = vld [vmem:[%s3 + $0x48] sm:$0xff]
        %v729 = vld [vmem:[%s3 + $0x50] sm:$0xff]
        %v730 = vld [vmem:[%s3 + $0x58] sm:$0xff]
        %v731 = vld [vmem:[%s3 + $0x60] sm:$0xff]
        %v732 = vld [vmem:[%s3 + $0x68] sm:$0xff]
        %v733 = vld [vmem:[%s3 + $0x70] sm:$0xff]
        %v734 = vld [vmem:[%s3 + $0x78] sm:$0xff]
        %v735 = vld [vmem:[#allocation2 + $0x1] sm:$0xff]
        %v736 = vld [vmem:[#allocation2 + $0x9] sm:$0xff]
        %v737 = vld [vmem:[#allocation2 + $0x19] sm:$0xff]
        %v738 = vld [vmem:[#allocation2 + $0x21] sm:$0xff]
        %v739 = vld [vmem:[#allocation2 + $0x31] sm:$0xff]
        %v740 = vld [vmem:[#allocation2 + $0x39] sm:$0xff]
        %v741 = vld [vmem:[#allocation2 + $0x49] sm:$0xff]
        %v742 = vld [vmem:[#allocation2 + $0x51] sm:$0xff]
        %v743 = vld [vmem:[#allocation2 + $0x61] sm:$0xff]
        %v744 = vld [vmem:[#allocation2 + $0x69] sm:$0xff]
        %v745 = vld [vmem:[#allocation2 + $0x79] sm:$0xff]
        %v746 = vld [vmem:[#allocation2 + $0x81] sm:$0xff]
        %v747 = vld [vmem:[#allocation2 + $0x91] sm:$0xff]
        %v748 = vld [vmem:[#allocation2 + $0x99] sm:$0xff]
        %v749 = vld [vmem:[#allocation2 + $0xa9] sm:$0xff]
        %v750 = vld [vmem:[#allocation2 + $0xb1] sm:$0xff]
        %v751 = vld [vmem:[#allocation2 + $0xc1] sm:$0xff]
        %v752 = vld [vmem:[#allocation2 + $0xc9] sm:$0xff]
        %v753 = vld [vmem:[#allocation2 + $0xd9] sm:$0xff]
        %v754 = vld [vmem:[#allocation2 + $0xe1] sm:$0xff]
        %v755 = vld [vmem:[#allocation2 + $0xf1] sm:$0xff]
        %v756 = vld [vmem:[#allocation2 + $0xf9] sm:$0xff]
        %v757 = vld [vmem:[#allocation2 + $0x109] sm:$0xff]
        %v758 = vld [vmem:[#allocation2 + $0x111] sm:$0xff]
        %v759 = vld [vmem:[#allocation2 + $0x121] sm:$0xff]
        %v760 = vld [vmem:[#allocation2 + $0x129] sm:$0xff]
        %v761 = vld [vmem:[#allocation2 + $0x139] sm:$0xff]
        %v762 = vld [vmem:[#allocation2 + $0x141] sm:$0xff]
        %v763 = vld [vmem:[#allocation2 + $0x151] sm:$0xff]
        %v764 = vld [vmem:[#allocation2 + $0x159] sm:$0xff]
        %v765 = vld [vmem:[#allocation2 + $0x169] sm:$0xff]
        %v766 = vld [vmem:[#allocation2 + $0x171] sm:$0xff]
        %s767 = scalar_lea.vmem %s3, 128
        %v768 = vld [vmem:[%s767] sm:$0xff]
        %v769 = vld [vmem:[%s767 + $0x8] sm:$0xff]
        %v770 = vld [vmem:[%s767 + $0x10] sm:$0xff]
        %v771 = vld [vmem:[%s767 + $0x18] sm:$0xff]
        %v772 = vld [vmem:[%s767 + $0x20] sm:$0xff]
        %v773 = vld [vmem:[%s767 + $0x28] sm:$0xff]
        %v774 = vld [vmem:[%s767 + $0x30] sm:$0xff]
        %v775 = vld [vmem:[%s767 + $0x38] sm:$0xff]
        %v776 = vld [vmem:[%s767 + $0x40] sm:$0xff]
        %v777 = vld [vmem:[%s767 + $0x48] sm:$0xff]
        %v778 = vld [vmem:[%s767 + $0x50] sm:$0xff]
        %v779 = vld [vmem:[%s767 + $0x58] sm:$0xff]
        %v780 = vld [vmem:[%s767 + $0x60] sm:$0xff]
        %v781 = vld [vmem:[%s767 + $0x68] sm:$0xff]
        %v782 = vld [vmem:[%s767 + $0x70] sm:$0xff]
        %v783 = vld [vmem:[%s767 + $0x78] sm:$0xff]
        %784 = vmatprep.subr.mxu0 0.0
        %785 = vmatpush1.msra.mxu0 %v783
        %786 = vmatprep.subr.mxu0 0.0
        %787 = vmatpush1.msra.mxu0 %v782
        %788 = vmatprep.subr.mxu0 0.0
        %789 = vmatpush1.msra.mxu0 %v781
        %790 = vmatprep.subr.mxu0 0.0
        %791 = vmatpush1.msra.mxu0 %v780
        %792 = vmatprep.subr.mxu0 0.0
        %793 = vmatpush1.msra.mxu0 %v779
        %794 = vmatprep.subr.mxu0 0.0
        %795 = vmatpush1.msra.mxu0 %v778
        %796 = vmatprep.subr.mxu0 0.0
        %797 = vmatpush1.msra.mxu0 %v777
        %798 = vmatprep.subr.mxu0 0.0
        %799 = vmatpush1.msra.mxu0 %v776
        %800 = vmatprep.subr.mxu0 0.0
        %801 = vmatpush1.msra.mxu0 %v775
        %802 = vmatprep.subr.mxu0 0.0
        %803 = vmatpush1.msra.mxu0 %v774
        %804 = vmatprep.subr.mxu0 0.0
        %805 = vmatpush1.msra.mxu0 %v773
        %806 = vmatprep.subr.mxu0 0.0
        %807 = vmatpush1.msra.mxu0 %v772
        %808 = vmatprep.subr.mxu0 0.0
        %809 = vmatpush1.msra.mxu0 %v771
        %810 = vmatprep.subr.mxu0 0.0
        %811 = vmatpush1.msra.mxu0 %v770
        %812 = vmatprep.subr.mxu0 0.0
        %813 = vmatpush1.msra.mxu0 %v769
        %814 = vmatprep.subr.mxu0 0.0
        %815 = vmatpush1.msra.mxu0 %v768
        %816 = vmatprep.subr.mxu0 0.0
        %817 = vmatpush2.msra.mxu0 0.0
        %818 = vmatprep.subr.mxu0 0.0
        %819 = vmatpush2.msra.mxu0 0.0
        %820 = vmatprep.subr.mxu0 0.0
        %821 = vmatpush2.msra.mxu0 0.0
        %822 = vmatprep.subr.mxu0 0.0
        %823 = vmatpush2.msra.mxu0 0.0
        %824 = vmatprep.subr.mxu0 0.0
        %825 = vmatpush2.msra.mxu0 0.0
        %826 = vmatprep.subr.mxu0 0.0
        %827 = vmatpush2.msra.mxu0 0.0
        %828 = vmatprep.subr.mxu0 0.0
        %829 = vmatpush2.msra.mxu0 0.0
        %830 = vmatprep.subr.mxu0 0.0
        %831 = vmatpush2.msra.mxu0 0.0
        %832 = vmatprep.subr.mxu0 0.0
        %833 = vmatpush2.msra.mxu0 0.0
        %834 = vmatprep.subr.mxu0 0.0
        %835 = vmatpush2.msra.mxu0 0.0
        %836 = vmatprep.subr.mxu0 0.0
        %837 = vmatpush2.msra.mxu0 0.0
        %838 = vmatprep.subr.mxu0 0.0
        %839 = vmatpush2.msra.mxu0 0.0
        %840 = vmatprep.subr.mxu0 0.0
        %841 = vmatpush2.msra.mxu0 0.0
        %842 = vmatprep.subr.mxu0 0.0
        %843 = vmatpush2.msra.mxu0 0.0
        %844 = vmatprep.subr.mxu0 0.0
        %845 = vmatpush2.msra.mxu0 0.0
        %846 = vmatprep.subr.mxu0 0.0
        %847 = vmatpush2.msra.mxu0 0.0
        %848 = vmatprep.mubr.f32.mxu0 0.0
        %849 = vmatmul.mubr.f32.gmra.mxu0 %v735
        %v850 = vpop.f32.mrf.mxu0
        %v851 = vadd.f32 0.0, %v850
        %v852 = vpop.f32.mrf.mxu0
        %853 = vmatprep.mubr.f32.mxu0 0.0
        %854 = vmatmul.mubr.f32.gmra.mxu0 %v736
        %v855 = vpop.f32.mrf.mxu0
        %v856 = vadd.f32 0.0, %v855
        %v857 = vpop.f32.mrf.mxu0
        %858 = vmatprep.mubr.f32.mxu0 0.0
        %859 = vmatmul.mubr.f32.gmra.mxu0 %v737
        %v860 = vpop.f32.mrf.mxu0
        %v861 = vadd.f32 0.0, %v860
        %v862 = vpop.f32.mrf.mxu0
        %863 = vmatprep.mubr.f32.mxu0 0.0
        %864 = vmatmul.mubr.f32.gmra.mxu0 %v738
        %v865 = vpop.f32.mrf.mxu0
        %v866 = vadd.f32 0.0, %v865
        %v867 = vpop.f32.mrf.mxu0
        %868 = vmatprep.mubr.f32.mxu0 0.0
        %869 = vmatmul.mubr.f32.gmra.mxu0 %v739
        %v870 = vpop.f32.mrf.mxu0
        %v871 = vadd.f32 0.0, %v870
        %v872 = vpop.f32.mrf.mxu0
        %873 = vmatprep.mubr.f32.mxu0 0.0
        %874 = vmatmul.mubr.f32.gmra.mxu0 %v740
        %v875 = vpop.f32.mrf.mxu0
        %v876 = vadd.f32 0.0, %v875
        %v877 = vpop.f32.mrf.mxu0
        %878 = vmatprep.mubr.f32.mxu0 0.0
        %879 = vmatmul.mubr.f32.gmra.mxu0 %v741
        %v880 = vpop.f32.mrf.mxu0
        %v881 = vadd.f32 0.0, %v880
        %v882 = vpop.f32.mrf.mxu0
        %883 = vmatprep.mubr.f32.mxu0 0.0
        %884 = vmatmul.mubr.f32.gmra.mxu0 %v742
        %v885 = vpop.f32.mrf.mxu0
        %v886 = vadd.f32 0.0, %v885
        %v887 = vpop.f32.mrf.mxu0
        %888 = vmatprep.mubr.f32.mxu0 0.0
        %889 = vmatmul.mubr.f32.gmra.mxu0 %v743
        %v890 = vpop.f32.mrf.mxu0
        %v891 = vadd.f32 0.0, %v890
        %v892 = vpop.f32.mrf.mxu0
        %893 = vmatprep.mubr.f32.mxu0 0.0
        %894 = vmatmul.mubr.f32.gmra.mxu0 %v744
        %v895 = vpop.f32.mrf.mxu0
        %v896 = vadd.f32 0.0, %v895
        %v897 = vpop.f32.mrf.mxu0
        %898 = vmatprep.mubr.f32.mxu0 0.0
        %899 = vmatmul.mubr.f32.gmra.mxu0 %v745
        %v900 = vpop.f32.mrf.mxu0
        %v901 = vadd.f32 0.0, %v900
        %v902 = vpop.f32.mrf.mxu0
        %903 = vmatprep.mubr.f32.mxu0 0.0
        %904 = vmatmul.mubr.f32.gmra.mxu0 %v746
        %v905 = vpop.f32.mrf.mxu0
        %v906 = vadd.f32 0.0, %v905
        %v907 = vpop.f32.mrf.mxu0
        %908 = vmatprep.mubr.f32.mxu0 0.0
        %909 = vmatmul.mubr.f32.gmra.mxu0 %v747
        %v910 = vpop.f32.mrf.mxu0
        %v911 = vadd.f32 0.0, %v910
        %v912 = vpop.f32.mrf.mxu0
        %913 = vmatprep.mubr.f32.mxu0 0.0
        %914 = vmatmul.mubr.f32.gmra.mxu0 %v748
        %v915 = vpop.f32.mrf.mxu0
        %v916 = vadd.f32 0.0, %v915
        %v917 = vpop.f32.mrf.mxu0
        %918 = vmatprep.mubr.f32.mxu0 0.0
        %919 = vmatmul.mubr.f32.gmra.mxu0 %v749
        %v920 = vpop.f32.mrf.mxu0
        %v921 = vadd.f32 0.0, %v920
        %v922 = vpop.f32.mrf.mxu0
        %923 = vmatprep.mubr.f32.mxu0 0.0
        %924 = vmatmul.mubr.f32.gmra.mxu0 %v750
        %v925 = vpop.f32.mrf.mxu0
        %v926 = vadd.f32 0.0, %v925
        %v927 = vpop.f32.mrf.mxu0
        %928 = vmatprep.mubr.f32.mxu0 0.0
        %929 = vmatmul.mubr.f32.gmra.mxu0 %v751
        %v930 = vpop.f32.mrf.mxu0
        %v931 = vadd.f32 0.0, %v930
        %v932 = vpop.f32.mrf.mxu0
        %933 = vmatprep.mubr.f32.mxu0 0.0
        %934 = vmatmul.mubr.f32.gmra.mxu0 %v752
        %v935 = vpop.f32.mrf.mxu0
        %v936 = vadd.f32 0.0, %v935
        %v937 = vpop.f32.mrf.mxu0
        %938 = vmatprep.mubr.f32.mxu0 0.0
        %939 = vmatmul.mubr.f32.gmra.mxu0 %v753
        %v940 = vpop.f32.mrf.mxu0
        %v941 = vadd.f32 0.0, %v940
        %v942 = vpop.f32.mrf.mxu0
        %943 = vmatprep.mubr.f32.mxu0 0.0
        %944 = vmatmul.mubr.f32.gmra.mxu0 %v754
        %v945 = vpop.f32.mrf.mxu0
        %v946 = vadd.f32 0.0, %v945
        %v947 = vpop.f32.mrf.mxu0
        %948 = vmatprep.mubr.f32.mxu0 0.0
        %949 = vmatmul.mubr.f32.gmra.mxu0 %v755
        %v950 = vpop.f32.mrf.mxu0
        %v951 = vadd.f32 0.0, %v950
        %v952 = vpop.f32.mrf.mxu0
        %953 = vmatprep.mubr.f32.mxu0 0.0
        %954 = vmatmul.mubr.f32.gmra.mxu0 %v756
        %v955 = vpop.f32.mrf.mxu0
        %v956 = vadd.f32 0.0, %v955
        %v957 = vpop.f32.mrf.mxu0
        %958 = vmatprep.mubr.f32.mxu0 0.0
        %959 = vmatmul.mubr.f32.gmra.mxu0 %v757
        %v960 = vpop.f32.mrf.mxu0
        %v961 = vadd.f32 0.0, %v960
        %v962 = vpop.f32.mrf.mxu0
        %963 = vmatprep.mubr.f32.mxu0 0.0
        %964 = vmatmul.mubr.f32.gmra.mxu0 %v758
        %v965 = vpop.f32.mrf.mxu0
        %v966 = vadd.f32 0.0, %v965
        %v967 = vpop.f32.mrf.mxu0
        %968 = vmatprep.mubr.f32.mxu0 0.0
        %969 = vmatmul.mubr.f32.gmra.mxu0 %v759
        %v970 = vpop.f32.mrf.mxu0
        %v971 = vadd.f32 0.0, %v970
        %v972 = vpop.f32.mrf.mxu0
        %973 = vmatprep.mubr.f32.mxu0 0.0
        %974 = vmatmul.mubr.f32.gmra.mxu0 %v760
        %v975 = vpop.f32.mrf.mxu0
        %v976 = vadd.f32 0.0, %v975
        %v977 = vpop.f32.mrf.mxu0
        %978 = vmatprep.mubr.f32.mxu0 0.0
        %979 = vmatmul.mubr.f32.gmra.mxu0 %v761
        %v980 = vpop.f32.mrf.mxu0
        %v981 = vadd.f32 0.0, %v980
        %v982 = vpop.f32.mrf.mxu0
        %983 = vmatprep.mubr.f32.mxu0 0.0
        %984 = vmatmul.mubr.f32.gmra.mxu0 %v762
        %v985 = vpop.f32.mrf.mxu0
        %v986 = vadd.f32 0.0, %v985
        %v987 = vpop.f32.mrf.mxu0
        %988 = vmatprep.mubr.f32.mxu0 0.0
        %989 = vmatmul.mubr.f32.gmra.mxu0 %v763
        %v990 = vpop.f32.mrf.mxu0
        %v991 = vadd.f32 0.0, %v990
        %v992 = vpop.f32.mrf.mxu0
        %993 = vmatprep.mubr.f32.mxu0 0.0
        %994 = vmatmul.mubr.f32.gmra.mxu0 %v764
        %v995 = vpop.f32.mrf.mxu0
        %v996 = vadd.f32 0.0, %v995
        %v997 = vpop.f32.mrf.mxu0
        %998 = vmatprep.mubr.f32.mxu0 0.0
        %999 = vmatmul.mubr.f32.gmra.mxu0 %v765
        %v1000 = vpop.f32.mrf.mxu0
        %v1001 = vadd.f32 0.0, %v1000
        %v1002 = vpop.f32.mrf.mxu0
        %1003 = vmatprep.mubr.f32.mxu0 0.0
        %1004 = vmatmul.mubr.f32.gmra.mxu0 %v766
        %v1005 = vpop.f32.mrf.mxu0
        %v1006 = vadd.f32 0.0, %v1005
        %v1007 = vpop.f32.mrf.mxu0
        %1008 = vdwg.mxu0
        %1009 = vmatprep.subr.mxu0 0.0
        %1010 = vmatpush1.msra.mxu0 %v734
        %1011 = vmatprep.subr.mxu0 0.0
        %1012 = vmatpush1.msra.mxu0 %v733
        %1013 = vmatprep.subr.mxu0 0.0
        %1014 = vmatpush1.msra.mxu0 %v732
        %1015 = vmatprep.subr.mxu0 0.0
        %1016 = vmatpush1.msra.mxu0 %v731
        %1017 = vmatprep.subr.mxu0 0.0
        %1018 = vmatpush1.msra.mxu0 %v730
        %1019 = vmatprep.subr.mxu0 0.0
        %1020 = vmatpush1.msra.mxu0 %v729
        %1021 = vmatprep.subr.mxu0 0.0
        %1022 = vmatpush1.msra.mxu0 %v728
        %1023 = vmatprep.subr.mxu0 0.0
        %1024 = vmatpush1.msra.mxu0 %v727
        %1025 = vmatprep.subr.mxu0 0.0
        %1026 = vmatpush1.msra.mxu0 %v726
        %1027 = vmatprep.subr.mxu0 0.0
        %1028 = vmatpush1.msra.mxu0 %v725
        %1029 = vmatprep.subr.mxu0 0.0
        %1030 = vmatpush1.msra.mxu0 %v724
        %1031 = vmatprep.subr.mxu0 0.0
        %1032 = vmatpush1.msra.mxu0 %v723
        %1033 = vmatprep.subr.mxu0 0.0
        %1034 = vmatpush1.msra.mxu0 %v722
        %1035 = vmatprep.subr.mxu0 0.0
        %1036 = vmatpush1.msra.mxu0 %v721
        %1037 = vmatprep.subr.mxu0 0.0
        %1038 = vmatpush1.msra.mxu0 %v720
        %1039 = vmatprep.subr.mxu0 0.0
        %1040 = vmatpush1.msra.mxu0 %v719
        %1041 = vmatprep.subr.mxu0 0.0
        %1042 = vmatpush2.msra.mxu0 0.0
        %1043 = vmatprep.subr.mxu0 0.0
        %1044 = vmatpush2.msra.mxu0 0.0
        %1045 = vmatprep.subr.mxu0 0.0
        %1046 = vmatpush2.msra.mxu0 0.0
        %1047 = vmatprep.subr.mxu0 0.0
        %1048 = vmatpush2.msra.mxu0 0.0
        %1049 = vmatprep.subr.mxu0 0.0
        %1050 = vmatpush2.msra.mxu0 0.0
        %1051 = vmatprep.subr.mxu0 0.0
        %1052 = vmatpush2.msra.mxu0 0.0
        %1053 = vmatprep.subr.mxu0 0.0
        %1054 = vmatpush2.msra.mxu0 0.0
        %1055 = vmatprep.subr.mxu0 0.0
        %1056 = vmatpush2.msra.mxu0 0.0
        %1057 = vmatprep.subr.mxu0 0.0
        %1058 = vmatpush2.msra.mxu0 0.0
        %1059 = vmatprep.subr.mxu0 0.0
        %1060 = vmatpush2.msra.mxu0 0.0
        %1061 = vmatprep.subr.mxu0 0.0
        %1062 = vmatpush2.msra.mxu0 0.0
        %1063 = vmatprep.subr.mxu0 0.0
        %1064 = vmatpush2.msra.mxu0 0.0
        %1065 = vmatprep.subr.mxu0 0.0
        %1066 = vmatpush2.msra.mxu0 0.0
        %1067 = vmatprep.subr.mxu0 0.0
        %1068 = vmatpush2.msra.mxu0 0.0
        %1069 = vmatprep.subr.mxu0 0.0
        %1070 = vmatpush2.msra.mxu0 0.0
        %1071 = vmatprep.subr.mxu0 0.0
        %1072 = vmatpush2.msra.mxu0 0.0
        %1073 = vmatprep.mubr.f32.mxu0 0.0
        %1074 = vmatmul.mubr.f32.gmra.mxu0 %v687
        %v1075 = vpop.f32.mrf.mxu0
        %v1076 = vadd.f32 %v851, %v1075
        %v1077 = vpop.f32.mrf.mxu0
        %1078 = vmatprep.mubr.f32.mxu0 0.0
        %1079 = vmatmul.mubr.f32.gmra.mxu0 %v688
        %v1080 = vpop.f32.mrf.mxu0
        %v1081 = vadd.f32 %v856, %v1080
        %v1082 = vpop.f32.mrf.mxu0
        %1083 = vmatprep.mubr.f32.mxu0 0.0
        %1084 = vmatmul.mubr.f32.gmra.mxu0 %v689
        %v1085 = vpop.f32.mrf.mxu0
        %v1086 = vadd.f32 %v861, %v1085
        %v1087 = vpop.f32.mrf.mxu0
        %1088 = vmatprep.mubr.f32.mxu0 0.0
        %1089 = vmatmul.mubr.f32.gmra.mxu0 %v690
        %v1090 = vpop.f32.mrf.mxu0
        %v1091 = vadd.f32 %v866, %v1090
        %v1092 = vpop.f32.mrf.mxu0
        %1093 = vmatprep.mubr.f32.mxu0 0.0
        %1094 = vmatmul.mubr.f32.gmra.mxu0 %v691
        %v1095 = vpop.f32.mrf.mxu0
        %v1096 = vadd.f32 %v871, %v1095
        %v1097 = vpop.f32.mrf.mxu0
        %1098 = vmatprep.mubr.f32.mxu0 0.0
        %1099 = vmatmul.mubr.f32.gmra.mxu0 %v692
        %v1100 = vpop.f32.mrf.mxu0
        %v1101 = vadd.f32 %v876, %v1100
        %v1102 = vpop.f32.mrf.mxu0
        %1103 = vmatprep.mubr.f32.mxu0 0.0
        %1104 = vmatmul.mubr.f32.gmra.mxu0 %v693
        %v1105 = vpop.f32.mrf.mxu0
        %v1106 = vadd.f32 %v881, %v1105
        %v1107 = vpop.f32.mrf.mxu0
        %1108 = vmatprep.mubr.f32.mxu0 0.0
        %1109 = vmatmul.mubr.f32.gmra.mxu0 %v694
        %v1110 = vpop.f32.mrf.mxu0
        %v1111 = vadd.f32 %v886, %v1110
        %v1112 = vpop.f32.mrf.mxu0
        %1113 = vmatprep.mubr.f32.mxu0 0.0
        %1114 = vmatmul.mubr.f32.gmra.mxu0 %v695
        %v1115 = vpop.f32.mrf.mxu0
        %v1116 = vadd.f32 %v891, %v1115
        %v1117 = vpop.f32.mrf.mxu0
        %1118 = vmatprep.mubr.f32.mxu0 0.0
        %1119 = vmatmul.mubr.f32.gmra.mxu0 %v696
        %v1120 = vpop.f32.mrf.mxu0
        %v1121 = vadd.f32 %v896, %v1120
        %v1122 = vpop.f32.mrf.mxu0
        %1123 = vmatprep.mubr.f32.mxu0 0.0
        %1124 = vmatmul.mubr.f32.gmra.mxu0 %v697
        %v1125 = vpop.f32.mrf.mxu0
        %v1126 = vadd.f32 %v901, %v1125
        %v1127 = vpop.f32.mrf.mxu0
        %1128 = vmatprep.mubr.f32.mxu0 0.0
        %1129 = vmatmul.mubr.f32.gmra.mxu0 %v698
        %v1130 = vpop.f32.mrf.mxu0
        %v1131 = vadd.f32 %v906, %v1130
        %v1132 = vpop.f32.mrf.mxu0
        %1133 = vmatprep.mubr.f32.mxu0 0.0
        %1134 = vmatmul.mubr.f32.gmra.mxu0 %v699
        %v1135 = vpop.f32.mrf.mxu0
        %v1136 = vadd.f32 %v911, %v1135
        %v1137 = vpop.f32.mrf.mxu0
        %1138 = vmatprep.mubr.f32.mxu0 0.0
        %1139 = vmatmul.mubr.f32.gmra.mxu0 %v700
        %v1140 = vpop.f32.mrf.mxu0
        %v1141 = vadd.f32 %v916, %v1140
        %v1142 = vpop.f32.mrf.mxu0
        %1143 = vmatprep.mubr.f32.mxu0 0.0
        %1144 = vmatmul.mubr.f32.gmra.mxu0 %v701
        %v1145 = vpop.f32.mrf.mxu0
        %v1146 = vadd.f32 %v921, %v1145
        %v1147 = vpop.f32.mrf.mxu0
        %1148 = vmatprep.mubr.f32.mxu0 0.0
        %1149 = vmatmul.mubr.f32.gmra.mxu0 %v702
        %v1150 = vpop.f32.mrf.mxu0
        %v1151 = vadd.f32 %v926, %v1150
        %v1152 = vpop.f32.mrf.mxu0
        %1153 = vmatprep.mubr.f32.mxu0 0.0
        %1154 = vmatmul.mubr.f32.gmra.mxu0 %v703
        %v1155 = vpop.f32.mrf.mxu0
        %v1156 = vadd.f32 %v931, %v1155
        %v1157 = vpop.f32.mrf.mxu0
        %1158 = vmatprep.mubr.f32.mxu0 0.0
        %1159 = vmatmul.mubr.f32.gmra.mxu0 %v704
        %v1160 = vpop.f32.mrf.mxu0
        %v1161 = vadd.f32 %v936, %v1160
        %v1162 = vpop.f32.mrf.mxu0
        %1163 = vmatprep.mubr.f32.mxu0 0.0
        %1164 = vmatmul.mubr.f32.gmra.mxu0 %v705
        %v1165 = vpop.f32.mrf.mxu0
        %v1166 = vadd.f32 %v941, %v1165
        %v1167 = vpop.f32.mrf.mxu0
        %1168 = vmatprep.mubr.f32.mxu0 0.0
        %1169 = vmatmul.mubr.f32.gmra.mxu0 %v706
        %v1170 = vpop.f32.mrf.mxu0
        %v1171 = vadd.f32 %v946, %v1170
        %v1172 = vpop.f32.mrf.mxu0
        %1173 = vmatprep.mubr.f32.mxu0 0.0
        %1174 = vmatmul.mubr.f32.gmra.mxu0 %v707
        %v1175 = vpop.f32.mrf.mxu0
        %v1176 = vadd.f32 %v951, %v1175
        %v1177 = vpop.f32.mrf.mxu0
        %1178 = vmatprep.mubr.f32.mxu0 0.0
        %1179 = vmatmul.mubr.f32.gmra.mxu0 %v708
        %v1180 = vpop.f32.mrf.mxu0
        %v1181 = vadd.f32 %v956, %v1180
        %v1182 = vpop.f32.mrf.mxu0
        %1183 = vmatprep.mubr.f32.mxu0 0.0
        %1184 = vmatmul.mubr.f32.gmra.mxu0 %v709
        %v1185 = vpop.f32.mrf.mxu0
        %v1186 = vadd.f32 %v961, %v1185
        %v1187 = vpop.f32.mrf.mxu0
        %1188 = vmatprep.mubr.f32.mxu0 0.0
        %1189 = vmatmul.mubr.f32.gmra.mxu0 %v710
        %v1190 = vpop.f32.mrf.mxu0
        %v1191 = vadd.f32 %v966, %v1190
        %v1192 = vpop.f32.mrf.mxu0
        %1193 = vmatprep.mubr.f32.mxu0 0.0
        %1194 = vmatmul.mubr.f32.gmra.mxu0 %v711
        %v1195 = vpop.f32.mrf.mxu0
        %v1196 = vadd.f32 %v971, %v1195
        %v1197 = vpop.f32.mrf.mxu0
        %1198 = vmatprep.mubr.f32.mxu0 0.0
        %1199 = vmatmul.mubr.f32.gmra.mxu0 %v712
        %v1200 = vpop.f32.mrf.mxu0
        %v1201 = vadd.f32 %v976, %v1200
        %v1202 = vpop.f32.mrf.mxu0
        %1203 = vmatprep.mubr.f32.mxu0 0.0
        %1204 = vmatmul.mubr.f32.gmra.mxu0 %v713
        %v1205 = vpop.f32.mrf.mxu0
        %v1206 = vadd.f32 %v981, %v1205
        %v1207 = vpop.f32.mrf.mxu0
        %1208 = vmatprep.mubr.f32.mxu0 0.0
        %1209 = vmatmul.mubr.f32.gmra.mxu0 %v714
        %v1210 = vpop.f32.mrf.mxu0
        %v1211 = vadd.f32 %v986, %v1210
        %v1212 = vpop.f32.mrf.mxu0
        %1213 = vmatprep.mubr.f32.mxu0 0.0
        %1214 = vmatmul.mubr.f32.gmra.mxu0 %v715
        %v1215 = vpop.f32.mrf.mxu0
        %v1216 = vadd.f32 %v991, %v1215
        %v1217 = vpop.f32.mrf.mxu0
        %1218 = vmatprep.mubr.f32.mxu0 0.0
        %1219 = vmatmul.mubr.f32.gmra.mxu0 %v716
        %v1220 = vpop.f32.mrf.mxu0
        %v1221 = vadd.f32 %v996, %v1220
        %v1222 = vpop.f32.mrf.mxu0
        %1223 = vmatprep.mubr.f32.mxu0 0.0
        %1224 = vmatmul.mubr.f32.gmra.mxu0 %v717
        %v1225 = vpop.f32.mrf.mxu0
        %v1226 = vadd.f32 %v1001, %v1225
        %v1227 = vpop.f32.mrf.mxu0
        %1228 = vmatprep.mubr.f32.mxu0 0.0
        %1229 = vmatmul.mubr.f32.gmra.mxu0 %v718
        %v1230 = vpop.f32.mrf.mxu0
        %v1231 = vadd.f32 %v1006, %v1230
        %v1232 = vpop.f32.mrf.mxu0
        %1233 = vdwg.mxu0
        %v1234 = vld [vmem:[#allocation2 + $0x2] sm:$0xff]
        %v1235 = vld [vmem:[#allocation2 + $0xa] sm:$0xff]
        %v1236 = vld [vmem:[#allocation2 + $0x1a] sm:$0xff]
        %v1237 = vld [vmem:[#allocation2 + $0x22] sm:$0xff]
        %v1238 = vld [vmem:[#allocation2 + $0x32] sm:$0xff]
        %v1239 = vld [vmem:[#allocation2 + $0x3a] sm:$0xff]
        %v1240 = vld [vmem:[#allocation2 + $0x4a] sm:$0xff]
        %v1241 = vld [vmem:[#allocation2 + $0x52] sm:$0xff]
        %v1242 = vld [vmem:[#allocation2 + $0x62] sm:$0xff]
        %v1243 = vld [vmem:[#allocation2 + $0x6a] sm:$0xff]
        %v1244 = vld [vmem:[#allocation2 + $0x7a] sm:$0xff]
        %v1245 = vld [vmem:[#allocation2 + $0x82] sm:$0xff]
        %v1246 = vld [vmem:[#allocation2 + $0x92] sm:$0xff]
        %v1247 = vld [vmem:[#allocation2 + $0x9a] sm:$0xff]
        %v1248 = vld [vmem:[#allocation2 + $0xaa] sm:$0xff]
        %v1249 = vld [vmem:[#allocation2 + $0xb2] sm:$0xff]
        %v1250 = vld [vmem:[#allocation2 + $0xc2] sm:$0xff]
        %v1251 = vld [vmem:[#allocation2 + $0xca] sm:$0xff]
        %v1252 = vld [vmem:[#allocation2 + $0xda] sm:$0xff]
        %v1253 = vld [vmem:[#allocation2 + $0xe2] sm:$0xff]
        %v1254 = vld [vmem:[#allocation2 + $0xf2] sm:$0xff]
        %v1255 = vld [vmem:[#allocation2 + $0xfa] sm:$0xff]
        %v1256 = vld [vmem:[#allocation2 + $0x10a] sm:$0xff]
        %v1257 = vld [vmem:[#allocation2 + $0x112] sm:$0xff]
        %v1258 = vld [vmem:[#allocation2 + $0x122] sm:$0xff]
        %v1259 = vld [vmem:[#allocation2 + $0x12a] sm:$0xff]
        %v1260 = vld [vmem:[#allocation2 + $0x13a] sm:$0xff]
        %v1261 = vld [vmem:[#allocation2 + $0x142] sm:$0xff]
        %v1262 = vld [vmem:[#allocation2 + $0x152] sm:$0xff]
        %v1263 = vld [vmem:[#allocation2 + $0x15a] sm:$0xff]
        %v1264 = vld [vmem:[#allocation2 + $0x16a] sm:$0xff]
        %v1265 = vld [vmem:[#allocation2 + $0x172] sm:$0xff]
        %s1266 = scalar_lea.vmem %s3, 256
        %v1267 = vld [vmem:[%s1266] sm:$0xff]
        %v1268 = vld [vmem:[%s1266 + $0x8] sm:$0xff]
        %v1269 = vld [vmem:[%s1266 + $0x10] sm:$0xff]
        %v1270 = vld [vmem:[%s1266 + $0x18] sm:$0xff]
        %v1271 = vld [vmem:[%s1266 + $0x20] sm:$0xff]
        %v1272 = vld [vmem:[%s1266 + $0x28] sm:$0xff]
        %v1273 = vld [vmem:[%s1266 + $0x30] sm:$0xff]
        %v1274 = vld [vmem:[%s1266 + $0x38] sm:$0xff]
        %v1275 = vld [vmem:[%s1266 + $0x40] sm:$0xff]
        %v1276 = vld [vmem:[%s1266 + $0x48] sm:$0xff]
        %v1277 = vld [vmem:[%s1266 + $0x50] sm:$0xff]
        %v1278 = vld [vmem:[%s1266 + $0x58] sm:$0xff]
        %v1279 = vld [vmem:[%s1266 + $0x60] sm:$0xff]
        %v1280 = vld [vmem:[%s1266 + $0x68] sm:$0xff]
        %v1281 = vld [vmem:[%s1266 + $0x70] sm:$0xff]
        %v1282 = vld [vmem:[%s1266 + $0x78] sm:$0xff]
        %1283 = vmatprep.subr.mxu0 0.0
        %1284 = vmatpush1.msra.mxu0 %v1282
        %1285 = vmatprep.subr.mxu0 0.0
        %1286 = vmatpush1.msra.mxu0 %v1281
        %1287 = vmatprep.subr.mxu0 0.0
        %1288 = vmatpush1.msra.mxu0 %v1280
        %1289 = vmatprep.subr.mxu0 0.0
        %1290 = vmatpush1.msra.mxu0 %v1279
        %1291 = vmatprep.subr.mxu0 0.0
        %1292 = vmatpush1.msra.mxu0 %v1278
        %1293 = vmatprep.subr.mxu0 0.0
        %1294 = vmatpush1.msra.mxu0 %v1277
        %1295 = vmatprep.subr.mxu0 0.0
        %1296 = vmatpush1.msra.mxu0 %v1276
        %1297 = vmatprep.subr.mxu0 0.0
        %1298 = vmatpush1.msra.mxu0 %v1275
        %1299 = vmatprep.subr.mxu0 0.0
        %1300 = vmatpush1.msra.mxu0 %v1274
        %1301 = vmatprep.subr.mxu0 0.0
        %1302 = vmatpush1.msra.mxu0 %v1273
        %1303 = vmatprep.subr.mxu0 0.0
        %1304 = vmatpush1.msra.mxu0 %v1272
        %1305 = vmatprep.subr.mxu0 0.0
        %1306 = vmatpush1.msra.mxu0 %v1271
        %1307 = vmatprep.subr.mxu0 0.0
        %1308 = vmatpush1.msra.mxu0 %v1270
        %1309 = vmatprep.subr.mxu0 0.0
        %1310 = vmatpush1.msra.mxu0 %v1269
        %1311 = vmatprep.subr.mxu0 0.0
        %1312 = vmatpush1.msra.mxu0 %v1268
        %1313 = vmatprep.subr.mxu0 0.0
        %1314 = vmatpush1.msra.mxu0 %v1267
        %1315 = vmatprep.subr.mxu0 0.0
        %1316 = vmatpush2.msra.mxu0 0.0
        %1317 = vmatprep.subr.mxu0 0.0
        %1318 = vmatpush2.msra.mxu0 0.0
        %1319 = vmatprep.subr.mxu0 0.0
        %1320 = vmatpush2.msra.mxu0 0.0
        %1321 = vmatprep.subr.mxu0 0.0
        %1322 = vmatpush2.msra.mxu0 0.0
        %1323 = vmatprep.subr.mxu0 0.0
        %1324 = vmatpush2.msra.mxu0 0.0
        %1325 = vmatprep.subr.mxu0 0.0
        %1326 = vmatpush2.msra.mxu0 0.0
        %1327 = vmatprep.subr.mxu0 0.0
        %1328 = vmatpush2.msra.mxu0 0.0
        %1329 = vmatprep.subr.mxu0 0.0
        %1330 = vmatpush2.msra.mxu0 0.0
        %1331 = vmatprep.subr.mxu0 0.0
        %1332 = vmatpush2.msra.mxu0 0.0
        %1333 = vmatprep.subr.mxu0 0.0
        %1334 = vmatpush2.msra.mxu0 0.0
        %1335 = vmatprep.subr.mxu0 0.0
        %1336 = vmatpush2.msra.mxu0 0.0
        %1337 = vmatprep.subr.mxu0 0.0
        %1338 = vmatpush2.msra.mxu0 0.0
        %1339 = vmatprep.subr.mxu0 0.0
        %1340 = vmatpush2.msra.mxu0 0.0
        %1341 = vmatprep.subr.mxu0 0.0
        %1342 = vmatpush2.msra.mxu0 0.0
        %1343 = vmatprep.subr.mxu0 0.0
        %1344 = vmatpush2.msra.mxu0 0.0
        %1345 = vmatprep.subr.mxu0 0.0
        %1346 = vmatpush2.msra.mxu0 0.0
        %1347 = vmatprep.mubr.f32.mxu0 0.0
        %1348 = vmatmul.mubr.f32.gmra.mxu0 %v1234
        %v1349 = vpop.f32.mrf.mxu0
        %v1350 = vadd.f32 0.0, %v1349
        %v1351 = vpop.f32.mrf.mxu0
        %1352 = vmatprep.mubr.f32.mxu0 0.0
        %1353 = vmatmul.mubr.f32.gmra.mxu0 %v1235
        %v1354 = vpop.f32.mrf.mxu0
        %v1355 = vadd.f32 0.0, %v1354
        %v1356 = vpop.f32.mrf.mxu0
        %1357 = vmatprep.mubr.f32.mxu0 0.0
        %1358 = vmatmul.mubr.f32.gmra.mxu0 %v1236
        %v1359 = vpop.f32.mrf.mxu0
        %v1360 = vadd.f32 0.0, %v1359
        %v1361 = vpop.f32.mrf.mxu0
        %1362 = vmatprep.mubr.f32.mxu0 0.0
        %1363 = vmatmul.mubr.f32.gmra.mxu0 %v1237
        %v1364 = vpop.f32.mrf.mxu0
        %v1365 = vadd.f32 0.0, %v1364
        %v1366 = vpop.f32.mrf.mxu0
        %1367 = vmatprep.mubr.f32.mxu0 0.0
        %1368 = vmatmul.mubr.f32.gmra.mxu0 %v1238
        %v1369 = vpop.f32.mrf.mxu0
        %v1370 = vadd.f32 0.0, %v1369
        %v1371 = vpop.f32.mrf.mxu0
        %1372 = vmatprep.mubr.f32.mxu0 0.0
        %1373 = vmatmul.mubr.f32.gmra.mxu0 %v1239
        %v1374 = vpop.f32.mrf.mxu0
        %v1375 = vadd.f32 0.0, %v1374
        %v1376 = vpop.f32.mrf.mxu0
        %1377 = vmatprep.mubr.f32.mxu0 0.0
        %1378 = vmatmul.mubr.f32.gmra.mxu0 %v1240
        %v1379 = vpop.f32.mrf.mxu0
        %v1380 = vadd.f32 0.0, %v1379
        %v1381 = vpop.f32.mrf.mxu0
        %1382 = vmatprep.mubr.f32.mxu0 0.0
        %1383 = vmatmul.mubr.f32.gmra.mxu0 %v1241
        %v1384 = vpop.f32.mrf.mxu0
        %v1385 = vadd.f32 0.0, %v1384
        %v1386 = vpop.f32.mrf.mxu0
        %1387 = vmatprep.mubr.f32.mxu0 0.0
        %1388 = vmatmul.mubr.f32.gmra.mxu0 %v1242
        %v1389 = vpop.f32.mrf.mxu0
        %v1390 = vadd.f32 0.0, %v1389
        %v1391 = vpop.f32.mrf.mxu0
        %1392 = vmatprep.mubr.f32.mxu0 0.0
        %1393 = vmatmul.mubr.f32.gmra.mxu0 %v1243
        %v1394 = vpop.f32.mrf.mxu0
        %v1395 = vadd.f32 0.0, %v1394
        %v1396 = vpop.f32.mrf.mxu0
        %1397 = vmatprep.mubr.f32.mxu0 0.0
        %1398 = vmatmul.mubr.f32.gmra.mxu0 %v1244
        %v1399 = vpop.f32.mrf.mxu0
        %v1400 = vadd.f32 0.0, %v1399
        %v1401 = vpop.f32.mrf.mxu0
        %1402 = vmatprep.mubr.f32.mxu0 0.0
        %1403 = vmatmul.mubr.f32.gmra.mxu0 %v1245
        %v1404 = vpop.f32.mrf.mxu0
        %v1405 = vadd.f32 0.0, %v1404
        %v1406 = vpop.f32.mrf.mxu0
        %1407 = vmatprep.mubr.f32.mxu0 0.0
        %1408 = vmatmul.mubr.f32.gmra.mxu0 %v1246
        %v1409 = vpop.f32.mrf.mxu0
        %v1410 = vadd.f32 0.0, %v1409
        %v1411 = vpop.f32.mrf.mxu0
        %1412 = vmatprep.mubr.f32.mxu0 0.0
        %1413 = vmatmul.mubr.f32.gmra.mxu0 %v1247
        %v1414 = vpop.f32.mrf.mxu0
        %v1415 = vadd.f32 0.0, %v1414
        %v1416 = vpop.f32.mrf.mxu0
        %1417 = vmatprep.mubr.f32.mxu0 0.0
        %1418 = vmatmul.mubr.f32.gmra.mxu0 %v1248
        %v1419 = vpop.f32.mrf.mxu0
        %v1420 = vadd.f32 0.0, %v1419
        %v1421 = vpop.f32.mrf.mxu0
        %1422 = vmatprep.mubr.f32.mxu0 0.0
        %1423 = vmatmul.mubr.f32.gmra.mxu0 %v1249
        %v1424 = vpop.f32.mrf.mxu0
        %v1425 = vadd.f32 0.0, %v1424
        %v1426 = vpop.f32.mrf.mxu0
        %1427 = vmatprep.mubr.f32.mxu0 0.0
        %1428 = vmatmul.mubr.f32.gmra.mxu0 %v1250
        %v1429 = vpop.f32.mrf.mxu0
        %v1430 = vadd.f32 0.0, %v1429
        %v1431 = vpop.f32.mrf.mxu0
        %1432 = vmatprep.mubr.f32.mxu0 0.0
        %1433 = vmatmul.mubr.f32.gmra.mxu0 %v1251
        %v1434 = vpop.f32.mrf.mxu0
        %v1435 = vadd.f32 0.0, %v1434
        %v1436 = vpop.f32.mrf.mxu0
        %1437 = vmatprep.mubr.f32.mxu0 0.0
        %1438 = vmatmul.mubr.f32.gmra.mxu0 %v1252
        %v1439 = vpop.f32.mrf.mxu0
        %v1440 = vadd.f32 0.0, %v1439
        %v1441 = vpop.f32.mrf.mxu0
        %1442 = vmatprep.mubr.f32.mxu0 0.0
        %1443 = vmatmul.mubr.f32.gmra.mxu0 %v1253
        %v1444 = vpop.f32.mrf.mxu0
        %v1445 = vadd.f32 0.0, %v1444
        %v1446 = vpop.f32.mrf.mxu0
        %1447 = vmatprep.mubr.f32.mxu0 0.0
        %1448 = vmatmul.mubr.f32.gmra.mxu0 %v1254
        %v1449 = vpop.f32.mrf.mxu0
        %v1450 = vadd.f32 0.0, %v1449
        %v1451 = vpop.f32.mrf.mxu0
        %1452 = vmatprep.mubr.f32.mxu0 0.0
        %1453 = vmatmul.mubr.f32.gmra.mxu0 %v1255
        %v1454 = vpop.f32.mrf.mxu0
        %v1455 = vadd.f32 0.0, %v1454
        %v1456 = vpop.f32.mrf.mxu0
        %1457 = vmatprep.mubr.f32.mxu0 0.0
        %1458 = vmatmul.mubr.f32.gmra.mxu0 %v1256
        %v1459 = vpop.f32.mrf.mxu0
        %v1460 = vadd.f32 0.0, %v1459
        %v1461 = vpop.f32.mrf.mxu0
        %1462 = vmatprep.mubr.f32.mxu0 0.0
        %1463 = vmatmul.mubr.f32.gmra.mxu0 %v1257
        %v1464 = vpop.f32.mrf.mxu0
        %v1465 = vadd.f32 0.0, %v1464
        %v1466 = vpop.f32.mrf.mxu0
        %1467 = vmatprep.mubr.f32.mxu0 0.0
        %1468 = vmatmul.mubr.f32.gmra.mxu0 %v1258
        %v1469 = vpop.f32.mrf.mxu0
        %v1470 = vadd.f32 0.0, %v1469
        %v1471 = vpop.f32.mrf.mxu0
        %1472 = vmatprep.mubr.f32.mxu0 0.0
        %1473 = vmatmul.mubr.f32.gmra.mxu0 %v1259
        %v1474 = vpop.f32.mrf.mxu0
        %v1475 = vadd.f32 0.0, %v1474
        %v1476 = vpop.f32.mrf.mxu0
        %1477 = vmatprep.mubr.f32.mxu0 0.0
        %1478 = vmatmul.mubr.f32.gmra.mxu0 %v1260
        %v1479 = vpop.f32.mrf.mxu0
        %v1480 = vadd.f32 0.0, %v1479
        %v1481 = vpop.f32.mrf.mxu0
        %1482 = vmatprep.mubr.f32.mxu0 0.0
        %1483 = vmatmul.mubr.f32.gmra.mxu0 %v1261
        %v1484 = vpop.f32.mrf.mxu0
        %v1485 = vadd.f32 0.0, %v1484
        %v1486 = vpop.f32.mrf.mxu0
        %1487 = vmatprep.mubr.f32.mxu0 0.0
        %1488 = vmatmul.mubr.f32.gmra.mxu0 %v1262
        %v1489 = vpop.f32.mrf.mxu0
        %v1490 = vadd.f32 0.0, %v1489
        %v1491 = vpop.f32.mrf.mxu0
        %1492 = vmatprep.mubr.f32.mxu0 0.0
        %1493 = vmatmul.mubr.f32.gmra.mxu0 %v1263
        %v1494 = vpop.f32.mrf.mxu0
        %v1495 = vadd.f32 0.0, %v1494
        %v1496 = vpop.f32.mrf.mxu0
        %1497 = vmatprep.mubr.f32.mxu0 0.0
        %1498 = vmatmul.mubr.f32.gmra.mxu0 %v1264
        %v1499 = vpop.f32.mrf.mxu0
        %v1500 = vadd.f32 0.0, %v1499
        %v1501 = vpop.f32.mrf.mxu0
        %1502 = vmatprep.mubr.f32.mxu0 0.0
        %1503 = vmatmul.mubr.f32.gmra.mxu0 %v1265
        %v1504 = vpop.f32.mrf.mxu0
        %v1505 = vadd.f32 0.0, %v1504
        %v1506 = vpop.f32.mrf.mxu0
        %1507 = vdwg.mxu0
        %v1508 = vadd.f32 %v1076, %v1350
        %v1509 = vadd.f32 %v1081, %v1355
        %v1510 = vadd.f32 %v1086, %v1360
        %v1511 = vadd.f32 %v1091, %v1365
        %v1512 = vadd.f32 %v1096, %v1370
        %v1513 = vadd.f32 %v1101, %v1375
        %v1514 = vadd.f32 %v1106, %v1380
        %v1515 = vadd.f32 %v1111, %v1385
        %v1516 = vadd.f32 %v1116, %v1390
        %v1517 = vadd.f32 %v1121, %v1395
        %v1518 = vadd.f32 %v1126, %v1400
        %v1519 = vadd.f32 %v1131, %v1405
        %v1520 = vadd.f32 %v1136, %v1410
        %v1521 = vadd.f32 %v1141, %v1415
        %v1522 = vadd.f32 %v1146, %v1420
        %v1523 = vadd.f32 %v1151, %v1425
        %v1524 = vadd.f32 %v1156, %v1430
        %v1525 = vadd.f32 %v1161, %v1435
        %v1526 = vadd.f32 %v1166, %v1440
        %v1527 = vadd.f32 %v1171, %v1445
        %v1528 = vadd.f32 %v1176, %v1450
        %v1529 = vadd.f32 %v1181, %v1455
        %v1530 = vadd.f32 %v1186, %v1460
        %v1531 = vadd.f32 %v1191, %v1465
        %v1532 = vadd.f32 %v1196, %v1470
        %v1533 = vadd.f32 %v1201, %v1475
        %v1534 = vadd.f32 %v1206, %v1480
        %v1535 = vadd.f32 %v1211, %v1485
        %v1536 = vadd.f32 %v1216, %v1490
        %v1537 = vadd.f32 %v1221, %v1495
        %v1538 = vadd.f32 %v1226, %v1500
        %v1539 = vadd.f32 %v1231, %v1505
        %v1540 = vld [vmem:[%s654] sm:$0xff]
        %v1541 = vld [vmem:[%s654 + $0x8] sm:$0xff]
        %v1542 = vld [vmem:[%s654 + $0x18] sm:$0xff]
        %v1543 = vld [vmem:[%s654 + $0x20] sm:$0xff]
        %v1544 = vld [vmem:[%s654 + $0x30] sm:$0xff]
        %v1545 = vld [vmem:[%s654 + $0x38] sm:$0xff]
        %v1546 = vld [vmem:[%s654 + $0x48] sm:$0xff]
        %v1547 = vld [vmem:[%s654 + $0x50] sm:$0xff]
        %v1548 = vld [vmem:[%s654 + $0x60] sm:$0xff]
        %v1549 = vld [vmem:[%s654 + $0x68] sm:$0xff]
        %v1550 = vld [vmem:[%s654 + $0x78] sm:$0xff]
        %v1551 = vld [vmem:[%s654 + $0x80] sm:$0xff]
        %v1552 = vld [vmem:[%s654 + $0x90] sm:$0xff]
        %v1553 = vld [vmem:[%s654 + $0x98] sm:$0xff]
        %v1554 = vld [vmem:[%s654 + $0xa8] sm:$0xff]
        %v1555 = vld [vmem:[%s654 + $0xb0] sm:$0xff]
        %v1556 = vld [vmem:[%s654 + $0xc0] sm:$0xff]
        %v1557 = vld [vmem:[%s654 + $0xc8] sm:$0xff]
        %v1558 = vld [vmem:[%s654 + $0xd8] sm:$0xff]
        %v1559 = vld [vmem:[%s654 + $0xe0] sm:$0xff]
        %v1560 = vld [vmem:[%s654 + $0xf0] sm:$0xff]
        %v1561 = vld [vmem:[%s654 + $0xf8] sm:$0xff]
        %v1562 = vld [vmem:[%s654 + $0x108] sm:$0xff]
        %v1563 = vld [vmem:[%s654 + $0x110] sm:$0xff]
        %v1564 = vld [vmem:[%s654 + $0x120] sm:$0xff]
        %v1565 = vld [vmem:[%s654 + $0x128] sm:$0xff]
        %v1566 = vld [vmem:[%s654 + $0x138] sm:$0xff]
        %v1567 = vld [vmem:[%s654 + $0x140] sm:$0xff]
        %v1568 = vld [vmem:[%s654 + $0x150] sm:$0xff]
        %v1569 = vld [vmem:[%s654 + $0x158] sm:$0xff]
        %v1570 = vld [vmem:[%s654 + $0x168] sm:$0xff]
        %v1571 = vld [vmem:[%s654 + $0x170] sm:$0xff]
        %s1572 = scalar_lea.vmem %s3, 384
        %v1573 = vld [vmem:[%s1572] sm:$0xff]
        %v1574 = vld [vmem:[%s1572 + $0x8] sm:$0xff]
        %v1575 = vld [vmem:[%s1572 + $0x10] sm:$0xff]
        %v1576 = vld [vmem:[%s1572 + $0x18] sm:$0xff]
        %v1577 = vld [vmem:[%s1572 + $0x20] sm:$0xff]
        %v1578 = vld [vmem:[%s1572 + $0x28] sm:$0xff]
        %v1579 = vld [vmem:[%s1572 + $0x30] sm:$0xff]
        %v1580 = vld [vmem:[%s1572 + $0x38] sm:$0xff]
        %v1581 = vld [vmem:[%s1572 + $0x40] sm:$0xff]
        %v1582 = vld [vmem:[%s1572 + $0x48] sm:$0xff]
        %v1583 = vld [vmem:[%s1572 + $0x50] sm:$0xff]
        %v1584 = vld [vmem:[%s1572 + $0x58] sm:$0xff]
        %v1585 = vld [vmem:[%s1572 + $0x60] sm:$0xff]
        %v1586 = vld [vmem:[%s1572 + $0x68] sm:$0xff]
        %v1587 = vld [vmem:[%s1572 + $0x70] sm:$0xff]
        %v1588 = vld [vmem:[%s1572 + $0x78] sm:$0xff]
        %1589 = vmatprep.subr.mxu0 0.0
        %1590 = vmatpush1.msra.mxu0 %v1588
        %1591 = vmatprep.subr.mxu0 0.0
        %1592 = vmatpush1.msra.mxu0 %v1587
        %1593 = vmatprep.subr.mxu0 0.0
        %1594 = vmatpush1.msra.mxu0 %v1586
        %1595 = vmatprep.subr.mxu0 0.0
        %1596 = vmatpush1.msra.mxu0 %v1585
        %1597 = vmatprep.subr.mxu0 0.0
        %1598 = vmatpush1.msra.mxu0 %v1584
        %1599 = vmatprep.subr.mxu0 0.0
        %1600 = vmatpush1.msra.mxu0 %v1583
        %1601 = vmatprep.subr.mxu0 0.0
        %1602 = vmatpush1.msra.mxu0 %v1582
        %1603 = vmatprep.subr.mxu0 0.0
        %1604 = vmatpush1.msra.mxu0 %v1581
        %1605 = vmatprep.subr.mxu0 0.0
        %1606 = vmatpush1.msra.mxu0 %v1580
        %1607 = vmatprep.subr.mxu0 0.0
        %1608 = vmatpush1.msra.mxu0 %v1579
        %1609 = vmatprep.subr.mxu0 0.0
        %1610 = vmatpush1.msra.mxu0 %v1578
        %1611 = vmatprep.subr.mxu0 0.0
        %1612 = vmatpush1.msra.mxu0 %v1577
        %1613 = vmatprep.subr.mxu0 0.0
        %1614 = vmatpush1.msra.mxu0 %v1576
        %1615 = vmatprep.subr.mxu0 0.0
        %1616 = vmatpush1.msra.mxu0 %v1575
        %1617 = vmatprep.subr.mxu0 0.0
        %1618 = vmatpush1.msra.mxu0 %v1574
        %1619 = vmatprep.subr.mxu0 0.0
        %1620 = vmatpush1.msra.mxu0 %v1573
        %1621 = vmatprep.subr.mxu0 0.0
        %1622 = vmatpush2.msra.mxu0 0.0
        %1623 = vmatprep.subr.mxu0 0.0
        %1624 = vmatpush2.msra.mxu0 0.0
        %1625 = vmatprep.subr.mxu0 0.0
        %1626 = vmatpush2.msra.mxu0 0.0
        %1627 = vmatprep.subr.mxu0 0.0
        %1628 = vmatpush2.msra.mxu0 0.0
        %1629 = vmatprep.subr.mxu0 0.0
        %1630 = vmatpush2.msra.mxu0 0.0
        %1631 = vmatprep.subr.mxu0 0.0
        %1632 = vmatpush2.msra.mxu0 0.0
        %1633 = vmatprep.subr.mxu0 0.0
        %1634 = vmatpush2.msra.mxu0 0.0
        %1635 = vmatprep.subr.mxu0 0.0
        %1636 = vmatpush2.msra.mxu0 0.0
        %1637 = vmatprep.subr.mxu0 0.0
        %1638 = vmatpush2.msra.mxu0 0.0
        %1639 = vmatprep.subr.mxu0 0.0
        %1640 = vmatpush2.msra.mxu0 0.0
        %1641 = vmatprep.subr.mxu0 0.0
        %1642 = vmatpush2.msra.mxu0 0.0
        %1643 = vmatprep.subr.mxu0 0.0
        %1644 = vmatpush2.msra.mxu0 0.0
        %1645 = vmatprep.subr.mxu0 0.0
        %1646 = vmatpush2.msra.mxu0 0.0
        %1647 = vmatprep.subr.mxu0 0.0
        %1648 = vmatpush2.msra.mxu0 0.0
        %1649 = vmatprep.subr.mxu0 0.0
        %1650 = vmatpush2.msra.mxu0 0.0
        %1651 = vmatprep.subr.mxu0 0.0
        %1652 = vmatpush2.msra.mxu0 0.0
        %1653 = vmatprep.mubr.f32.mxu0 0.0
        %1654 = vmatmul.mubr.f32.gmra.mxu0 %v1540
        %v1655 = vpop.f32.mrf.mxu0
        %v1656 = vadd.f32 0.0, %v1655
        %v1657 = vpop.f32.mrf.mxu0
        %1658 = vmatprep.mubr.f32.mxu0 0.0
        %1659 = vmatmul.mubr.f32.gmra.mxu0 %v1541
        %v1660 = vpop.f32.mrf.mxu0
        %v1661 = vadd.f32 0.0, %v1660
        %v1662 = vpop.f32.mrf.mxu0
        %1663 = vmatprep.mubr.f32.mxu0 0.0
        %1664 = vmatmul.mubr.f32.gmra.mxu0 %v1542
        %v1665 = vpop.f32.mrf.mxu0
        %v1666 = vadd.f32 0.0, %v1665
        %v1667 = vpop.f32.mrf.mxu0
        %1668 = vmatprep.mubr.f32.mxu0 0.0
        %1669 = vmatmul.mubr.f32.gmra.mxu0 %v1543
        %v1670 = vpop.f32.mrf.mxu0
        %v1671 = vadd.f32 0.0, %v1670
        %v1672 = vpop.f32.mrf.mxu0
        %1673 = vmatprep.mubr.f32.mxu0 0.0
        %1674 = vmatmul.mubr.f32.gmra.mxu0 %v1544
        %v1675 = vpop.f32.mrf.mxu0
        %v1676 = vadd.f32 0.0, %v1675
        %v1677 = vpop.f32.mrf.mxu0
        %1678 = vmatprep.mubr.f32.mxu0 0.0
        %1679 = vmatmul.mubr.f32.gmra.mxu0 %v1545
        %v1680 = vpop.f32.mrf.mxu0
        %v1681 = vadd.f32 0.0, %v1680
        %v1682 = vpop.f32.mrf.mxu0
        %1683 = vmatprep.mubr.f32.mxu0 0.0
        %1684 = vmatmul.mubr.f32.gmra.mxu0 %v1546
        %v1685 = vpop.f32.mrf.mxu0
        %v1686 = vadd.f32 0.0, %v1685
        %v1687 = vpop.f32.mrf.mxu0
        %1688 = vmatprep.mubr.f32.mxu0 0.0
        %1689 = vmatmul.mubr.f32.gmra.mxu0 %v1547
        %v1690 = vpop.f32.mrf.mxu0
        %v1691 = vadd.f32 0.0, %v1690
        %v1692 = vpop.f32.mrf.mxu0
        %1693 = vmatprep.mubr.f32.mxu0 0.0
        %1694 = vmatmul.mubr.f32.gmra.mxu0 %v1548
        %v1695 = vpop.f32.mrf.mxu0
        %v1696 = vadd.f32 0.0, %v1695
        %v1697 = vpop.f32.mrf.mxu0
        %1698 = vmatprep.mubr.f32.mxu0 0.0
        %1699 = vmatmul.mubr.f32.gmra.mxu0 %v1549
        %v1700 = vpop.f32.mrf.mxu0
        %v1701 = vadd.f32 0.0, %v1700
        %v1702 = vpop.f32.mrf.mxu0
        %1703 = vmatprep.mubr.f32.mxu0 0.0
        %1704 = vmatmul.mubr.f32.gmra.mxu0 %v1550
        %v1705 = vpop.f32.mrf.mxu0
        %v1706 = vadd.f32 0.0, %v1705
        %v1707 = vpop.f32.mrf.mxu0
        %1708 = vmatprep.mubr.f32.mxu0 0.0
        %1709 = vmatmul.mubr.f32.gmra.mxu0 %v1551
        %v1710 = vpop.f32.mrf.mxu0
        %v1711 = vadd.f32 0.0, %v1710
        %v1712 = vpop.f32.mrf.mxu0
        %1713 = vmatprep.mubr.f32.mxu0 0.0
        %1714 = vmatmul.mubr.f32.gmra.mxu0 %v1552
        %v1715 = vpop.f32.mrf.mxu0
        %v1716 = vadd.f32 0.0, %v1715
        %v1717 = vpop.f32.mrf.mxu0
        %1718 = vmatprep.mubr.f32.mxu0 0.0
        %1719 = vmatmul.mubr.f32.gmra.mxu0 %v1553
        %v1720 = vpop.f32.mrf.mxu0
        %v1721 = vadd.f32 0.0, %v1720
        %v1722 = vpop.f32.mrf.mxu0
        %1723 = vmatprep.mubr.f32.mxu0 0.0
        %1724 = vmatmul.mubr.f32.gmra.mxu0 %v1554
        %v1725 = vpop.f32.mrf.mxu0
        %v1726 = vadd.f32 0.0, %v1725
        %v1727 = vpop.f32.mrf.mxu0
        %1728 = vmatprep.mubr.f32.mxu0 0.0
        %1729 = vmatmul.mubr.f32.gmra.mxu0 %v1555
        %v1730 = vpop.f32.mrf.mxu0
        %v1731 = vadd.f32 0.0, %v1730
        %v1732 = vpop.f32.mrf.mxu0
        %1733 = vmatprep.mubr.f32.mxu0 0.0
        %1734 = vmatmul.mubr.f32.gmra.mxu0 %v1556
        %v1735 = vpop.f32.mrf.mxu0
        %v1736 = vadd.f32 0.0, %v1735
        %v1737 = vpop.f32.mrf.mxu0
        %1738 = vmatprep.mubr.f32.mxu0 0.0
        %1739 = vmatmul.mubr.f32.gmra.mxu0 %v1557
        %v1740 = vpop.f32.mrf.mxu0
        %v1741 = vadd.f32 0.0, %v1740
        %v1742 = vpop.f32.mrf.mxu0
        %1743 = vmatprep.mubr.f32.mxu0 0.0
        %1744 = vmatmul.mubr.f32.gmra.mxu0 %v1558
        %v1745 = vpop.f32.mrf.mxu0
        %v1746 = vadd.f32 0.0, %v1745
        %v1747 = vpop.f32.mrf.mxu0
        %1748 = vmatprep.mubr.f32.mxu0 0.0
        %1749 = vmatmul.mubr.f32.gmra.mxu0 %v1559
        %v1750 = vpop.f32.mrf.mxu0
        %v1751 = vadd.f32 0.0, %v1750
        %v1752 = vpop.f32.mrf.mxu0
        %1753 = vmatprep.mubr.f32.mxu0 0.0
        %1754 = vmatmul.mubr.f32.gmra.mxu0 %v1560
        %v1755 = vpop.f32.mrf.mxu0
        %v1756 = vadd.f32 0.0, %v1755
        %v1757 = vpop.f32.mrf.mxu0
        %1758 = vmatprep.mubr.f32.mxu0 0.0
        %1759 = vmatmul.mubr.f32.gmra.mxu0 %v1561
        %v1760 = vpop.f32.mrf.mxu0
        %v1761 = vadd.f32 0.0, %v1760
        %v1762 = vpop.f32.mrf.mxu0
        %1763 = vmatprep.mubr.f32.mxu0 0.0
        %1764 = vmatmul.mubr.f32.gmra.mxu0 %v1562
        %v1765 = vpop.f32.mrf.mxu0
        %v1766 = vadd.f32 0.0, %v1765
        %v1767 = vpop.f32.mrf.mxu0
        %1768 = vmatprep.mubr.f32.mxu0 0.0
        %1769 = vmatmul.mubr.f32.gmra.mxu0 %v1563
        %v1770 = vpop.f32.mrf.mxu0
        %v1771 = vadd.f32 0.0, %v1770
        %v1772 = vpop.f32.mrf.mxu0
        %1773 = vmatprep.mubr.f32.mxu0 0.0
        %1774 = vmatmul.mubr.f32.gmra.mxu0 %v1564
        %v1775 = vpop.f32.mrf.mxu0
        %v1776 = vadd.f32 0.0, %v1775
        %v1777 = vpop.f32.mrf.mxu0
        %1778 = vmatprep.mubr.f32.mxu0 0.0
        %1779 = vmatmul.mubr.f32.gmra.mxu0 %v1565
        %v1780 = vpop.f32.mrf.mxu0
        %v1781 = vadd.f32 0.0, %v1780
        %v1782 = vpop.f32.mrf.mxu0
        %1783 = vmatprep.mubr.f32.mxu0 0.0
        %1784 = vmatmul.mubr.f32.gmra.mxu0 %v1566
        %v1785 = vpop.f32.mrf.mxu0
        %v1786 = vadd.f32 0.0, %v1785
        %v1787 = vpop.f32.mrf.mxu0
        %1788 = vmatprep.mubr.f32.mxu0 0.0
        %1789 = vmatmul.mubr.f32.gmra.mxu0 %v1567
        %v1790 = vpop.f32.mrf.mxu0
        %v1791 = vadd.f32 0.0, %v1790
        %v1792 = vpop.f32.mrf.mxu0
        %1793 = vmatprep.mubr.f32.mxu0 0.0
        %1794 = vmatmul.mubr.f32.gmra.mxu0 %v1568
        %v1795 = vpop.f32.mrf.mxu0
        %v1796 = vadd.f32 0.0, %v1795
        %v1797 = vpop.f32.mrf.mxu0
        %1798 = vmatprep.mubr.f32.mxu0 0.0
        %1799 = vmatmul.mubr.f32.gmra.mxu0 %v1569
        %v1800 = vpop.f32.mrf.mxu0
        %v1801 = vadd.f32 0.0, %v1800
        %v1802 = vpop.f32.mrf.mxu0
        %1803 = vmatprep.mubr.f32.mxu0 0.0
        %1804 = vmatmul.mubr.f32.gmra.mxu0 %v1570
        %v1805 = vpop.f32.mrf.mxu0
        %v1806 = vadd.f32 0.0, %v1805
        %v1807 = vpop.f32.mrf.mxu0
        %1808 = vmatprep.mubr.f32.mxu0 0.0
        %1809 = vmatmul.mubr.f32.gmra.mxu0 %v1571
        %v1810 = vpop.f32.mrf.mxu0
        %v1811 = vadd.f32 0.0, %v1810
        %v1812 = vpop.f32.mrf.mxu0
        %1813 = vdwg.mxu0
        %v1814 = vadd.f32 %v1508, %v1656
        %v1815 = vadd.f32 %v1509, %v1661
        %v1816 = vadd.f32 %v1510, %v1666
        %v1817 = vadd.f32 %v1511, %v1671
        %v1818 = vadd.f32 %v1512, %v1676
        %v1819 = vadd.f32 %v1513, %v1681
        %v1820 = vadd.f32 %v1514, %v1686
        %v1821 = vadd.f32 %v1515, %v1691
        %v1822 = vadd.f32 %v1516, %v1696
        %v1823 = vadd.f32 %v1517, %v1701
        %v1824 = vadd.f32 %v1518, %v1706
        %v1825 = vadd.f32 %v1519, %v1711
        %v1826 = vadd.f32 %v1520, %v1716
        %v1827 = vadd.f32 %v1521, %v1721
        %v1828 = vadd.f32 %v1522, %v1726
        %v1829 = vadd.f32 %v1523, %v1731
        %v1830 = vadd.f32 %v1524, %v1736
        %v1831 = vadd.f32 %v1525, %v1741
        %v1832 = vadd.f32 %v1526, %v1746
        %v1833 = vadd.f32 %v1527, %v1751
        %v1834 = vadd.f32 %v1528, %v1756
        %v1835 = vadd.f32 %v1529, %v1761
        %v1836 = vadd.f32 %v1530, %v1766
        %v1837 = vadd.f32 %v1531, %v1771
        %v1838 = vadd.f32 %v1532, %v1776
        %v1839 = vadd.f32 %v1533, %v1781
        %v1840 = vadd.f32 %v1534, %v1786
        %v1841 = vadd.f32 %v1535, %v1791
        %v1842 = vadd.f32 %v1536, %v1796
        %v1843 = vadd.f32 %v1537, %v1801
        %v1844 = vadd.f32 %v1538, %v1806
        %v1845 = vadd.f32 %v1539, %v1811
        %v1846 = vld [vmem:[%s654 + $0x1] sm:$0xff]
        %v1847 = vld [vmem:[%s654 + $0x9] sm:$0xff]
        %v1848 = vld [vmem:[%s654 + $0x19] sm:$0xff]
        %v1849 = vld [vmem:[%s654 + $0x21] sm:$0xff]
        %v1850 = vld [vmem:[%s654 + $0x31] sm:$0xff]
        %v1851 = vld [vmem:[%s654 + $0x39] sm:$0xff]
        %v1852 = vld [vmem:[%s654 + $0x49] sm:$0xff]
        %v1853 = vld [vmem:[%s654 + $0x51] sm:$0xff]
        %v1854 = vld [vmem:[%s654 + $0x61] sm:$0xff]
        %v1855 = vld [vmem:[%s654 + $0x69] sm:$0xff]
        %v1856 = vld [vmem:[%s654 + $0x79] sm:$0xff]
        %v1857 = vld [vmem:[%s654 + $0x81] sm:$0xff]
        %v1858 = vld [vmem:[%s654 + $0x91] sm:$0xff]
        %v1859 = vld [vmem:[%s654 + $0x99] sm:$0xff]
        %v1860 = vld [vmem:[%s654 + $0xa9] sm:$0xff]
        %v1861 = vld [vmem:[%s654 + $0xb1] sm:$0xff]
        %v1862 = vld [vmem:[%s654 + $0xc1] sm:$0xff]
        %v1863 = vld [vmem:[%s654 + $0xc9] sm:$0xff]
        %v1864 = vld [vmem:[%s654 + $0xd9] sm:$0xff]
        %v1865 = vld [vmem:[%s654 + $0xe1] sm:$0xff]
        %v1866 = vld [vmem:[%s654 + $0xf1] sm:$0xff]
        %v1867 = vld [vmem:[%s654 + $0xf9] sm:$0xff]
        %v1868 = vld [vmem:[%s654 + $0x109] sm:$0xff]
        %v1869 = vld [vmem:[%s654 + $0x111] sm:$0xff]
        %v1870 = vld [vmem:[%s654 + $0x121] sm:$0xff]
        %v1871 = vld [vmem:[%s654 + $0x129] sm:$0xff]
        %v1872 = vld [vmem:[%s654 + $0x139] sm:$0xff]
        %v1873 = vld [vmem:[%s654 + $0x141] sm:$0xff]
        %v1874 = vld [vmem:[%s654 + $0x151] sm:$0xff]
        %v1875 = vld [vmem:[%s654 + $0x159] sm:$0xff]
        %v1876 = vld [vmem:[%s654 + $0x169] sm:$0xff]
        %v1877 = vld [vmem:[%s654 + $0x171] sm:$0xff]
        %s1878 = scalar_lea.vmem %s3, 512
        %v1879 = vld [vmem:[%s1878] sm:$0xff]
        %v1880 = vld [vmem:[%s1878 + $0x8] sm:$0xff]
        %v1881 = vld [vmem:[%s1878 + $0x10] sm:$0xff]
        %v1882 = vld [vmem:[%s1878 + $0x18] sm:$0xff]
        %v1883 = vld [vmem:[%s1878 + $0x20] sm:$0xff]
        %v1884 = vld [vmem:[%s1878 + $0x28] sm:$0xff]
        %v1885 = vld [vmem:[%s1878 + $0x30] sm:$0xff]
        %v1886 = vld [vmem:[%s1878 + $0x38] sm:$0xff]
        %v1887 = vld [vmem:[%s1878 + $0x40] sm:$0xff]
        %v1888 = vld [vmem:[%s1878 + $0x48] sm:$0xff]
        %v1889 = vld [vmem:[%s1878 + $0x50] sm:$0xff]
        %v1890 = vld [vmem:[%s1878 + $0x58] sm:$0xff]
        %v1891 = vld [vmem:[%s1878 + $0x60] sm:$0xff]
        %v1892 = vld [vmem:[%s1878 + $0x68] sm:$0xff]
        %v1893 = vld [vmem:[%s1878 + $0x70] sm:$0xff]
        %v1894 = vld [vmem:[%s1878 + $0x78] sm:$0xff]
        %1895 = vmatprep.subr.mxu0 0.0
        %1896 = vmatpush1.msra.mxu0 %v1894
        %1897 = vmatprep.subr.mxu0 0.0
        %1898 = vmatpush1.msra.mxu0 %v1893
        %1899 = vmatprep.subr.mxu0 0.0
        %1900 = vmatpush1.msra.mxu0 %v1892
        %1901 = vmatprep.subr.mxu0 0.0
        %1902 = vmatpush1.msra.mxu0 %v1891
        %1903 = vmatprep.subr.mxu0 0.0
        %1904 = vmatpush1.msra.mxu0 %v1890
        %1905 = vmatprep.subr.mxu0 0.0
        %1906 = vmatpush1.msra.mxu0 %v1889
        %1907 = vmatprep.subr.mxu0 0.0
        %1908 = vmatpush1.msra.mxu0 %v1888
        %1909 = vmatprep.subr.mxu0 0.0
        %1910 = vmatpush1.msra.mxu0 %v1887
        %1911 = vmatprep.subr.mxu0 0.0
        %1912 = vmatpush1.msra.mxu0 %v1886
        %1913 = vmatprep.subr.mxu0 0.0
        %1914 = vmatpush1.msra.mxu0 %v1885
        %1915 = vmatprep.subr.mxu0 0.0
        %1916 = vmatpush1.msra.mxu0 %v1884
        %1917 = vmatprep.subr.mxu0 0.0
        %1918 = vmatpush1.msra.mxu0 %v1883
        %1919 = vmatprep.subr.mxu0 0.0
        %1920 = vmatpush1.msra.mxu0 %v1882
        %1921 = vmatprep.subr.mxu0 0.0
        %1922 = vmatpush1.msra.mxu0 %v1881
        %1923 = vmatprep.subr.mxu0 0.0
        %1924 = vmatpush1.msra.mxu0 %v1880
        %1925 = vmatprep.subr.mxu0 0.0
        %1926 = vmatpush1.msra.mxu0 %v1879
        %1927 = vmatprep.subr.mxu0 0.0
        %1928 = vmatpush2.msra.mxu0 0.0
        %1929 = vmatprep.subr.mxu0 0.0
        %1930 = vmatpush2.msra.mxu0 0.0
        %1931 = vmatprep.subr.mxu0 0.0
        %1932 = vmatpush2.msra.mxu0 0.0
        %1933 = vmatprep.subr.mxu0 0.0
        %1934 = vmatpush2.msra.mxu0 0.0
        %1935 = vmatprep.subr.mxu0 0.0
        %1936 = vmatpush2.msra.mxu0 0.0
        %1937 = vmatprep.subr.mxu0 0.0
        %1938 = vmatpush2.msra.mxu0 0.0
        %1939 = vmatprep.subr.mxu0 0.0
        %1940 = vmatpush2.msra.mxu0 0.0
        %1941 = vmatprep.subr.mxu0 0.0
        %1942 = vmatpush2.msra.mxu0 0.0
        %1943 = vmatprep.subr.mxu0 0.0
        %1944 = vmatpush2.msra.mxu0 0.0
        %1945 = vmatprep.subr.mxu0 0.0
        %1946 = vmatpush2.msra.mxu0 0.0
        %1947 = vmatprep.subr.mxu0 0.0
        %1948 = vmatpush2.msra.mxu0 0.0
        %1949 = vmatprep.subr.mxu0 0.0
        %1950 = vmatpush2.msra.mxu0 0.0
        %1951 = vmatprep.subr.mxu0 0.0
        %1952 = vmatpush2.msra.mxu0 0.0
        %1953 = vmatprep.subr.mxu0 0.0
        %1954 = vmatpush2.msra.mxu0 0.0
        %1955 = vmatprep.subr.mxu0 0.0
        %1956 = vmatpush2.msra.mxu0 0.0
        %1957 = vmatprep.subr.mxu0 0.0
        %1958 = vmatpush2.msra.mxu0 0.0
        %1959 = vmatprep.mubr.f32.mxu0 0.0
        %1960 = vmatmul.mubr.f32.gmra.mxu0 %v1846
        %v1961 = vpop.f32.mrf.mxu0
        %v1962 = vadd.f32 0.0, %v1961
        %v1963 = vpop.f32.mrf.mxu0
        %1964 = vmatprep.mubr.f32.mxu0 0.0
        %1965 = vmatmul.mubr.f32.gmra.mxu0 %v1847
        %v1966 = vpop.f32.mrf.mxu0
        %v1967 = vadd.f32 0.0, %v1966
        %v1968 = vpop.f32.mrf.mxu0
        %1969 = vmatprep.mubr.f32.mxu0 0.0
        %1970 = vmatmul.mubr.f32.gmra.mxu0 %v1848
        %v1971 = vpop.f32.mrf.mxu0
        %v1972 = vadd.f32 0.0, %v1971
        %v1973 = vpop.f32.mrf.mxu0
        %1974 = vmatprep.mubr.f32.mxu0 0.0
        %1975 = vmatmul.mubr.f32.gmra.mxu0 %v1849
        %v1976 = vpop.f32.mrf.mxu0
        %v1977 = vadd.f32 0.0, %v1976
        %v1978 = vpop.f32.mrf.mxu0
        %1979 = vmatprep.mubr.f32.mxu0 0.0
        %1980 = vmatmul.mubr.f32.gmra.mxu0 %v1850
        %v1981 = vpop.f32.mrf.mxu0
        %v1982 = vadd.f32 0.0, %v1981
        %v1983 = vpop.f32.mrf.mxu0
        %1984 = vmatprep.mubr.f32.mxu0 0.0
        %1985 = vmatmul.mubr.f32.gmra.mxu0 %v1851
        %v1986 = vpop.f32.mrf.mxu0
        %v1987 = vadd.f32 0.0, %v1986
        %v1988 = vpop.f32.mrf.mxu0
        %1989 = vmatprep.mubr.f32.mxu0 0.0
        %1990 = vmatmul.mubr.f32.gmra.mxu0 %v1852
        %v1991 = vpop.f32.mrf.mxu0
        %v1992 = vadd.f32 0.0, %v1991
        %v1993 = vpop.f32.mrf.mxu0
        %1994 = vmatprep.mubr.f32.mxu0 0.0
        %1995 = vmatmul.mubr.f32.gmra.mxu0 %v1853
        %v1996 = vpop.f32.mrf.mxu0
        %v1997 = vadd.f32 0.0, %v1996
        %v1998 = vpop.f32.mrf.mxu0
        %1999 = vmatprep.mubr.f32.mxu0 0.0
        %2000 = vmatmul.mubr.f32.gmra.mxu0 %v1854
        %v2001 = vpop.f32.mrf.mxu0
        %v2002 = vadd.f32 0.0, %v2001
        %v2003 = vpop.f32.mrf.mxu0
        %2004 = vmatprep.mubr.f32.mxu0 0.0
        %2005 = vmatmul.mubr.f32.gmra.mxu0 %v1855
        %v2006 = vpop.f32.mrf.mxu0
        %v2007 = vadd.f32 0.0, %v2006
        %v2008 = vpop.f32.mrf.mxu0
        %2009 = vmatprep.mubr.f32.mxu0 0.0
        %2010 = vmatmul.mubr.f32.gmra.mxu0 %v1856
        %v2011 = vpop.f32.mrf.mxu0
        %v2012 = vadd.f32 0.0, %v2011
        %v2013 = vpop.f32.mrf.mxu0
        %2014 = vmatprep.mubr.f32.mxu0 0.0
        %2015 = vmatmul.mubr.f32.gmra.mxu0 %v1857
        %v2016 = vpop.f32.mrf.mxu0
        %v2017 = vadd.f32 0.0, %v2016
        %v2018 = vpop.f32.mrf.mxu0
        %2019 = vmatprep.mubr.f32.mxu0 0.0
        %2020 = vmatmul.mubr.f32.gmra.mxu0 %v1858
        %v2021 = vpop.f32.mrf.mxu0
        %v2022 = vadd.f32 0.0, %v2021
        %v2023 = vpop.f32.mrf.mxu0
        %2024 = vmatprep.mubr.f32.mxu0 0.0
        %2025 = vmatmul.mubr.f32.gmra.mxu0 %v1859
        %v2026 = vpop.f32.mrf.mxu0
        %v2027 = vadd.f32 0.0, %v2026
        %v2028 = vpop.f32.mrf.mxu0
        %2029 = vmatprep.mubr.f32.mxu0 0.0
        %2030 = vmatmul.mubr.f32.gmra.mxu0 %v1860
        %v2031 = vpop.f32.mrf.mxu0
        %v2032 = vadd.f32 0.0, %v2031
        %v2033 = vpop.f32.mrf.mxu0
        %2034 = vmatprep.mubr.f32.mxu0 0.0
        %2035 = vmatmul.mubr.f32.gmra.mxu0 %v1861
        %v2036 = vpop.f32.mrf.mxu0
        %v2037 = vadd.f32 0.0, %v2036
        %v2038 = vpop.f32.mrf.mxu0
        %2039 = vmatprep.mubr.f32.mxu0 0.0
        %2040 = vmatmul.mubr.f32.gmra.mxu0 %v1862
        %v2041 = vpop.f32.mrf.mxu0
        %v2042 = vadd.f32 0.0, %v2041
        %v2043 = vpop.f32.mrf.mxu0
        %2044 = vmatprep.mubr.f32.mxu0 0.0
        %2045 = vmatmul.mubr.f32.gmra.mxu0 %v1863
        %v2046 = vpop.f32.mrf.mxu0
        %v2047 = vadd.f32 0.0, %v2046
        %v2048 = vpop.f32.mrf.mxu0
        %2049 = vmatprep.mubr.f32.mxu0 0.0
        %2050 = vmatmul.mubr.f32.gmra.mxu0 %v1864
        %v2051 = vpop.f32.mrf.mxu0
        %v2052 = vadd.f32 0.0, %v2051
        %v2053 = vpop.f32.mrf.mxu0
        %2054 = vmatprep.mubr.f32.mxu0 0.0
        %2055 = vmatmul.mubr.f32.gmra.mxu0 %v1865
        %v2056 = vpop.f32.mrf.mxu0
        %v2057 = vadd.f32 0.0, %v2056
        %v2058 = vpop.f32.mrf.mxu0
        %2059 = vmatprep.mubr.f32.mxu0 0.0
        %2060 = vmatmul.mubr.f32.gmra.mxu0 %v1866
        %v2061 = vpop.f32.mrf.mxu0
        %v2062 = vadd.f32 0.0, %v2061
        %v2063 = vpop.f32.mrf.mxu0
        %2064 = vmatprep.mubr.f32.mxu0 0.0
        %2065 = vmatmul.mubr.f32.gmra.mxu0 %v1867
        %v2066 = vpop.f32.mrf.mxu0
        %v2067 = vadd.f32 0.0, %v2066
        %v2068 = vpop.f32.mrf.mxu0
        %2069 = vmatprep.mubr.f32.mxu0 0.0
        %2070 = vmatmul.mubr.f32.gmra.mxu0 %v1868
        %v2071 = vpop.f32.mrf.mxu0
        %v2072 = vadd.f32 0.0, %v2071
        %v2073 = vpop.f32.mrf.mxu0
        %2074 = vmatprep.mubr.f32.mxu0 0.0
        %2075 = vmatmul.mubr.f32.gmra.mxu0 %v1869
        %v2076 = vpop.f32.mrf.mxu0
        %v2077 = vadd.f32 0.0, %v2076
        %v2078 = vpop.f32.mrf.mxu0
        %2079 = vmatprep.mubr.f32.mxu0 0.0
        %2080 = vmatmul.mubr.f32.gmra.mxu0 %v1870
        %v2081 = vpop.f32.mrf.mxu0
        %v2082 = vadd.f32 0.0, %v2081
        %v2083 = vpop.f32.mrf.mxu0
        %2084 = vmatprep.mubr.f32.mxu0 0.0
        %2085 = vmatmul.mubr.f32.gmra.mxu0 %v1871
        %v2086 = vpop.f32.mrf.mxu0
        %v2087 = vadd.f32 0.0, %v2086
        %v2088 = vpop.f32.mrf.mxu0
        %2089 = vmatprep.mubr.f32.mxu0 0.0
        %2090 = vmatmul.mubr.f32.gmra.mxu0 %v1872
        %v2091 = vpop.f32.mrf.mxu0
        %v2092 = vadd.f32 0.0, %v2091
        %v2093 = vpop.f32.mrf.mxu0
        %2094 = vmatprep.mubr.f32.mxu0 0.0
        %2095 = vmatmul.mubr.f32.gmra.mxu0 %v1873
        %v2096 = vpop.f32.mrf.mxu0
        %v2097 = vadd.f32 0.0, %v2096
        %v2098 = vpop.f32.mrf.mxu0
        %2099 = vmatprep.mubr.f32.mxu0 0.0
        %2100 = vmatmul.mubr.f32.gmra.mxu0 %v1874
        %v2101 = vpop.f32.mrf.mxu0
        %v2102 = vadd.f32 0.0, %v2101
        %v2103 = vpop.f32.mrf.mxu0
        %2104 = vmatprep.mubr.f32.mxu0 0.0
        %2105 = vmatmul.mubr.f32.gmra.mxu0 %v1875
        %v2106 = vpop.f32.mrf.mxu0
        %v2107 = vadd.f32 0.0, %v2106
        %v2108 = vpop.f32.mrf.mxu0
        %2109 = vmatprep.mubr.f32.mxu0 0.0
        %2110 = vmatmul.mubr.f32.gmra.mxu0 %v1876
        %v2111 = vpop.f32.mrf.mxu0
        %v2112 = vadd.f32 0.0, %v2111
        %v2113 = vpop.f32.mrf.mxu0
        %2114 = vmatprep.mubr.f32.mxu0 0.0
        %2115 = vmatmul.mubr.f32.gmra.mxu0 %v1877
        %v2116 = vpop.f32.mrf.mxu0
        %v2117 = vadd.f32 0.0, %v2116
        %v2118 = vpop.f32.mrf.mxu0
        %2119 = vdwg.mxu0
        %v2120 = vadd.f32 %v1814, %v1962
        %v2121 = vadd.f32 %v1815, %v1967
        %v2122 = vadd.f32 %v1816, %v1972
        %v2123 = vadd.f32 %v1817, %v1977
        %v2124 = vadd.f32 %v1818, %v1982
        %v2125 = vadd.f32 %v1819, %v1987
        %v2126 = vadd.f32 %v1820, %v1992
        %v2127 = vadd.f32 %v1821, %v1997
        %v2128 = vadd.f32 %v1822, %v2002
        %v2129 = vadd.f32 %v1823, %v2007
        %v2130 = vadd.f32 %v1824, %v2012
        %v2131 = vadd.f32 %v1825, %v2017
        %v2132 = vadd.f32 %v1826, %v2022
        %v2133 = vadd.f32 %v1827, %v2027
        %v2134 = vadd.f32 %v1828, %v2032
        %v2135 = vadd.f32 %v1829, %v2037
        %v2136 = vadd.f32 %v1830, %v2042
        %v2137 = vadd.f32 %v1831, %v2047
        %v2138 = vadd.f32 %v1832, %v2052
        %v2139 = vadd.f32 %v1833, %v2057
        %v2140 = vadd.f32 %v1834, %v2062
        %v2141 = vadd.f32 %v1835, %v2067
        %v2142 = vadd.f32 %v1836, %v2072
        %v2143 = vadd.f32 %v1837, %v2077
        %v2144 = vadd.f32 %v1838, %v2082
        %v2145 = vadd.f32 %v1839, %v2087
        %v2146 = vadd.f32 %v1840, %v2092
        %v2147 = vadd.f32 %v1841, %v2097
        %v2148 = vadd.f32 %v1842, %v2102
        %v2149 = vadd.f32 %v1843, %v2107
        %v2150 = vadd.f32 %v1844, %v2112
        %v2151 = vadd.f32 %v1845, %v2117
        %v2152 = vld [vmem:[%s654 + $0x2] sm:$0xff]
        %v2153 = vld [vmem:[%s654 + $0xa] sm:$0xff]
        %v2154 = vld [vmem:[%s654 + $0x1a] sm:$0xff]
        %v2155 = vld [vmem:[%s654 + $0x22] sm:$0xff]
        %v2156 = vld [vmem:[%s654 + $0x32] sm:$0xff]
        %v2157 = vld [vmem:[%s654 + $0x3a] sm:$0xff]
        %v2158 = vld [vmem:[%s654 + $0x4a] sm:$0xff]
        %v2159 = vld [vmem:[%s654 + $0x52] sm:$0xff]
        %v2160 = vld [vmem:[%s654 + $0x62] sm:$0xff]
        %v2161 = vld [vmem:[%s654 + $0x6a] sm:$0xff]
        %v2162 = vld [vmem:[%s654 + $0x7a] sm:$0xff]
        %v2163 = vld [vmem:[%s654 + $0x82] sm:$0xff]
        %v2164 = vld [vmem:[%s654 + $0x92] sm:$0xff]
        %v2165 = vld [vmem:[%s654 + $0x9a] sm:$0xff]
        %v2166 = vld [vmem:[%s654 + $0xaa] sm:$0xff]
        %v2167 = vld [vmem:[%s654 + $0xb2] sm:$0xff]
        %v2168 = vld [vmem:[%s654 + $0xc2] sm:$0xff]
        %v2169 = vld [vmem:[%s654 + $0xca] sm:$0xff]
        %v2170 = vld [vmem:[%s654 + $0xda] sm:$0xff]
        %v2171 = vld [vmem:[%s654 + $0xe2] sm:$0xff]
        %v2172 = vld [vmem:[%s654 + $0xf2] sm:$0xff]
        %v2173 = vld [vmem:[%s654 + $0xfa] sm:$0xff]
        %v2174 = vld [vmem:[%s654 + $0x10a] sm:$0xff]
        %v2175 = vld [vmem:[%s654 + $0x112] sm:$0xff]
        %v2176 = vld [vmem:[%s654 + $0x122] sm:$0xff]
        %v2177 = vld [vmem:[%s654 + $0x12a] sm:$0xff]
        %v2178 = vld [vmem:[%s654 + $0x13a] sm:$0xff]
        %v2179 = vld [vmem:[%s654 + $0x142] sm:$0xff]
        %v2180 = vld [vmem:[%s654 + $0x152] sm:$0xff]
        %v2181 = vld [vmem:[%s654 + $0x15a] sm:$0xff]
        %v2182 = vld [vmem:[%s654 + $0x16a] sm:$0xff]
        %v2183 = vld [vmem:[%s654 + $0x172] sm:$0xff]
        %s2184 = scalar_lea.vmem %s3, 640
        %v2185 = vld [vmem:[%s2184] sm:$0xff]
        %v2186 = vld [vmem:[%s2184 + $0x8] sm:$0xff]
        %v2187 = vld [vmem:[%s2184 + $0x10] sm:$0xff]
        %v2188 = vld [vmem:[%s2184 + $0x18] sm:$0xff]
        %v2189 = vld [vmem:[%s2184 + $0x20] sm:$0xff]
        %v2190 = vld [vmem:[%s2184 + $0x28] sm:$0xff]
        %v2191 = vld [vmem:[%s2184 + $0x30] sm:$0xff]
        %v2192 = vld [vmem:[%s2184 + $0x38] sm:$0xff]
        %v2193 = vld [vmem:[%s2184 + $0x40] sm:$0xff]
        %v2194 = vld [vmem:[%s2184 + $0x48] sm:$0xff]
        %v2195 = vld [vmem:[%s2184 + $0x50] sm:$0xff]
        %v2196 = vld [vmem:[%s2184 + $0x58] sm:$0xff]
        %v2197 = vld [vmem:[%s2184 + $0x60] sm:$0xff]
        %v2198 = vld [vmem:[%s2184 + $0x68] sm:$0xff]
        %v2199 = vld [vmem:[%s2184 + $0x70] sm:$0xff]
        %v2200 = vld [vmem:[%s2184 + $0x78] sm:$0xff]
        %2201 = vmatprep.subr.mxu0 0.0
        %2202 = vmatpush1.msra.mxu0 %v2200
        %2203 = vmatprep.subr.mxu0 0.0
        %2204 = vmatpush1.msra.mxu0 %v2199
        %2205 = vmatprep.subr.mxu0 0.0
        %2206 = vmatpush1.msra.mxu0 %v2198
        %2207 = vmatprep.subr.mxu0 0.0
        %2208 = vmatpush1.msra.mxu0 %v2197
        %2209 = vmatprep.subr.mxu0 0.0
        %2210 = vmatpush1.msra.mxu0 %v2196
        %2211 = vmatprep.subr.mxu0 0.0
        %2212 = vmatpush1.msra.mxu0 %v2195
        %2213 = vmatprep.subr.mxu0 0.0
        %2214 = vmatpush1.msra.mxu0 %v2194
        %2215 = vmatprep.subr.mxu0 0.0
        %2216 = vmatpush1.msra.mxu0 %v2193
        %2217 = vmatprep.subr.mxu0 0.0
        %2218 = vmatpush1.msra.mxu0 %v2192
        %2219 = vmatprep.subr.mxu0 0.0
        %2220 = vmatpush1.msra.mxu0 %v2191
        %2221 = vmatprep.subr.mxu0 0.0
        %2222 = vmatpush1.msra.mxu0 %v2190
        %2223 = vmatprep.subr.mxu0 0.0
        %2224 = vmatpush1.msra.mxu0 %v2189
        %2225 = vmatprep.subr.mxu0 0.0
        %2226 = vmatpush1.msra.mxu0 %v2188
        %2227 = vmatprep.subr.mxu0 0.0
        %2228 = vmatpush1.msra.mxu0 %v2187
        %2229 = vmatprep.subr.mxu0 0.0
        %2230 = vmatpush1.msra.mxu0 %v2186
        %2231 = vmatprep.subr.mxu0 0.0
        %2232 = vmatpush1.msra.mxu0 %v2185
        %2233 = vmatprep.subr.mxu0 0.0
        %2234 = vmatpush2.msra.mxu0 0.0
        %2235 = vmatprep.subr.mxu0 0.0
        %2236 = vmatpush2.msra.mxu0 0.0
        %2237 = vmatprep.subr.mxu0 0.0
        %2238 = vmatpush2.msra.mxu0 0.0
        %2239 = vmatprep.subr.mxu0 0.0
        %2240 = vmatpush2.msra.mxu0 0.0
        %2241 = vmatprep.subr.mxu0 0.0
        %2242 = vmatpush2.msra.mxu0 0.0
        %2243 = vmatprep.subr.mxu0 0.0
        %2244 = vmatpush2.msra.mxu0 0.0
        %2245 = vmatprep.subr.mxu0 0.0
        %2246 = vmatpush2.msra.mxu0 0.0
        %2247 = vmatprep.subr.mxu0 0.0
        %2248 = vmatpush2.msra.mxu0 0.0
        %2249 = vmatprep.subr.mxu0 0.0
        %2250 = vmatpush2.msra.mxu0 0.0
        %2251 = vmatprep.subr.mxu0 0.0
        %2252 = vmatpush2.msra.mxu0 0.0
        %2253 = vmatprep.subr.mxu0 0.0
        %2254 = vmatpush2.msra.mxu0 0.0
        %2255 = vmatprep.subr.mxu0 0.0
        %2256 = vmatpush2.msra.mxu0 0.0
        %2257 = vmatprep.subr.mxu0 0.0
        %2258 = vmatpush2.msra.mxu0 0.0
        %2259 = vmatprep.subr.mxu0 0.0
        %2260 = vmatpush2.msra.mxu0 0.0
        %2261 = vmatprep.subr.mxu0 0.0
        %2262 = vmatpush2.msra.mxu0 0.0
        %2263 = vmatprep.subr.mxu0 0.0
        %2264 = vmatpush2.msra.mxu0 0.0
        %2265 = vmatprep.mubr.f32.mxu0 0.0
        %2266 = vmatmul.mubr.f32.gmra.mxu0 %v2152
        %v2267 = vpop.f32.mrf.mxu0
        %v2268 = vadd.f32 0.0, %v2267
        %v2269 = vpop.f32.mrf.mxu0
        %2270 = vmatprep.mubr.f32.mxu0 0.0
        %2271 = vmatmul.mubr.f32.gmra.mxu0 %v2153
        %v2272 = vpop.f32.mrf.mxu0
        %v2273 = vadd.f32 0.0, %v2272
        %v2274 = vpop.f32.mrf.mxu0
        %2275 = vmatprep.mubr.f32.mxu0 0.0
        %2276 = vmatmul.mubr.f32.gmra.mxu0 %v2154
        %v2277 = vpop.f32.mrf.mxu0
        %v2278 = vadd.f32 0.0, %v2277
        %v2279 = vpop.f32.mrf.mxu0
        %2280 = vmatprep.mubr.f32.mxu0 0.0
        %2281 = vmatmul.mubr.f32.gmra.mxu0 %v2155
        %v2282 = vpop.f32.mrf.mxu0
        %v2283 = vadd.f32 0.0, %v2282
        %v2284 = vpop.f32.mrf.mxu0
        %2285 = vmatprep.mubr.f32.mxu0 0.0
        %2286 = vmatmul.mubr.f32.gmra.mxu0 %v2156
        %v2287 = vpop.f32.mrf.mxu0
        %v2288 = vadd.f32 0.0, %v2287
        %v2289 = vpop.f32.mrf.mxu0
        %2290 = vmatprep.mubr.f32.mxu0 0.0
        %2291 = vmatmul.mubr.f32.gmra.mxu0 %v2157
        %v2292 = vpop.f32.mrf.mxu0
        %v2293 = vadd.f32 0.0, %v2292
        %v2294 = vpop.f32.mrf.mxu0
        %2295 = vmatprep.mubr.f32.mxu0 0.0
        %2296 = vmatmul.mubr.f32.gmra.mxu0 %v2158
        %v2297 = vpop.f32.mrf.mxu0
        %v2298 = vadd.f32 0.0, %v2297
        %v2299 = vpop.f32.mrf.mxu0
        %2300 = vmatprep.mubr.f32.mxu0 0.0
        %2301 = vmatmul.mubr.f32.gmra.mxu0 %v2159
        %v2302 = vpop.f32.mrf.mxu0
        %v2303 = vadd.f32 0.0, %v2302
        %v2304 = vpop.f32.mrf.mxu0
        %2305 = vmatprep.mubr.f32.mxu0 0.0
        %2306 = vmatmul.mubr.f32.gmra.mxu0 %v2160
        %v2307 = vpop.f32.mrf.mxu0
        %v2308 = vadd.f32 0.0, %v2307
        %v2309 = vpop.f32.mrf.mxu0
        %2310 = vmatprep.mubr.f32.mxu0 0.0
        %2311 = vmatmul.mubr.f32.gmra.mxu0 %v2161
        %v2312 = vpop.f32.mrf.mxu0
        %v2313 = vadd.f32 0.0, %v2312
        %v2314 = vpop.f32.mrf.mxu0
        %2315 = vmatprep.mubr.f32.mxu0 0.0
        %2316 = vmatmul.mubr.f32.gmra.mxu0 %v2162
        %v2317 = vpop.f32.mrf.mxu0
        %v2318 = vadd.f32 0.0, %v2317
        %v2319 = vpop.f32.mrf.mxu0
        %2320 = vmatprep.mubr.f32.mxu0 0.0
        %2321 = vmatmul.mubr.f32.gmra.mxu0 %v2163
        %v2322 = vpop.f32.mrf.mxu0
        %v2323 = vadd.f32 0.0, %v2322
        %v2324 = vpop.f32.mrf.mxu0
        %2325 = vmatprep.mubr.f32.mxu0 0.0
        %2326 = vmatmul.mubr.f32.gmra.mxu0 %v2164
        %v2327 = vpop.f32.mrf.mxu0
        %v2328 = vadd.f32 0.0, %v2327
        %v2329 = vpop.f32.mrf.mxu0
        %2330 = vmatprep.mubr.f32.mxu0 0.0
        %2331 = vmatmul.mubr.f32.gmra.mxu0 %v2165
        %v2332 = vpop.f32.mrf.mxu0
        %v2333 = vadd.f32 0.0, %v2332
        %v2334 = vpop.f32.mrf.mxu0
        %2335 = vmatprep.mubr.f32.mxu0 0.0
        %2336 = vmatmul.mubr.f32.gmra.mxu0 %v2166
        %v2337 = vpop.f32.mrf.mxu0
        %v2338 = vadd.f32 0.0, %v2337
        %v2339 = vpop.f32.mrf.mxu0
        %2340 = vmatprep.mubr.f32.mxu0 0.0
        %2341 = vmatmul.mubr.f32.gmra.mxu0 %v2167
        %v2342 = vpop.f32.mrf.mxu0
        %v2343 = vadd.f32 0.0, %v2342
        %v2344 = vpop.f32.mrf.mxu0
        %2345 = vmatprep.mubr.f32.mxu0 0.0
        %2346 = vmatmul.mubr.f32.gmra.mxu0 %v2168
        %v2347 = vpop.f32.mrf.mxu0
        %v2348 = vadd.f32 0.0, %v2347
        %v2349 = vpop.f32.mrf.mxu0
        %2350 = vmatprep.mubr.f32.mxu0 0.0
        %2351 = vmatmul.mubr.f32.gmra.mxu0 %v2169
        %v2352 = vpop.f32.mrf.mxu0
        %v2353 = vadd.f32 0.0, %v2352
        %v2354 = vpop.f32.mrf.mxu0
        %2355 = vmatprep.mubr.f32.mxu0 0.0
        %2356 = vmatmul.mubr.f32.gmra.mxu0 %v2170
        %v2357 = vpop.f32.mrf.mxu0
        %v2358 = vadd.f32 0.0, %v2357
        %v2359 = vpop.f32.mrf.mxu0
        %2360 = vmatprep.mubr.f32.mxu0 0.0
        %2361 = vmatmul.mubr.f32.gmra.mxu0 %v2171
        %v2362 = vpop.f32.mrf.mxu0
        %v2363 = vadd.f32 0.0, %v2362
        %v2364 = vpop.f32.mrf.mxu0
        %2365 = vmatprep.mubr.f32.mxu0 0.0
        %2366 = vmatmul.mubr.f32.gmra.mxu0 %v2172
        %v2367 = vpop.f32.mrf.mxu0
        %v2368 = vadd.f32 0.0, %v2367
        %v2369 = vpop.f32.mrf.mxu0
        %2370 = vmatprep.mubr.f32.mxu0 0.0
        %2371 = vmatmul.mubr.f32.gmra.mxu0 %v2173
        %v2372 = vpop.f32.mrf.mxu0
        %v2373 = vadd.f32 0.0, %v2372
        %v2374 = vpop.f32.mrf.mxu0
        %2375 = vmatprep.mubr.f32.mxu0 0.0
        %2376 = vmatmul.mubr.f32.gmra.mxu0 %v2174
        %v2377 = vpop.f32.mrf.mxu0
        %v2378 = vadd.f32 0.0, %v2377
        %v2379 = vpop.f32.mrf.mxu0
        %2380 = vmatprep.mubr.f32.mxu0 0.0
        %2381 = vmatmul.mubr.f32.gmra.mxu0 %v2175
        %v2382 = vpop.f32.mrf.mxu0
        %v2383 = vadd.f32 0.0, %v2382
        %v2384 = vpop.f32.mrf.mxu0
        %2385 = vmatprep.mubr.f32.mxu0 0.0
        %2386 = vmatmul.mubr.f32.gmra.mxu0 %v2176
        %v2387 = vpop.f32.mrf.mxu0
        %v2388 = vadd.f32 0.0, %v2387
        %v2389 = vpop.f32.mrf.mxu0
        %2390 = vmatprep.mubr.f32.mxu0 0.0
        %2391 = vmatmul.mubr.f32.gmra.mxu0 %v2177
        %v2392 = vpop.f32.mrf.mxu0
        %v2393 = vadd.f32 0.0, %v2392
        %v2394 = vpop.f32.mrf.mxu0
        %2395 = vmatprep.mubr.f32.mxu0 0.0
        %2396 = vmatmul.mubr.f32.gmra.mxu0 %v2178
        %v2397 = vpop.f32.mrf.mxu0
        %v2398 = vadd.f32 0.0, %v2397
        %v2399 = vpop.f32.mrf.mxu0
        %2400 = vmatprep.mubr.f32.mxu0 0.0
        %2401 = vmatmul.mubr.f32.gmra.mxu0 %v2179
        %v2402 = vpop.f32.mrf.mxu0
        %v2403 = vadd.f32 0.0, %v2402
        %v2404 = vpop.f32.mrf.mxu0
        %2405 = vmatprep.mubr.f32.mxu0 0.0
        %2406 = vmatmul.mubr.f32.gmra.mxu0 %v2180
        %v2407 = vpop.f32.mrf.mxu0
        %v2408 = vadd.f32 0.0, %v2407
        %v2409 = vpop.f32.mrf.mxu0
        %2410 = vmatprep.mubr.f32.mxu0 0.0
        %2411 = vmatmul.mubr.f32.gmra.mxu0 %v2181
        %v2412 = vpop.f32.mrf.mxu0
        %v2413 = vadd.f32 0.0, %v2412
        %v2414 = vpop.f32.mrf.mxu0
        %2415 = vmatprep.mubr.f32.mxu0 0.0
        %2416 = vmatmul.mubr.f32.gmra.mxu0 %v2182
        %v2417 = vpop.f32.mrf.mxu0
        %v2418 = vadd.f32 0.0, %v2417
        %v2419 = vpop.f32.mrf.mxu0
        %2420 = vmatprep.mubr.f32.mxu0 0.0
        %2421 = vmatmul.mubr.f32.gmra.mxu0 %v2183
        %v2422 = vpop.f32.mrf.mxu0
        %v2423 = vadd.f32 0.0, %v2422
        %v2424 = vpop.f32.mrf.mxu0
        %2425 = vdwg.mxu0
        %v2426 = vadd.f32 %v2120, %v2268
        %v2427 = vadd.f32 %v2121, %v2273
        %v2428 = vadd.f32 %v2122, %v2278
        %v2429 = vadd.f32 %v2123, %v2283
        %v2430 = vadd.f32 %v2124, %v2288
        %v2431 = vadd.f32 %v2125, %v2293
        %v2432 = vadd.f32 %v2126, %v2298
        %v2433 = vadd.f32 %v2127, %v2303
        %v2434 = vadd.f32 %v2128, %v2308
        %v2435 = vadd.f32 %v2129, %v2313
        %v2436 = vadd.f32 %v2130, %v2318
        %v2437 = vadd.f32 %v2131, %v2323
        %v2438 = vadd.f32 %v2132, %v2328
        %v2439 = vadd.f32 %v2133, %v2333
        %v2440 = vadd.f32 %v2134, %v2338
        %v2441 = vadd.f32 %v2135, %v2343
        %v2442 = vadd.f32 %v2136, %v2348
        %v2443 = vadd.f32 %v2137, %v2353
        %v2444 = vadd.f32 %v2138, %v2358
        %v2445 = vadd.f32 %v2139, %v2363
        %v2446 = vadd.f32 %v2140, %v2368
        %v2447 = vadd.f32 %v2141, %v2373
        %v2448 = vadd.f32 %v2142, %v2378
        %v2449 = vadd.f32 %v2143, %v2383
        %v2450 = vadd.f32 %v2144, %v2388
        %v2451 = vadd.f32 %v2145, %v2393
        %v2452 = vadd.f32 %v2146, %v2398
        %v2453 = vadd.f32 %v2147, %v2403
        %v2454 = vadd.f32 %v2148, %v2408
        %v2455 = vadd.f32 %v2149, %v2413
        %v2456 = vadd.f32 %v2150, %v2418
        %v2457 = vadd.f32 %v2151, %v2423
        %s2458 = scalar_lea.vmem [#allocation2], 48
        %v2459 = vld [vmem:[%s2458] sm:$0xff]
        %v2460 = vld [vmem:[%s2458 + $0x8] sm:$0xff]
        %v2461 = vld [vmem:[%s2458 + $0x18] sm:$0xff]
        %v2462 = vld [vmem:[%s2458 + $0x20] sm:$0xff]
        %v2463 = vld [vmem:[%s2458 + $0x30] sm:$0xff]
        %v2464 = vld [vmem:[%s2458 + $0x38] sm:$0xff]
        %v2465 = vld [vmem:[%s2458 + $0x48] sm:$0xff]
        %v2466 = vld [vmem:[%s2458 + $0x50] sm:$0xff]
        %v2467 = vld [vmem:[%s2458 + $0x60] sm:$0xff]
        %v2468 = vld [vmem:[%s2458 + $0x68] sm:$0xff]
        %v2469 = vld [vmem:[%s2458 + $0x78] sm:$0xff]
        %v2470 = vld [vmem:[%s2458 + $0x80] sm:$0xff]
        %v2471 = vld [vmem:[%s2458 + $0x90] sm:$0xff]
        %v2472 = vld [vmem:[%s2458 + $0x98] sm:$0xff]
        %v2473 = vld [vmem:[%s2458 + $0xa8] sm:$0xff]
        %v2474 = vld [vmem:[%s2458 + $0xb0] sm:$0xff]
        %v2475 = vld [vmem:[%s2458 + $0xc0] sm:$0xff]
        %v2476 = vld [vmem:[%s2458 + $0xc8] sm:$0xff]
        %v2477 = vld [vmem:[%s2458 + $0xd8] sm:$0xff]
        %v2478 = vld [vmem:[%s2458 + $0xe0] sm:$0xff]
        %v2479 = vld [vmem:[%s2458 + $0xf0] sm:$0xff]
        %v2480 = vld [vmem:[%s2458 + $0xf8] sm:$0xff]
        %v2481 = vld [vmem:[%s2458 + $0x108] sm:$0xff]
        %v2482 = vld [vmem:[%s2458 + $0x110] sm:$0xff]
        %v2483 = vld [vmem:[%s2458 + $0x120] sm:$0xff]
        %v2484 = vld [vmem:[%s2458 + $0x128] sm:$0xff]
        %v2485 = vld [vmem:[%s2458 + $0x138] sm:$0xff]
        %v2486 = vld [vmem:[%s2458 + $0x140] sm:$0xff]
        %v2487 = vld [vmem:[%s2458 + $0x150] sm:$0xff]
        %v2488 = vld [vmem:[%s2458 + $0x158] sm:$0xff]
        %v2489 = vld [vmem:[%s2458 + $0x168] sm:$0xff]
        %v2490 = vld [vmem:[%s2458 + $0x170] sm:$0xff]
        %s2491 = scalar_lea.vmem %s3, 768
        %v2492 = vld [vmem:[%s2491] sm:$0xff]
        %v2493 = vld [vmem:[%s2491 + $0x8] sm:$0xff]
        %v2494 = vld [vmem:[%s2491 + $0x10] sm:$0xff]
        %v2495 = vld [vmem:[%s2491 + $0x18] sm:$0xff]
        %v2496 = vld [vmem:[%s2491 + $0x20] sm:$0xff]
        %v2497 = vld [vmem:[%s2491 + $0x28] sm:$0xff]
        %v2498 = vld [vmem:[%s2491 + $0x30] sm:$0xff]
        %v2499 = vld [vmem:[%s2491 + $0x38] sm:$0xff]
        %v2500 = vld [vmem:[%s2491 + $0x40] sm:$0xff]
        %v2501 = vld [vmem:[%s2491 + $0x48] sm:$0xff]
        %v2502 = vld [vmem:[%s2491 + $0x50] sm:$0xff]
        %v2503 = vld [vmem:[%s2491 + $0x58] sm:$0xff]
        %v2504 = vld [vmem:[%s2491 + $0x60] sm:$0xff]
        %v2505 = vld [vmem:[%s2491 + $0x68] sm:$0xff]
        %v2506 = vld [vmem:[%s2491 + $0x70] sm:$0xff]
        %v2507 = vld [vmem:[%s2491 + $0x78] sm:$0xff]
        %2508 = vmatprep.subr.mxu0 0.0
        %2509 = vmatpush1.msra.mxu0 %v2507
        %2510 = vmatprep.subr.mxu0 0.0
        %2511 = vmatpush1.msra.mxu0 %v2506
        %2512 = vmatprep.subr.mxu0 0.0
        %2513 = vmatpush1.msra.mxu0 %v2505
        %2514 = vmatprep.subr.mxu0 0.0
        %2515 = vmatpush1.msra.mxu0 %v2504
        %2516 = vmatprep.subr.mxu0 0.0
        %2517 = vmatpush1.msra.mxu0 %v2503
        %2518 = vmatprep.subr.mxu0 0.0
        %2519 = vmatpush1.msra.mxu0 %v2502
        %2520 = vmatprep.subr.mxu0 0.0
        %2521 = vmatpush1.msra.mxu0 %v2501
        %2522 = vmatprep.subr.mxu0 0.0
        %2523 = vmatpush1.msra.mxu0 %v2500
        %2524 = vmatprep.subr.mxu0 0.0
        %2525 = vmatpush1.msra.mxu0 %v2499
        %2526 = vmatprep.subr.mxu0 0.0
        %2527 = vmatpush1.msra.mxu0 %v2498
        %2528 = vmatprep.subr.mxu0 0.0
        %2529 = vmatpush1.msra.mxu0 %v2497
        %2530 = vmatprep.subr.mxu0 0.0
        %2531 = vmatpush1.msra.mxu0 %v2496
        %2532 = vmatprep.subr.mxu0 0.0
        %2533 = vmatpush1.msra.mxu0 %v2495
        %2534 = vmatprep.subr.mxu0 0.0
        %2535 = vmatpush1.msra.mxu0 %v2494
        %2536 = vmatprep.subr.mxu0 0.0
        %2537 = vmatpush1.msra.mxu0 %v2493
        %2538 = vmatprep.subr.mxu0 0.0
        %2539 = vmatpush1.msra.mxu0 %v2492
        %2540 = vmatprep.subr.mxu0 0.0
        %2541 = vmatpush2.msra.mxu0 0.0
        %2542 = vmatprep.subr.mxu0 0.0
        %2543 = vmatpush2.msra.mxu0 0.0
        %2544 = vmatprep.subr.mxu0 0.0
        %2545 = vmatpush2.msra.mxu0 0.0
        %2546 = vmatprep.subr.mxu0 0.0
        %2547 = vmatpush2.msra.mxu0 0.0
        %2548 = vmatprep.subr.mxu0 0.0
        %2549 = vmatpush2.msra.mxu0 0.0
        %2550 = vmatprep.subr.mxu0 0.0
        %2551 = vmatpush2.msra.mxu0 0.0
        %2552 = vmatprep.subr.mxu0 0.0
        %2553 = vmatpush2.msra.mxu0 0.0
        %2554 = vmatprep.subr.mxu0 0.0
        %2555 = vmatpush2.msra.mxu0 0.0
        %2556 = vmatprep.subr.mxu0 0.0
        %2557 = vmatpush2.msra.mxu0 0.0
        %2558 = vmatprep.subr.mxu0 0.0
        %2559 = vmatpush2.msra.mxu0 0.0
        %2560 = vmatprep.subr.mxu0 0.0
        %2561 = vmatpush2.msra.mxu0 0.0
        %2562 = vmatprep.subr.mxu0 0.0
        %2563 = vmatpush2.msra.mxu0 0.0
        %2564 = vmatprep.subr.mxu0 0.0
        %2565 = vmatpush2.msra.mxu0 0.0
        %2566 = vmatprep.subr.mxu0 0.0
        %2567 = vmatpush2.msra.mxu0 0.0
        %2568 = vmatprep.subr.mxu0 0.0
        %2569 = vmatpush2.msra.mxu0 0.0
        %2570 = vmatprep.subr.mxu0 0.0
        %2571 = vmatpush2.msra.mxu0 0.0
        %2572 = vmatprep.mubr.f32.mxu0 0.0
        %2573 = vmatmul.mubr.f32.gmra.mxu0 %v2459
        %v2574 = vpop.f32.mrf.mxu0
        %v2575 = vadd.f32 0.0, %v2574
        %v2576 = vpop.f32.mrf.mxu0
        %2577 = vmatprep.mubr.f32.mxu0 0.0
        %2578 = vmatmul.mubr.f32.gmra.mxu0 %v2460
        %v2579 = vpop.f32.mrf.mxu0
        %v2580 = vadd.f32 0.0, %v2579
        %v2581 = vpop.f32.mrf.mxu0
        %2582 = vmatprep.mubr.f32.mxu0 0.0
        %2583 = vmatmul.mubr.f32.gmra.mxu0 %v2461
        %v2584 = vpop.f32.mrf.mxu0
        %v2585 = vadd.f32 0.0, %v2584
        %v2586 = vpop.f32.mrf.mxu0
        %2587 = vmatprep.mubr.f32.mxu0 0.0
        %2588 = vmatmul.mubr.f32.gmra.mxu0 %v2462
        %v2589 = vpop.f32.mrf.mxu0
        %v2590 = vadd.f32 0.0, %v2589
        %v2591 = vpop.f32.mrf.mxu0
        %2592 = vmatprep.mubr.f32.mxu0 0.0
        %2593 = vmatmul.mubr.f32.gmra.mxu0 %v2463
        %v2594 = vpop.f32.mrf.mxu0
        %v2595 = vadd.f32 0.0, %v2594
        %v2596 = vpop.f32.mrf.mxu0
        %2597 = vmatprep.mubr.f32.mxu0 0.0
        %2598 = vmatmul.mubr.f32.gmra.mxu0 %v2464
        %v2599 = vpop.f32.mrf.mxu0
        %v2600 = vadd.f32 0.0, %v2599
        %v2601 = vpop.f32.mrf.mxu0
        %2602 = vmatprep.mubr.f32.mxu0 0.0
        %2603 = vmatmul.mubr.f32.gmra.mxu0 %v2465
        %v2604 = vpop.f32.mrf.mxu0
        %v2605 = vadd.f32 0.0, %v2604
        %v2606 = vpop.f32.mrf.mxu0
        %2607 = vmatprep.mubr.f32.mxu0 0.0
        %2608 = vmatmul.mubr.f32.gmra.mxu0 %v2466
        %v2609 = vpop.f32.mrf.mxu0
        %v2610 = vadd.f32 0.0, %v2609
        %v2611 = vpop.f32.mrf.mxu0
        %2612 = vmatprep.mubr.f32.mxu0 0.0
        %2613 = vmatmul.mubr.f32.gmra.mxu0 %v2467
        %v2614 = vpop.f32.mrf.mxu0
        %v2615 = vadd.f32 0.0, %v2614
        %v2616 = vpop.f32.mrf.mxu0
        %2617 = vmatprep.mubr.f32.mxu0 0.0
        %2618 = vmatmul.mubr.f32.gmra.mxu0 %v2468
        %v2619 = vpop.f32.mrf.mxu0
        %v2620 = vadd.f32 0.0, %v2619
        %v2621 = vpop.f32.mrf.mxu0
        %2622 = vmatprep.mubr.f32.mxu0 0.0
        %2623 = vmatmul.mubr.f32.gmra.mxu0 %v2469
        %v2624 = vpop.f32.mrf.mxu0
        %v2625 = vadd.f32 0.0, %v2624
        %v2626 = vpop.f32.mrf.mxu0
        %2627 = vmatprep.mubr.f32.mxu0 0.0
        %2628 = vmatmul.mubr.f32.gmra.mxu0 %v2470
        %v2629 = vpop.f32.mrf.mxu0
        %v2630 = vadd.f32 0.0, %v2629
        %v2631 = vpop.f32.mrf.mxu0
        %2632 = vmatprep.mubr.f32.mxu0 0.0
        %2633 = vmatmul.mubr.f32.gmra.mxu0 %v2471
        %v2634 = vpop.f32.mrf.mxu0
        %v2635 = vadd.f32 0.0, %v2634
        %v2636 = vpop.f32.mrf.mxu0
        %2637 = vmatprep.mubr.f32.mxu0 0.0
        %2638 = vmatmul.mubr.f32.gmra.mxu0 %v2472
        %v2639 = vpop.f32.mrf.mxu0
        %v2640 = vadd.f32 0.0, %v2639
        %v2641 = vpop.f32.mrf.mxu0
        %2642 = vmatprep.mubr.f32.mxu0 0.0
        %2643 = vmatmul.mubr.f32.gmra.mxu0 %v2473
        %v2644 = vpop.f32.mrf.mxu0
        %v2645 = vadd.f32 0.0, %v2644
        %v2646 = vpop.f32.mrf.mxu0
        %2647 = vmatprep.mubr.f32.mxu0 0.0
        %2648 = vmatmul.mubr.f32.gmra.mxu0 %v2474
        %v2649 = vpop.f32.mrf.mxu0
        %v2650 = vadd.f32 0.0, %v2649
        %v2651 = vpop.f32.mrf.mxu0
        %2652 = vmatprep.mubr.f32.mxu0 0.0
        %2653 = vmatmul.mubr.f32.gmra.mxu0 %v2475
        %v2654 = vpop.f32.mrf.mxu0
        %v2655 = vadd.f32 0.0, %v2654
        %v2656 = vpop.f32.mrf.mxu0
        %2657 = vmatprep.mubr.f32.mxu0 0.0
        %2658 = vmatmul.mubr.f32.gmra.mxu0 %v2476
        %v2659 = vpop.f32.mrf.mxu0
        %v2660 = vadd.f32 0.0, %v2659
        %v2661 = vpop.f32.mrf.mxu0
        %2662 = vmatprep.mubr.f32.mxu0 0.0
        %2663 = vmatmul.mubr.f32.gmra.mxu0 %v2477
        %v2664 = vpop.f32.mrf.mxu0
        %v2665 = vadd.f32 0.0, %v2664
        %v2666 = vpop.f32.mrf.mxu0
        %2667 = vmatprep.mubr.f32.mxu0 0.0
        %2668 = vmatmul.mubr.f32.gmra.mxu0 %v2478
        %v2669 = vpop.f32.mrf.mxu0
        %v2670 = vadd.f32 0.0, %v2669
        %v2671 = vpop.f32.mrf.mxu0
        %2672 = vmatprep.mubr.f32.mxu0 0.0
        %2673 = vmatmul.mubr.f32.gmra.mxu0 %v2479
        %v2674 = vpop.f32.mrf.mxu0
        %v2675 = vadd.f32 0.0, %v2674
        %v2676 = vpop.f32.mrf.mxu0
        %2677 = vmatprep.mubr.f32.mxu0 0.0
        %2678 = vmatmul.mubr.f32.gmra.mxu0 %v2480
        %v2679 = vpop.f32.mrf.mxu0
        %v2680 = vadd.f32 0.0, %v2679
        %v2681 = vpop.f32.mrf.mxu0
        %2682 = vmatprep.mubr.f32.mxu0 0.0
        %2683 = vmatmul.mubr.f32.gmra.mxu0 %v2481
        %v2684 = vpop.f32.mrf.mxu0
        %v2685 = vadd.f32 0.0, %v2684
        %v2686 = vpop.f32.mrf.mxu0
        %2687 = vmatprep.mubr.f32.mxu0 0.0
        %2688 = vmatmul.mubr.f32.gmra.mxu0 %v2482
        %v2689 = vpop.f32.mrf.mxu0
        %v2690 = vadd.f32 0.0, %v2689
        %v2691 = vpop.f32.mrf.mxu0
        %2692 = vmatprep.mubr.f32.mxu0 0.0
        %2693 = vmatmul.mubr.f32.gmra.mxu0 %v2483
        %v2694 = vpop.f32.mrf.mxu0
        %v2695 = vadd.f32 0.0, %v2694
        %v2696 = vpop.f32.mrf.mxu0
        %2697 = vmatprep.mubr.f32.mxu0 0.0
        %2698 = vmatmul.mubr.f32.gmra.mxu0 %v2484
        %v2699 = vpop.f32.mrf.mxu0
        %v2700 = vadd.f32 0.0, %v2699
        %v2701 = vpop.f32.mrf.mxu0
        %2702 = vmatprep.mubr.f32.mxu0 0.0
        %2703 = vmatmul.mubr.f32.gmra.mxu0 %v2485
        %v2704 = vpop.f32.mrf.mxu0
        %v2705 = vadd.f32 0.0, %v2704
        %v2706 = vpop.f32.mrf.mxu0
        %2707 = vmatprep.mubr.f32.mxu0 0.0
        %2708 = vmatmul.mubr.f32.gmra.mxu0 %v2486
        %v2709 = vpop.f32.mrf.mxu0
        %v2710 = vadd.f32 0.0, %v2709
        %v2711 = vpop.f32.mrf.mxu0
        %2712 = vmatprep.mubr.f32.mxu0 0.0
        %2713 = vmatmul.mubr.f32.gmra.mxu0 %v2487
        %v2714 = vpop.f32.mrf.mxu0
        %v2715 = vadd.f32 0.0, %v2714
        %v2716 = vpop.f32.mrf.mxu0
        %2717 = vmatprep.mubr.f32.mxu0 0.0
        %2718 = vmatmul.mubr.f32.gmra.mxu0 %v2488
        %v2719 = vpop.f32.mrf.mxu0
        %v2720 = vadd.f32 0.0, %v2719
        %v2721 = vpop.f32.mrf.mxu0
        %2722 = vmatprep.mubr.f32.mxu0 0.0
        %2723 = vmatmul.mubr.f32.gmra.mxu0 %v2489
        %v2724 = vpop.f32.mrf.mxu0
        %v2725 = vadd.f32 0.0, %v2724
        %v2726 = vpop.f32.mrf.mxu0
        %2727 = vmatprep.mubr.f32.mxu0 0.0
        %2728 = vmatmul.mubr.f32.gmra.mxu0 %v2490
        %v2729 = vpop.f32.mrf.mxu0
        %v2730 = vadd.f32 0.0, %v2729
        %v2731 = vpop.f32.mrf.mxu0
        %2732 = vdwg.mxu0
        %v2733 = vadd.f32 %v2426, %v2575
        %v2734 = vadd.f32 %v2427, %v2580
        %v2735 = vadd.f32 %v2428, %v2585
        %v2736 = vadd.f32 %v2429, %v2590
        %v2737 = vadd.f32 %v2430, %v2595
        %v2738 = vadd.f32 %v2431, %v2600
        %v2739 = vadd.f32 %v2432, %v2605
        %v2740 = vadd.f32 %v2433, %v2610
        %v2741 = vadd.f32 %v2434, %v2615
        %v2742 = vadd.f32 %v2435, %v2620
        %v2743 = vadd.f32 %v2436, %v2625
        %v2744 = vadd.f32 %v2437, %v2630
        %v2745 = vadd.f32 %v2438, %v2635
        %v2746 = vadd.f32 %v2439, %v2640
        %v2747 = vadd.f32 %v2440, %v2645
        %v2748 = vadd.f32 %v2441, %v2650
        %v2749 = vadd.f32 %v2442, %v2655
        %v2750 = vadd.f32 %v2443, %v2660
        %v2751 = vadd.f32 %v2444, %v2665
        %v2752 = vadd.f32 %v2445, %v2670
        %v2753 = vadd.f32 %v2446, %v2675
        %v2754 = vadd.f32 %v2447, %v2680
        %v2755 = vadd.f32 %v2448, %v2685
        %v2756 = vadd.f32 %v2449, %v2690
        %v2757 = vadd.f32 %v2450, %v2695
        %v2758 = vadd.f32 %v2451, %v2700
        %v2759 = vadd.f32 %v2452, %v2705
        %v2760 = vadd.f32 %v2453, %v2710
        %v2761 = vadd.f32 %v2454, %v2715
        %v2762 = vadd.f32 %v2455, %v2720
        %v2763 = vadd.f32 %v2456, %v2725
        %v2764 = vadd.f32 %v2457, %v2730
        %v2765 = vld [vmem:[%s2458 + $0x1] sm:$0xff]
        %v2766 = vld [vmem:[%s2458 + $0x9] sm:$0xff]
        %v2767 = vld [vmem:[%s2458 + $0x19] sm:$0xff]
        %v2768 = vld [vmem:[%s2458 + $0x21] sm:$0xff]
        %v2769 = vld [vmem:[%s2458 + $0x31] sm:$0xff]
        %v2770 = vld [vmem:[%s2458 + $0x39] sm:$0xff]
        %v2771 = vld [vmem:[%s2458 + $0x49] sm:$0xff]
        %v2772 = vld [vmem:[%s2458 + $0x51] sm:$0xff]
        %v2773 = vld [vmem:[%s2458 + $0x61] sm:$0xff]
        %v2774 = vld [vmem:[%s2458 + $0x69] sm:$0xff]
        %v2775 = vld [vmem:[%s2458 + $0x79] sm:$0xff]
        %v2776 = vld [vmem:[%s2458 + $0x81] sm:$0xff]
        %v2777 = vld [vmem:[%s2458 + $0x91] sm:$0xff]
        %v2778 = vld [vmem:[%s2458 + $0x99] sm:$0xff]
        %v2779 = vld [vmem:[%s2458 + $0xa9] sm:$0xff]
        %v2780 = vld [vmem:[%s2458 + $0xb1] sm:$0xff]
        %v2781 = vld [vmem:[%s2458 + $0xc1] sm:$0xff]
        %v2782 = vld [vmem:[%s2458 + $0xc9] sm:$0xff]
        %v2783 = vld [vmem:[%s2458 + $0xd9] sm:$0xff]
        %v2784 = vld [vmem:[%s2458 + $0xe1] sm:$0xff]
        %v2785 = vld [vmem:[%s2458 + $0xf1] sm:$0xff]
        %v2786 = vld [vmem:[%s2458 + $0xf9] sm:$0xff]
        %v2787 = vld [vmem:[%s2458 + $0x109] sm:$0xff]
        %v2788 = vld [vmem:[%s2458 + $0x111] sm:$0xff]
        %v2789 = vld [vmem:[%s2458 + $0x121] sm:$0xff]
        %v2790 = vld [vmem:[%s2458 + $0x129] sm:$0xff]
        %v2791 = vld [vmem:[%s2458 + $0x139] sm:$0xff]
        %v2792 = vld [vmem:[%s2458 + $0x141] sm:$0xff]
        %v2793 = vld [vmem:[%s2458 + $0x151] sm:$0xff]
        %v2794 = vld [vmem:[%s2458 + $0x159] sm:$0xff]
        %v2795 = vld [vmem:[%s2458 + $0x169] sm:$0xff]
        %v2796 = vld [vmem:[%s2458 + $0x171] sm:$0xff]
        %s2797 = scalar_lea.vmem %s3, 896
        %v2798 = vld [vmem:[%s2797] sm:$0xff]
        %v2799 = vld [vmem:[%s2797 + $0x8] sm:$0xff]
        %v2800 = vld [vmem:[%s2797 + $0x10] sm:$0xff]
        %v2801 = vld [vmem:[%s2797 + $0x18] sm:$0xff]
        %v2802 = vld [vmem:[%s2797 + $0x20] sm:$0xff]
        %v2803 = vld [vmem:[%s2797 + $0x28] sm:$0xff]
        %v2804 = vld [vmem:[%s2797 + $0x30] sm:$0xff]
        %v2805 = vld [vmem:[%s2797 + $0x38] sm:$0xff]
        %v2806 = vld [vmem:[%s2797 + $0x40] sm:$0xff]
        %v2807 = vld [vmem:[%s2797 + $0x48] sm:$0xff]
        %v2808 = vld [vmem:[%s2797 + $0x50] sm:$0xff]
        %v2809 = vld [vmem:[%s2797 + $0x58] sm:$0xff]
        %v2810 = vld [vmem:[%s2797 + $0x60] sm:$0xff]
        %v2811 = vld [vmem:[%s2797 + $0x68] sm:$0xff]
        %v2812 = vld [vmem:[%s2797 + $0x70] sm:$0xff]
        %v2813 = vld [vmem:[%s2797 + $0x78] sm:$0xff]
        %2814 = vmatprep.subr.mxu0 0.0
        %2815 = vmatpush1.msra.mxu0 %v2813
        %2816 = vmatprep.subr.mxu0 0.0
        %2817 = vmatpush1.msra.mxu0 %v2812
        %2818 = vmatprep.subr.mxu0 0.0
        %2819 = vmatpush1.msra.mxu0 %v2811
        %2820 = vmatprep.subr.mxu0 0.0
        %2821 = vmatpush1.msra.mxu0 %v2810
        %2822 = vmatprep.subr.mxu0 0.0
        %2823 = vmatpush1.msra.mxu0 %v2809
        %2824 = vmatprep.subr.mxu0 0.0
        %2825 = vmatpush1.msra.mxu0 %v2808
        %2826 = vmatprep.subr.mxu0 0.0
        %2827 = vmatpush1.msra.mxu0 %v2807
        %2828 = vmatprep.subr.mxu0 0.0
        %2829 = vmatpush1.msra.mxu0 %v2806
        %2830 = vmatprep.subr.mxu0 0.0
        %2831 = vmatpush1.msra.mxu0 %v2805
        %2832 = vmatprep.subr.mxu0 0.0
        %2833 = vmatpush1.msra.mxu0 %v2804
        %2834 = vmatprep.subr.mxu0 0.0
        %2835 = vmatpush1.msra.mxu0 %v2803
        %2836 = vmatprep.subr.mxu0 0.0
        %2837 = vmatpush1.msra.mxu0 %v2802
        %2838 = vmatprep.subr.mxu0 0.0
        %2839 = vmatpush1.msra.mxu0 %v2801
        %2840 = vmatprep.subr.mxu0 0.0
        %2841 = vmatpush1.msra.mxu0 %v2800
        %2842 = vmatprep.subr.mxu0 0.0
        %2843 = vmatpush1.msra.mxu0 %v2799
        %2844 = vmatprep.subr.mxu0 0.0
        %2845 = vmatpush1.msra.mxu0 %v2798
        %2846 = vmatprep.subr.mxu0 0.0
        %2847 = vmatpush2.msra.mxu0 0.0
        %2848 = vmatprep.subr.mxu0 0.0
        %2849 = vmatpush2.msra.mxu0 0.0
        %2850 = vmatprep.subr.mxu0 0.0
        %2851 = vmatpush2.msra.mxu0 0.0
        %2852 = vmatprep.subr.mxu0 0.0
        %2853 = vmatpush2.msra.mxu0 0.0
        %2854 = vmatprep.subr.mxu0 0.0
        %2855 = vmatpush2.msra.mxu0 0.0
        %2856 = vmatprep.subr.mxu0 0.0
        %2857 = vmatpush2.msra.mxu0 0.0
        %2858 = vmatprep.subr.mxu0 0.0
        %2859 = vmatpush2.msra.mxu0 0.0
        %2860 = vmatprep.subr.mxu0 0.0
        %2861 = vmatpush2.msra.mxu0 0.0
        %2862 = vmatprep.subr.mxu0 0.0
        %2863 = vmatpush2.msra.mxu0 0.0
        %2864 = vmatprep.subr.mxu0 0.0
        %2865 = vmatpush2.msra.mxu0 0.0
        %2866 = vmatprep.subr.mxu0 0.0
        %2867 = vmatpush2.msra.mxu0 0.0
        %2868 = vmatprep.subr.mxu0 0.0
        %2869 = vmatpush2.msra.mxu0 0.0
        %2870 = vmatprep.subr.mxu0 0.0
        %2871 = vmatpush2.msra.mxu0 0.0
        %2872 = vmatprep.subr.mxu0 0.0
        %2873 = vmatpush2.msra.mxu0 0.0
        %2874 = vmatprep.subr.mxu0 0.0
        %2875 = vmatpush2.msra.mxu0 0.0
        %2876 = vmatprep.subr.mxu0 0.0
        %2877 = vmatpush2.msra.mxu0 0.0
        %2878 = vmatprep.mubr.f32.mxu0 0.0
        %2879 = vmatmul.mubr.f32.gmra.mxu0 %v2765
        %v2880 = vpop.f32.mrf.mxu0
        %v2881 = vadd.f32 0.0, %v2880
        %v2882 = vpop.f32.mrf.mxu0
        %2883 = vmatprep.mubr.f32.mxu0 0.0
        %2884 = vmatmul.mubr.f32.gmra.mxu0 %v2766
        %v2885 = vpop.f32.mrf.mxu0
        %v2886 = vadd.f32 0.0, %v2885
        %v2887 = vpop.f32.mrf.mxu0
        %2888 = vmatprep.mubr.f32.mxu0 0.0
        %2889 = vmatmul.mubr.f32.gmra.mxu0 %v2767
        %v2890 = vpop.f32.mrf.mxu0
        %v2891 = vadd.f32 0.0, %v2890
        %v2892 = vpop.f32.mrf.mxu0
        %2893 = vmatprep.mubr.f32.mxu0 0.0
        %2894 = vmatmul.mubr.f32.gmra.mxu0 %v2768
        %v2895 = vpop.f32.mrf.mxu0
        %v2896 = vadd.f32 0.0, %v2895
        %v2897 = vpop.f32.mrf.mxu0
        %2898 = vmatprep.mubr.f32.mxu0 0.0
        %2899 = vmatmul.mubr.f32.gmra.mxu0 %v2769
        %v2900 = vpop.f32.mrf.mxu0
        %v2901 = vadd.f32 0.0, %v2900
        %v2902 = vpop.f32.mrf.mxu0
        %2903 = vmatprep.mubr.f32.mxu0 0.0
        %2904 = vmatmul.mubr.f32.gmra.mxu0 %v2770
        %v2905 = vpop.f32.mrf.mxu0
        %v2906 = vadd.f32 0.0, %v2905
        %v2907 = vpop.f32.mrf.mxu0
        %2908 = vmatprep.mubr.f32.mxu0 0.0
        %2909 = vmatmul.mubr.f32.gmra.mxu0 %v2771
        %v2910 = vpop.f32.mrf.mxu0
        %v2911 = vadd.f32 0.0, %v2910
        %v2912 = vpop.f32.mrf.mxu0
        %2913 = vmatprep.mubr.f32.mxu0 0.0
        %2914 = vmatmul.mubr.f32.gmra.mxu0 %v2772
        %v2915 = vpop.f32.mrf.mxu0
        %v2916 = vadd.f32 0.0, %v2915
        %v2917 = vpop.f32.mrf.mxu0
        %2918 = vmatprep.mubr.f32.mxu0 0.0
        %2919 = vmatmul.mubr.f32.gmra.mxu0 %v2773
        %v2920 = vpop.f32.mrf.mxu0
        %v2921 = vadd.f32 0.0, %v2920
        %v2922 = vpop.f32.mrf.mxu0
        %2923 = vmatprep.mubr.f32.mxu0 0.0
        %2924 = vmatmul.mubr.f32.gmra.mxu0 %v2774
        %v2925 = vpop.f32.mrf.mxu0
        %v2926 = vadd.f32 0.0, %v2925
        %v2927 = vpop.f32.mrf.mxu0
        %2928 = vmatprep.mubr.f32.mxu0 0.0
        %2929 = vmatmul.mubr.f32.gmra.mxu0 %v2775
        %v2930 = vpop.f32.mrf.mxu0
        %v2931 = vadd.f32 0.0, %v2930
        %v2932 = vpop.f32.mrf.mxu0
        %2933 = vmatprep.mubr.f32.mxu0 0.0
        %2934 = vmatmul.mubr.f32.gmra.mxu0 %v2776
        %v2935 = vpop.f32.mrf.mxu0
        %v2936 = vadd.f32 0.0, %v2935
        %v2937 = vpop.f32.mrf.mxu0
        %2938 = vmatprep.mubr.f32.mxu0 0.0
        %2939 = vmatmul.mubr.f32.gmra.mxu0 %v2777
        %v2940 = vpop.f32.mrf.mxu0
        %v2941 = vadd.f32 0.0, %v2940
        %v2942 = vpop.f32.mrf.mxu0
        %2943 = vmatprep.mubr.f32.mxu0 0.0
        %2944 = vmatmul.mubr.f32.gmra.mxu0 %v2778
        %v2945 = vpop.f32.mrf.mxu0
        %v2946 = vadd.f32 0.0, %v2945
        %v2947 = vpop.f32.mrf.mxu0
        %2948 = vmatprep.mubr.f32.mxu0 0.0
        %2949 = vmatmul.mubr.f32.gmra.mxu0 %v2779
        %v2950 = vpop.f32.mrf.mxu0
        %v2951 = vadd.f32 0.0, %v2950
        %v2952 = vpop.f32.mrf.mxu0
        %2953 = vmatprep.mubr.f32.mxu0 0.0
        %2954 = vmatmul.mubr.f32.gmra.mxu0 %v2780
        %v2955 = vpop.f32.mrf.mxu0
        %v2956 = vadd.f32 0.0, %v2955
        %v2957 = vpop.f32.mrf.mxu0
        %2958 = vmatprep.mubr.f32.mxu0 0.0
        %2959 = vmatmul.mubr.f32.gmra.mxu0 %v2781
        %v2960 = vpop.f32.mrf.mxu0
        %v2961 = vadd.f32 0.0, %v2960
        %v2962 = vpop.f32.mrf.mxu0
        %2963 = vmatprep.mubr.f32.mxu0 0.0
        %2964 = vmatmul.mubr.f32.gmra.mxu0 %v2782
        %v2965 = vpop.f32.mrf.mxu0
        %v2966 = vadd.f32 0.0, %v2965
        %v2967 = vpop.f32.mrf.mxu0
        %2968 = vmatprep.mubr.f32.mxu0 0.0
        %2969 = vmatmul.mubr.f32.gmra.mxu0 %v2783
        %v2970 = vpop.f32.mrf.mxu0
        %v2971 = vadd.f32 0.0, %v2970
        %v2972 = vpop.f32.mrf.mxu0
        %2973 = vmatprep.mubr.f32.mxu0 0.0
        %2974 = vmatmul.mubr.f32.gmra.mxu0 %v2784
        %v2975 = vpop.f32.mrf.mxu0
        %v2976 = vadd.f32 0.0, %v2975
        %v2977 = vpop.f32.mrf.mxu0
        %2978 = vmatprep.mubr.f32.mxu0 0.0
        %2979 = vmatmul.mubr.f32.gmra.mxu0 %v2785
        %v2980 = vpop.f32.mrf.mxu0
        %v2981 = vadd.f32 0.0, %v2980
        %v2982 = vpop.f32.mrf.mxu0
        %2983 = vmatprep.mubr.f32.mxu0 0.0
        %2984 = vmatmul.mubr.f32.gmra.mxu0 %v2786
        %v2985 = vpop.f32.mrf.mxu0
        %v2986 = vadd.f32 0.0, %v2985
        %v2987 = vpop.f32.mrf.mxu0
        %2988 = vmatprep.mubr.f32.mxu0 0.0
        %2989 = vmatmul.mubr.f32.gmra.mxu0 %v2787
        %v2990 = vpop.f32.mrf.mxu0
        %v2991 = vadd.f32 0.0, %v2990
        %v2992 = vpop.f32.mrf.mxu0
        %2993 = vmatprep.mubr.f32.mxu0 0.0
        %2994 = vmatmul.mubr.f32.gmra.mxu0 %v2788
        %v2995 = vpop.f32.mrf.mxu0
        %v2996 = vadd.f32 0.0, %v2995
        %v2997 = vpop.f32.mrf.mxu0
        %2998 = vmatprep.mubr.f32.mxu0 0.0
        %2999 = vmatmul.mubr.f32.gmra.mxu0 %v2789
        %v3000 = vpop.f32.mrf.mxu0
        %v3001 = vadd.f32 0.0, %v3000
        %v3002 = vpop.f32.mrf.mxu0
        %3003 = vmatprep.mubr.f32.mxu0 0.0
        %3004 = vmatmul.mubr.f32.gmra.mxu0 %v2790
        %v3005 = vpop.f32.mrf.mxu0
        %v3006 = vadd.f32 0.0, %v3005
        %v3007 = vpop.f32.mrf.mxu0
        %3008 = vmatprep.mubr.f32.mxu0 0.0
        %3009 = vmatmul.mubr.f32.gmra.mxu0 %v2791
        %v3010 = vpop.f32.mrf.mxu0
        %v3011 = vadd.f32 0.0, %v3010
        %v3012 = vpop.f32.mrf.mxu0
        %3013 = vmatprep.mubr.f32.mxu0 0.0
        %3014 = vmatmul.mubr.f32.gmra.mxu0 %v2792
        %v3015 = vpop.f32.mrf.mxu0
        %v3016 = vadd.f32 0.0, %v3015
        %v3017 = vpop.f32.mrf.mxu0
        %3018 = vmatprep.mubr.f32.mxu0 0.0
        %3019 = vmatmul.mubr.f32.gmra.mxu0 %v2793
        %v3020 = vpop.f32.mrf.mxu0
        %v3021 = vadd.f32 0.0, %v3020
        %v3022 = vpop.f32.mrf.mxu0
        %3023 = vmatprep.mubr.f32.mxu0 0.0
        %3024 = vmatmul.mubr.f32.gmra.mxu0 %v2794
        %v3025 = vpop.f32.mrf.mxu0
        %v3026 = vadd.f32 0.0, %v3025
        %v3027 = vpop.f32.mrf.mxu0
        %3028 = vmatprep.mubr.f32.mxu0 0.0
        %3029 = vmatmul.mubr.f32.gmra.mxu0 %v2795
        %v3030 = vpop.f32.mrf.mxu0
        %v3031 = vadd.f32 0.0, %v3030
        %v3032 = vpop.f32.mrf.mxu0
        %3033 = vmatprep.mubr.f32.mxu0 0.0
        %3034 = vmatmul.mubr.f32.gmra.mxu0 %v2796
        %v3035 = vpop.f32.mrf.mxu0
        %v3036 = vadd.f32 0.0, %v3035
        %v3037 = vpop.f32.mrf.mxu0
        %3038 = vdwg.mxu0
        %v3039 = vadd.f32 %v2733, %v2881
        %v3040 = vadd.f32 %v2734, %v2886
        %v3041 = vadd.f32 %v2735, %v2891
        %v3042 = vadd.f32 %v2736, %v2896
        %v3043 = vadd.f32 %v2737, %v2901
        %v3044 = vadd.f32 %v2738, %v2906
        %v3045 = vadd.f32 %v2739, %v2911
        %v3046 = vadd.f32 %v2740, %v2916
        %v3047 = vadd.f32 %v2741, %v2921
        %v3048 = vadd.f32 %v2742, %v2926
        %v3049 = vadd.f32 %v2743, %v2931
        %v3050 = vadd.f32 %v2744, %v2936
        %v3051 = vadd.f32 %v2745, %v2941
        %v3052 = vadd.f32 %v2746, %v2946
        %v3053 = vadd.f32 %v2747, %v2951
        %v3054 = vadd.f32 %v2748, %v2956
        %v3055 = vadd.f32 %v2749, %v2961
        %v3056 = vadd.f32 %v2750, %v2966
        %v3057 = vadd.f32 %v2751, %v2971
        %v3058 = vadd.f32 %v2752, %v2976
        %v3059 = vadd.f32 %v2753, %v2981
        %v3060 = vadd.f32 %v2754, %v2986
        %v3061 = vadd.f32 %v2755, %v2991
        %v3062 = vadd.f32 %v2756, %v2996
        %v3063 = vadd.f32 %v2757, %v3001
        %v3064 = vadd.f32 %v2758, %v3006
        %v3065 = vadd.f32 %v2759, %v3011
        %v3066 = vadd.f32 %v2760, %v3016
        %v3067 = vadd.f32 %v2761, %v3021
        %v3068 = vadd.f32 %v2762, %v3026
        %v3069 = vadd.f32 %v2763, %v3031
        %v3070 = vadd.f32 %v2764, %v3036
        %v3071 = vld [vmem:[%s2458 + $0x2] sm:$0xff]
        %v3072 = vld [vmem:[%s2458 + $0xa] sm:$0xff]
        %v3073 = vld [vmem:[%s2458 + $0x1a] sm:$0xff]
        %v3074 = vld [vmem:[%s2458 + $0x22] sm:$0xff]
        %v3075 = vld [vmem:[%s2458 + $0x32] sm:$0xff]
        %v3076 = vld [vmem:[%s2458 + $0x3a] sm:$0xff]
        %v3077 = vld [vmem:[%s2458 + $0x4a] sm:$0xff]
        %v3078 = vld [vmem:[%s2458 + $0x52] sm:$0xff]
        %v3079 = vld [vmem:[%s2458 + $0x62] sm:$0xff]
        %v3080 = vld [vmem:[%s2458 + $0x6a] sm:$0xff]
        %v3081 = vld [vmem:[%s2458 + $0x7a] sm:$0xff]
        %v3082 = vld [vmem:[%s2458 + $0x82] sm:$0xff]
        %v3083 = vld [vmem:[%s2458 + $0x92] sm:$0xff]
        %v3084 = vld [vmem:[%s2458 + $0x9a] sm:$0xff]
        %v3085 = vld [vmem:[%s2458 + $0xaa] sm:$0xff]
        %v3086 = vld [vmem:[%s2458 + $0xb2] sm:$0xff]
        %v3087 = vld [vmem:[%s2458 + $0xc2] sm:$0xff]
        %v3088 = vld [vmem:[%s2458 + $0xca] sm:$0xff]
        %v3089 = vld [vmem:[%s2458 + $0xda] sm:$0xff]
        %v3090 = vld [vmem:[%s2458 + $0xe2] sm:$0xff]
        %v3091 = vld [vmem:[%s2458 + $0xf2] sm:$0xff]
        %v3092 = vld [vmem:[%s2458 + $0xfa] sm:$0xff]
        %v3093 = vld [vmem:[%s2458 + $0x10a] sm:$0xff]
        %v3094 = vld [vmem:[%s2458 + $0x112] sm:$0xff]
        %v3095 = vld [vmem:[%s2458 + $0x122] sm:$0xff]
        %v3096 = vld [vmem:[%s2458 + $0x12a] sm:$0xff]
        %v3097 = vld [vmem:[%s2458 + $0x13a] sm:$0xff]
        %v3098 = vld [vmem:[%s2458 + $0x142] sm:$0xff]
        %v3099 = vld [vmem:[%s2458 + $0x152] sm:$0xff]
        %v3100 = vld [vmem:[%s2458 + $0x15a] sm:$0xff]
        %v3101 = vld [vmem:[%s2458 + $0x16a] sm:$0xff]
        %v3102 = vld [vmem:[%s2458 + $0x172] sm:$0xff]
        %s3103 = scalar_lea.vmem %s3, 1024
        %v3104 = vld [vmem:[%s3103] sm:$0xff]
        %v3105 = vld [vmem:[%s3103 + $0x8] sm:$0xff]
        %v3106 = vld [vmem:[%s3103 + $0x10] sm:$0xff]
        %v3107 = vld [vmem:[%s3103 + $0x18] sm:$0xff]
        %v3108 = vld [vmem:[%s3103 + $0x20] sm:$0xff]
        %v3109 = vld [vmem:[%s3103 + $0x28] sm:$0xff]
        %v3110 = vld [vmem:[%s3103 + $0x30] sm:$0xff]
        %v3111 = vld [vmem:[%s3103 + $0x38] sm:$0xff]
        %v3112 = vld [vmem:[%s3103 + $0x40] sm:$0xff]
        %v3113 = vld [vmem:[%s3103 + $0x48] sm:$0xff]
        %v3114 = vld [vmem:[%s3103 + $0x50] sm:$0xff]
        %v3115 = vld [vmem:[%s3103 + $0x58] sm:$0xff]
        %v3116 = vld [vmem:[%s3103 + $0x60] sm:$0xff]
        %v3117 = vld [vmem:[%s3103 + $0x68] sm:$0xff]
        %v3118 = vld [vmem:[%s3103 + $0x70] sm:$0xff]
        %v3119 = vld [vmem:[%s3103 + $0x78] sm:$0xff]
        %3120 = vmatprep.subr.mxu0 0.0
        %3121 = vmatpush1.msra.mxu0 %v3119
        %3122 = vmatprep.subr.mxu0 0.0
        %3123 = vmatpush1.msra.mxu0 %v3118
        %3124 = vmatprep.subr.mxu0 0.0
        %3125 = vmatpush1.msra.mxu0 %v3117
        %3126 = vmatprep.subr.mxu0 0.0
        %3127 = vmatpush1.msra.mxu0 %v3116
        %3128 = vmatprep.subr.mxu0 0.0
        %3129 = vmatpush1.msra.mxu0 %v3115
        %3130 = vmatprep.subr.mxu0 0.0
        %3131 = vmatpush1.msra.mxu0 %v3114
        %3132 = vmatprep.subr.mxu0 0.0
        %3133 = vmatpush1.msra.mxu0 %v3113
        %3134 = vmatprep.subr.mxu0 0.0
        %3135 = vmatpush1.msra.mxu0 %v3112
        %3136 = vmatprep.subr.mxu0 0.0
        %3137 = vmatpush1.msra.mxu0 %v3111
        %3138 = vmatprep.subr.mxu0 0.0
        %3139 = vmatpush1.msra.mxu0 %v3110
        %3140 = vmatprep.subr.mxu0 0.0
        %3141 = vmatpush1.msra.mxu0 %v3109
        %3142 = vmatprep.subr.mxu0 0.0
        %3143 = vmatpush1.msra.mxu0 %v3108
        %3144 = vmatprep.subr.mxu0 0.0
        %3145 = vmatpush1.msra.mxu0 %v3107
        %3146 = vmatprep.subr.mxu0 0.0
        %3147 = vmatpush1.msra.mxu0 %v3106
        %3148 = vmatprep.subr.mxu0 0.0
        %3149 = vmatpush1.msra.mxu0 %v3105
        %3150 = vmatprep.subr.mxu0 0.0
        %3151 = vmatpush1.msra.mxu0 %v3104
        %3152 = vmatprep.subr.mxu0 0.0
        %3153 = vmatpush2.msra.mxu0 0.0
        %3154 = vmatprep.subr.mxu0 0.0
        %3155 = vmatpush2.msra.mxu0 0.0
        %3156 = vmatprep.subr.mxu0 0.0
        %3157 = vmatpush2.msra.mxu0 0.0
        %3158 = vmatprep.subr.mxu0 0.0
        %3159 = vmatpush2.msra.mxu0 0.0
        %3160 = vmatprep.subr.mxu0 0.0
        %3161 = vmatpush2.msra.mxu0 0.0
        %3162 = vmatprep.subr.mxu0 0.0
        %3163 = vmatpush2.msra.mxu0 0.0
        %3164 = vmatprep.subr.mxu0 0.0
        %3165 = vmatpush2.msra.mxu0 0.0
        %3166 = vmatprep.subr.mxu0 0.0
        %3167 = vmatpush2.msra.mxu0 0.0
        %3168 = vmatprep.subr.mxu0 0.0
        %3169 = vmatpush2.msra.mxu0 0.0
        %3170 = vmatprep.subr.mxu0 0.0
        %3171 = vmatpush2.msra.mxu0 0.0
        %3172 = vmatprep.subr.mxu0 0.0
        %3173 = vmatpush2.msra.mxu0 0.0
        %3174 = vmatprep.subr.mxu0 0.0
        %3175 = vmatpush2.msra.mxu0 0.0
        %3176 = vmatprep.subr.mxu0 0.0
        %3177 = vmatpush2.msra.mxu0 0.0
        %3178 = vmatprep.subr.mxu0 0.0
        %3179 = vmatpush2.msra.mxu0 0.0
        %3180 = vmatprep.subr.mxu0 0.0
        %3181 = vmatpush2.msra.mxu0 0.0
        %3182 = vmatprep.subr.mxu0 0.0
        %3183 = vmatpush2.msra.mxu0 0.0
        %3184 = vmatprep.mubr.f32.mxu0 0.0
        %3185 = vmatmul.mubr.f32.gmra.mxu0 %v3071
        %v3186 = vpop.f32.mrf.mxu0
        %v3187 = vadd.f32 0.0, %v3186
        %v3188 = vpop.f32.mrf.mxu0
        %3189 = vmatprep.mubr.f32.mxu0 0.0
        %3190 = vmatmul.mubr.f32.gmra.mxu0 %v3072
        %v3191 = vpop.f32.mrf.mxu0
        %v3192 = vadd.f32 0.0, %v3191
        %v3193 = vpop.f32.mrf.mxu0
        %3194 = vmatprep.mubr.f32.mxu0 0.0
        %3195 = vmatmul.mubr.f32.gmra.mxu0 %v3073
        %v3196 = vpop.f32.mrf.mxu0
        %v3197 = vadd.f32 0.0, %v3196
        %v3198 = vpop.f32.mrf.mxu0
        %3199 = vmatprep.mubr.f32.mxu0 0.0
        %3200 = vmatmul.mubr.f32.gmra.mxu0 %v3074
        %v3201 = vpop.f32.mrf.mxu0
        %v3202 = vadd.f32 0.0, %v3201
        %v3203 = vpop.f32.mrf.mxu0
        %3204 = vmatprep.mubr.f32.mxu0 0.0
        %3205 = vmatmul.mubr.f32.gmra.mxu0 %v3075
        %v3206 = vpop.f32.mrf.mxu0
        %v3207 = vadd.f32 0.0, %v3206
        %v3208 = vpop.f32.mrf.mxu0
        %3209 = vmatprep.mubr.f32.mxu0 0.0
        %3210 = vmatmul.mubr.f32.gmra.mxu0 %v3076
        %v3211 = vpop.f32.mrf.mxu0
        %v3212 = vadd.f32 0.0, %v3211
        %v3213 = vpop.f32.mrf.mxu0
        %3214 = vmatprep.mubr.f32.mxu0 0.0
        %3215 = vmatmul.mubr.f32.gmra.mxu0 %v3077
        %v3216 = vpop.f32.mrf.mxu0
        %v3217 = vadd.f32 0.0, %v3216
        %v3218 = vpop.f32.mrf.mxu0
        %3219 = vmatprep.mubr.f32.mxu0 0.0
        %3220 = vmatmul.mubr.f32.gmra.mxu0 %v3078
        %v3221 = vpop.f32.mrf.mxu0
        %v3222 = vadd.f32 0.0, %v3221
        %v3223 = vpop.f32.mrf.mxu0
        %3224 = vmatprep.mubr.f32.mxu0 0.0
        %3225 = vmatmul.mubr.f32.gmra.mxu0 %v3079
        %v3226 = vpop.f32.mrf.mxu0
        %v3227 = vadd.f32 0.0, %v3226
        %v3228 = vpop.f32.mrf.mxu0
        %3229 = vmatprep.mubr.f32.mxu0 0.0
        %3230 = vmatmul.mubr.f32.gmra.mxu0 %v3080
        %v3231 = vpop.f32.mrf.mxu0
        %v3232 = vadd.f32 0.0, %v3231
        %v3233 = vpop.f32.mrf.mxu0
        %3234 = vmatprep.mubr.f32.mxu0 0.0
        %3235 = vmatmul.mubr.f32.gmra.mxu0 %v3081
        %v3236 = vpop.f32.mrf.mxu0
        %v3237 = vadd.f32 0.0, %v3236
        %v3238 = vpop.f32.mrf.mxu0
        %3239 = vmatprep.mubr.f32.mxu0 0.0
        %3240 = vmatmul.mubr.f32.gmra.mxu0 %v3082
        %v3241 = vpop.f32.mrf.mxu0
        %v3242 = vadd.f32 0.0, %v3241
        %v3243 = vpop.f32.mrf.mxu0
        %3244 = vmatprep.mubr.f32.mxu0 0.0
        %3245 = vmatmul.mubr.f32.gmra.mxu0 %v3083
        %v3246 = vpop.f32.mrf.mxu0
        %v3247 = vadd.f32 0.0, %v3246
        %v3248 = vpop.f32.mrf.mxu0
        %3249 = vmatprep.mubr.f32.mxu0 0.0
        %3250 = vmatmul.mubr.f32.gmra.mxu0 %v3084
        %v3251 = vpop.f32.mrf.mxu0
        %v3252 = vadd.f32 0.0, %v3251
        %v3253 = vpop.f32.mrf.mxu0
        %3254 = vmatprep.mubr.f32.mxu0 0.0
        %3255 = vmatmul.mubr.f32.gmra.mxu0 %v3085
        %v3256 = vpop.f32.mrf.mxu0
        %v3257 = vadd.f32 0.0, %v3256
        %v3258 = vpop.f32.mrf.mxu0
        %3259 = vmatprep.mubr.f32.mxu0 0.0
        %3260 = vmatmul.mubr.f32.gmra.mxu0 %v3086
        %v3261 = vpop.f32.mrf.mxu0
        %v3262 = vadd.f32 0.0, %v3261
        %v3263 = vpop.f32.mrf.mxu0
        %3264 = vmatprep.mubr.f32.mxu0 0.0
        %3265 = vmatmul.mubr.f32.gmra.mxu0 %v3087
        %v3266 = vpop.f32.mrf.mxu0
        %v3267 = vadd.f32 0.0, %v3266
        %v3268 = vpop.f32.mrf.mxu0
        %3269 = vmatprep.mubr.f32.mxu0 0.0
        %3270 = vmatmul.mubr.f32.gmra.mxu0 %v3088
        %v3271 = vpop.f32.mrf.mxu0
        %v3272 = vadd.f32 0.0, %v3271
        %v3273 = vpop.f32.mrf.mxu0
        %3274 = vmatprep.mubr.f32.mxu0 0.0
        %3275 = vmatmul.mubr.f32.gmra.mxu0 %v3089
        %v3276 = vpop.f32.mrf.mxu0
        %v3277 = vadd.f32 0.0, %v3276
        %v3278 = vpop.f32.mrf.mxu0
        %3279 = vmatprep.mubr.f32.mxu0 0.0
        %3280 = vmatmul.mubr.f32.gmra.mxu0 %v3090
        %v3281 = vpop.f32.mrf.mxu0
        %v3282 = vadd.f32 0.0, %v3281
        %v3283 = vpop.f32.mrf.mxu0
        %3284 = vmatprep.mubr.f32.mxu0 0.0
        %3285 = vmatmul.mubr.f32.gmra.mxu0 %v3091
        %v3286 = vpop.f32.mrf.mxu0
        %v3287 = vadd.f32 0.0, %v3286
        %v3288 = vpop.f32.mrf.mxu0
        %3289 = vmatprep.mubr.f32.mxu0 0.0
        %3290 = vmatmul.mubr.f32.gmra.mxu0 %v3092
        %v3291 = vpop.f32.mrf.mxu0
        %v3292 = vadd.f32 0.0, %v3291
        %v3293 = vpop.f32.mrf.mxu0
        %3294 = vmatprep.mubr.f32.mxu0 0.0
        %3295 = vmatmul.mubr.f32.gmra.mxu0 %v3093
        %v3296 = vpop.f32.mrf.mxu0
        %v3297 = vadd.f32 0.0, %v3296
        %v3298 = vpop.f32.mrf.mxu0
        %3299 = vmatprep.mubr.f32.mxu0 0.0
        %3300 = vmatmul.mubr.f32.gmra.mxu0 %v3094
        %v3301 = vpop.f32.mrf.mxu0
        %v3302 = vadd.f32 0.0, %v3301
        %v3303 = vpop.f32.mrf.mxu0
        %3304 = vmatprep.mubr.f32.mxu0 0.0
        %3305 = vmatmul.mubr.f32.gmra.mxu0 %v3095
        %v3306 = vpop.f32.mrf.mxu0
        %v3307 = vadd.f32 0.0, %v3306
        %v3308 = vpop.f32.mrf.mxu0
        %3309 = vmatprep.mubr.f32.mxu0 0.0
        %3310 = vmatmul.mubr.f32.gmra.mxu0 %v3096
        %v3311 = vpop.f32.mrf.mxu0
        %v3312 = vadd.f32 0.0, %v3311
        %v3313 = vpop.f32.mrf.mxu0
        %3314 = vmatprep.mubr.f32.mxu0 0.0
        %3315 = vmatmul.mubr.f32.gmra.mxu0 %v3097
        %v3316 = vpop.f32.mrf.mxu0
        %v3317 = vadd.f32 0.0, %v3316
        %v3318 = vpop.f32.mrf.mxu0
        %3319 = vmatprep.mubr.f32.mxu0 0.0
        %3320 = vmatmul.mubr.f32.gmra.mxu0 %v3098
        %v3321 = vpop.f32.mrf.mxu0
        %v3322 = vadd.f32 0.0, %v3321
        %v3323 = vpop.f32.mrf.mxu0
        %3324 = vmatprep.mubr.f32.mxu0 0.0
        %3325 = vmatmul.mubr.f32.gmra.mxu0 %v3099
        %v3326 = vpop.f32.mrf.mxu0
        %v3327 = vadd.f32 0.0, %v3326
        %v3328 = vpop.f32.mrf.mxu0
        %3329 = vmatprep.mubr.f32.mxu0 0.0
        %3330 = vmatmul.mubr.f32.gmra.mxu0 %v3100
        %v3331 = vpop.f32.mrf.mxu0
        %v3332 = vadd.f32 0.0, %v3331
        %v3333 = vpop.f32.mrf.mxu0
        %3334 = vmatprep.mubr.f32.mxu0 0.0
        %3335 = vmatmul.mubr.f32.gmra.mxu0 %v3101
        %v3336 = vpop.f32.mrf.mxu0
        %v3337 = vadd.f32 0.0, %v3336
        %v3338 = vpop.f32.mrf.mxu0
        %3339 = vmatprep.mubr.f32.mxu0 0.0
        %3340 = vmatmul.mubr.f32.gmra.mxu0 %v3102
        %v3341 = vpop.f32.mrf.mxu0
        %v3342 = vadd.f32 0.0, %v3341
        %v3343 = vpop.f32.mrf.mxu0
        %3344 = vdwg.mxu0
        %v3345 = vadd.f32 %v3039, %v3187
        %v3346 = vadd.f32 %v3040, %v3192
        %v3347 = vadd.f32 %v3041, %v3197
        %v3348 = vadd.f32 %v3042, %v3202
        %v3349 = vadd.f32 %v3043, %v3207
        %v3350 = vadd.f32 %v3044, %v3212
        %v3351 = vadd.f32 %v3045, %v3217
        %v3352 = vadd.f32 %v3046, %v3222
        %v3353 = vadd.f32 %v3047, %v3227
        %v3354 = vadd.f32 %v3048, %v3232
        %v3355 = vadd.f32 %v3049, %v3237
        %v3356 = vadd.f32 %v3050, %v3242
        %v3357 = vadd.f32 %v3051, %v3247
        %v3358 = vadd.f32 %v3052, %v3252
        %v3359 = vadd.f32 %v3053, %v3257
        %v3360 = vadd.f32 %v3054, %v3262
        %v3361 = vadd.f32 %v3055, %v3267
        %v3362 = vadd.f32 %v3056, %v3272
        %v3363 = vadd.f32 %v3057, %v3277
        %v3364 = vadd.f32 %v3058, %v3282
        %v3365 = vadd.f32 %v3059, %v3287
        %v3366 = vadd.f32 %v3060, %v3292
        %v3367 = vadd.f32 %v3061, %v3297
        %v3368 = vadd.f32 %v3062, %v3302
        %v3369 = vadd.f32 %v3063, %v3307
        %v3370 = vadd.f32 %v3064, %v3312
        %v3371 = vadd.f32 %v3065, %v3317
        %v3372 = vadd.f32 %v3066, %v3322
        %v3373 = vadd.f32 %v3067, %v3327
        %v3374 = vadd.f32 %v3068, %v3332
        %v3375 = vadd.f32 %v3069, %v3337
        %v3376 = vadd.f32 %v3070, %v3342
        %v3377 = vld [vmem:[%s4] sm:$0x1]
        %v3379 = vlaneseq
        %v3380 = vshrl.u32 %v3379, 7
        %v3381 = vsub.s32 0, %v3380
        %v3382 = vrot.slane %v3377, %v3381
        %v3384 = vadd.f32 %v3345, %v3382
        %v3385 = vadd.f32 %v3346, %v3382
        %v3386 = vadd.f32 %v3347, %v3382
        %v3387 = vadd.f32 %v3348, %v3382
        %v3388 = vadd.f32 %v3349, %v3382
        %v3389 = vadd.f32 %v3350, %v3382
        %v3390 = vadd.f32 %v3351, %v3382
        %v3391 = vadd.f32 %v3352, %v3382
        %v3392 = vadd.f32 %v3353, %v3382
        %v3393 = vadd.f32 %v3354, %v3382
        %v3394 = vadd.f32 %v3355, %v3382
        %v3395 = vadd.f32 %v3356, %v3382
        %v3396 = vadd.f32 %v3357, %v3382
        %v3397 = vadd.f32 %v3358, %v3382
        %v3398 = vadd.f32 %v3359, %v3382
        %v3399 = vadd.f32 %v3360, %v3382
        %v3400 = vadd.f32 %v3361, %v3382
        %v3401 = vadd.f32 %v3362, %v3382
        %v3402 = vadd.f32 %v3363, %v3382
        %v3403 = vadd.f32 %v3364, %v3382
        %v3404 = vadd.f32 %v3365, %v3382
        %v3405 = vadd.f32 %v3366, %v3382
        %v3406 = vadd.f32 %v3367, %v3382
        %v3407 = vadd.f32 %v3368, %v3382
        %v3408 = vadd.f32 %v3369, %v3382
        %v3409 = vadd.f32 %v3370, %v3382
        %v3410 = vadd.f32 %v3371, %v3382
        %v3411 = vadd.f32 %v3372, %v3382
        %v3412 = vadd.f32 %v3373, %v3382
        %v3413 = vadd.f32 %v3374, %v3382
        %v3414 = vadd.f32 %v3375, %v3382
        %v3415 = vadd.f32 %v3376, %v3382
        %vm3416 = vcmp.ge.f32.partialorder %v3384, 0.0
        %vm3417 = vcmp.ge.f32.partialorder %v3385, 0.0
        %vm3418 = vcmp.ge.f32.partialorder %v3386, 0.0
        %vm3419 = vcmp.ge.f32.partialorder %v3387, 0.0
        %vm3420 = vcmp.ge.f32.partialorder %v3388, 0.0
        %vm3421 = vcmp.ge.f32.partialorder %v3389, 0.0
        %vm3422 = vcmp.ge.f32.partialorder %v3390, 0.0
        %vm3423 = vcmp.ge.f32.partialorder %v3391, 0.0
        %vm3424 = vcmp.ge.f32.partialorder %v3392, 0.0
        %vm3425 = vcmp.ge.f32.partialorder %v3393, 0.0
        %vm3426 = vcmp.ge.f32.partialorder %v3394, 0.0
        %vm3427 = vcmp.ge.f32.partialorder %v3395, 0.0
        %vm3428 = vcmp.ge.f32.partialorder %v3396, 0.0
        %vm3429 = vcmp.ge.f32.partialorder %v3397, 0.0
        %vm3430 = vcmp.ge.f32.partialorder %v3398, 0.0
        %vm3431 = vcmp.ge.f32.partialorder %v3399, 0.0
        %vm3432 = vcmp.ge.f32.partialorder %v3400, 0.0
        %vm3433 = vcmp.ge.f32.partialorder %v3401, 0.0
        %vm3434 = vcmp.ge.f32.partialorder %v3402, 0.0
        %vm3435 = vcmp.ge.f32.partialorder %v3403, 0.0
        %vm3436 = vcmp.ge.f32.partialorder %v3404, 0.0
        %vm3437 = vcmp.ge.f32.partialorder %v3405, 0.0
        %vm3438 = vcmp.ge.f32.partialorder %v3406, 0.0
        %vm3439 = vcmp.ge.f32.partialorder %v3407, 0.0
        %vm3440 = vcmp.ge.f32.partialorder %v3408, 0.0
        %vm3441 = vcmp.ge.f32.partialorder %v3409, 0.0
        %vm3442 = vcmp.ge.f32.partialorder %v3410, 0.0
        %vm3443 = vcmp.ge.f32.partialorder %v3411, 0.0
        %vm3444 = vcmp.ge.f32.partialorder %v3412, 0.0
        %vm3445 = vcmp.ge.f32.partialorder %v3413, 0.0
        %vm3446 = vcmp.ge.f32.partialorder %v3414, 0.0
        %vm3447 = vcmp.ge.f32.partialorder %v3415, 0.0
        %v3448 = vmul.f32 %v3384, 0.1
        %v3449 = vmul.f32 %v3385, 0.1
        %v3450 = vmul.f32 %v3386, 0.1
        %v3451 = vmul.f32 %v3387, 0.1
        %v3452 = vmul.f32 %v3388, 0.1
        %v3453 = vmul.f32 %v3389, 0.1
        %v3454 = vmul.f32 %v3390, 0.1
        %v3455 = vmul.f32 %v3391, 0.1
        %v3456 = vmul.f32 %v3392, 0.1
        %v3457 = vmul.f32 %v3393, 0.1
        %v3458 = vmul.f32 %v3394, 0.1
        %v3459 = vmul.f32 %v3395, 0.1
        %v3460 = vmul.f32 %v3396, 0.1
        %v3461 = vmul.f32 %v3397, 0.1
        %v3462 = vmul.f32 %v3398, 0.1
        %v3463 = vmul.f32 %v3399, 0.1
        %v3464 = vmul.f32 %v3400, 0.1
        %v3465 = vmul.f32 %v3401, 0.1
        %v3466 = vmul.f32 %v3402, 0.1
        %v3467 = vmul.f32 %v3403, 0.1
        %v3468 = vmul.f32 %v3404, 0.1
        %v3469 = vmul.f32 %v3405, 0.1
        %v3470 = vmul.f32 %v3406, 0.1
        %v3471 = vmul.f32 %v3407, 0.1
        %v3472 = vmul.f32 %v3408, 0.1
        %v3473 = vmul.f32 %v3409, 0.1
        %v3474 = vmul.f32 %v3410, 0.1
        %v3475 = vmul.f32 %v3411, 0.1
        %v3476 = vmul.f32 %v3412, 0.1
        %v3477 = vmul.f32 %v3413, 0.1
        %v3478 = vmul.f32 %v3414, 0.1
        %v3479 = vmul.f32 %v3415, 0.1
        %v3480 = vsel %vm3416, %v3384, %v3448
        %v3481 = vsel %vm3417, %v3385, %v3449
        %v3482 = vsel %vm3418, %v3386, %v3450
        %v3483 = vsel %vm3419, %v3387, %v3451
        %v3484 = vsel %vm3420, %v3388, %v3452
        %v3485 = vsel %vm3421, %v3389, %v3453
        %v3486 = vsel %vm3422, %v3390, %v3454
        %v3487 = vsel %vm3423, %v3391, %v3455
        %v3488 = vsel %vm3424, %v3392, %v3456
        %v3489 = vsel %vm3425, %v3393, %v3457
        %v3490 = vsel %vm3426, %v3394, %v3458
        %v3491 = vsel %vm3427, %v3395, %v3459
        %v3492 = vsel %vm3428, %v3396, %v3460
        %v3493 = vsel %vm3429, %v3397, %v3461
        %v3494 = vsel %vm3430, %v3398, %v3462
        %v3495 = vsel %vm3431, %v3399, %v3463
        %v3496 = vsel %vm3432, %v3400, %v3464
        %v3497 = vsel %vm3433, %v3401, %v3465
        %v3498 = vsel %vm3434, %v3402, %v3466
        %v3499 = vsel %vm3435, %v3403, %v3467
        %v3500 = vsel %vm3436, %v3404, %v3468
        %v3501 = vsel %vm3437, %v3405, %v3469
        %v3502 = vsel %vm3438, %v3406, %v3470
        %v3503 = vsel %vm3439, %v3407, %v3471
        %v3504 = vsel %vm3440, %v3408, %v3472
        %v3505 = vsel %vm3441, %v3409, %v3473
        %v3506 = vsel %vm3442, %v3410, %v3474
        %v3507 = vsel %vm3443, %v3411, %v3475
        %v3508 = vsel %vm3444, %v3412, %v3476
        %v3509 = vsel %vm3445, %v3413, %v3477
        %v3510 = vsel %vm3446, %v3414, %v3478
        %v3511 = vsel %vm3447, %v3415, %v3479
        %v3512 = vadd.f32 %v3480, %v278
        %v3513 = vadd.f32 %v3481, %v279
        %v3514 = vadd.f32 %v3482, %v280
        %v3515 = vadd.f32 %v3483, %v281
        %v3516 = vadd.f32 %v3484, %v282
        %v3517 = vadd.f32 %v3485, %v283
        %v3518 = vadd.f32 %v3486, %v284
        %v3519 = vadd.f32 %v3487, %v285
        %v3520 = vadd.f32 %v3488, %v286
        %v3521 = vadd.f32 %v3489, %v287
        %v3522 = vadd.f32 %v3490, %v288
        %v3523 = vadd.f32 %v3491, %v289
        %v3524 = vadd.f32 %v3492, %v290
        %v3525 = vadd.f32 %v3493, %v291
        %v3526 = vadd.f32 %v3494, %v292
        %v3527 = vadd.f32 %v3495, %v293
        %v3528 = vadd.f32 %v3496, %v294
        %v3529 = vadd.f32 %v3497, %v295
        %v3530 = vadd.f32 %v3498, %v296
        %v3531 = vadd.f32 %v3499, %v297
        %v3532 = vadd.f32 %v3500, %v298
        %v3533 = vadd.f32 %v3501, %v299
        %v3534 = vadd.f32 %v3502, %v300
        %v3535 = vadd.f32 %v3503, %v301
        %v3536 = vadd.f32 %v3504, %v302
        %v3537 = vadd.f32 %v3505, %v303
        %v3538 = vadd.f32 %v3506, %v304
        %v3539 = vadd.f32 %v3507, %v305
        %v3540 = vadd.f32 %v3508, %v306
        %v3541 = vadd.f32 %v3509, %v307
        %v3542 = vadd.f32 %v3510, %v308
        %v3543 = vadd.f32 %v3511, %v309
        %3544 = vst [vmem:[%s217] sm:$0xff] %v3512
        %3545 = vst [vmem:[%s217 + $0x8] sm:$0xff] %v3513
        %3546 = vst [vmem:[%s217 + $0x10] sm:$0xff] %v3514
        %3547 = vst [vmem:[%s217 + $0x18] sm:$0xff] %v3515
        %3548 = vst [vmem:[%s217 + $0x20] sm:$0xff] %v3516
        %3549 = vst [vmem:[%s217 + $0x28] sm:$0xff] %v3517
        %3550 = vst [vmem:[%s217 + $0x30] sm:$0xff] %v3518
        %3551 = vst [vmem:[%s217 + $0x38] sm:$0xff] %v3519
        %3552 = vst [vmem:[%s217 + $0x40] sm:$0xff] %v3520
        %3553 = vst [vmem:[%s217 + $0x48] sm:$0xff] %v3521
        %3554 = vst [vmem:[%s217 + $0x50] sm:$0xff] %v3522
        %3555 = vst [vmem:[%s217 + $0x58] sm:$0xff] %v3523
        %3556 = vst [vmem:[%s217 + $0x60] sm:$0xff] %v3524
        %3557 = vst [vmem:[%s217 + $0x68] sm:$0xff] %v3525
        %3558 = vst [vmem:[%s217 + $0x70] sm:$0xff] %v3526
        %3559 = vst [vmem:[%s217 + $0x78] sm:$0xff] %v3527
        %3560 = vst [vmem:[%s217 + $0x80] sm:$0xff] %v3528
        %3561 = vst [vmem:[%s217 + $0x88] sm:$0xff] %v3529
        %3562 = vst [vmem:[%s217 + $0x90] sm:$0xff] %v3530
        %3563 = vst [vmem:[%s217 + $0x98] sm:$0xff] %v3531
        %3564 = vst [vmem:[%s217 + $0xa0] sm:$0xff] %v3532
        %3565 = vst [vmem:[%s217 + $0xa8] sm:$0xff] %v3533
        %3566 = vst [vmem:[%s217 + $0xb0] sm:$0xff] %v3534
        %3567 = vst [vmem:[%s217 + $0xb8] sm:$0xff] %v3535
        %3568 = vst [vmem:[%s217 + $0xc0] sm:$0xff] %v3536
        %3569 = vst [vmem:[%s217 + $0xc8] sm:$0xff] %v3537
        %3570 = vst [vmem:[%s217 + $0xd0] sm:$0xff] %v3538
        %3571 = vst [vmem:[%s217 + $0xd8] sm:$0xff] %v3539
        %3572 = vst [vmem:[%s217 + $0xe0] sm:$0xff] %v3540
        %3573 = vst [vmem:[%s217 + $0xe8] sm:$0xff] %v3541
        %3574 = vst [vmem:[%s217 + $0xf0] sm:$0xff] %v3542
        %3575 = vst [vmem:[%s217 + $0xf8] sm:$0xff] %v3543
        %s3576 = sand.u32 %s137, 1
        %s3577 = scalar_lea.sflag [#allocation4], %s3576
        %s3578 = sand.u32 %s137, 1
        %s3579 = smul.addr %s3578, 256
        %s3580 = scalar_lea.vmem [#allocation3], %s3579
        // Predicated region
        $region41: #{tpu_custom_call.1} parent=39 // pred_check
          %p3581 = pneg %p147
        $region42: #{tpu_custom_call.1} parent=39 // pred_check_branch
          %3583 = sbr.rel (%p3581) target = $region44
        $region43: #{tpu_custom_call.1} parent=39 // pred_region
          %s3585 = ssub.s32 4096, 4096
          %3586 = vsyncadd %s3577, %s3585
          %s3587 = smul.addr %s19, 32
          %s3588 = smul.addr %s3587, 128
          %s3589 = scalar_lea.hbm %s5, %s3588
          %s3590 = sshll.u32 %s3580, 4
          %s3591 = int_to_ptr.vmem [resolvable:$true] %s3590
          %3596 = dma.vmem_to_hbm [thread:$0]  %s3591, 4096, %s3589, %s3577, 128, 128, 8
        $region44: #{tpu_custom_call.1} parent=39 // pred_fallthru
          _
      $region40: #{tpu_custom_call.1} parent=5 // pred_fallthru
        _
      %p3597 = scmp.le.s32.totalorder 2, %s14
      // Predicated region
      $region45: #{tpu_custom_call.1} parent=5 // pred_check
        %p3598 = pneg %p3597
      $region46: #{tpu_custom_call.1} parent=5 // pred_check_branch
        %3600 = sbr.rel (%p3598) target = $region48
      $region47: #{tpu_custom_call.1} parent=5 // pred_region
        %s3601 = ssub.s32 %s14, 2
        // Predicated region
        $region49: #{tpu_custom_call.1} parent=47 // pred_check
          %p3602 = pneg %p153
        $region50: #{tpu_custom_call.1} parent=47 // pred_check_branch
          %3604 = sbr.rel (%p3602) target = $region52
        $region51: #{tpu_custom_call.1} parent=47 // pred_region
          %s3605 = sand.u32 %s138, 1
          %s3606 = scalar_lea.sflag [#allocation4], %s3605
          %s3607 = sand.u32 %s138, 1
          %s3608 = smul.addr %s3607, 256
          %s3609 = scalar_lea.vmem [#allocation3], %s3608
          %3610 = dma.done %s3606, 4096
        $region52: #{tpu_custom_call.1} parent=47 // pred_fallthru
          _
      $region48: #{tpu_custom_call.1} parent=5 // pred_fallthru
        _
    $region6: #{tpu_custom_call.1} parent=1 // loop_footer
      %s18 = sadd.s32 1, %s14
    $region7: #{tpu_custom_call.1} parent=1 // loop_footer_branch
      %13 = sbr.rel target = $region3
    $region8: #{tpu_custom_call.1} parent=1 // loop_exit
      _
    %3611 = vsyncpa [#allocation4], 1
    %s3612 = scalar_lea.sflag [#allocation4], 1
    %3613 = vsyncpa %s3612, 1

</llo_original>
